<compile_context>
chip_gen: v5e
topology: v5e:2x2
jax: 0.10.0
libtpu: 0.0.40
codegen_flags: <defaults>
</compile_context>

<pallas_src>
import math
from collections import namedtuple

import numpy as np
import jax
import jax.numpy as jnp
from jax.experimental import pallas as pl
from jax.experimental.pallas import tpu as pltpu  # noqa: F401  (TPU backend)

EARClassificationOutput = namedtuple(
    "EARClassificationOutput",
    ["model_output", "negative_entropy", "reg_loss", "loss"],
)

# ---- synthetic model config (small shapes) ----
B, S, D, H, L = 2, 16, 32, 4, 2
HD = D // H
NUM_LABELS = 2
EAR_REG_STRENGTH = 0.01


# ---------------------------------------------------------------------------
# Single fused kernel: L encoder layers + classifier head + EAR neg-entropy.
# Static unroll over layers / batch / heads (L=2, B=2, H=4).
# ---------------------------------------------------------------------------
def _fused_ear_kernel(x_ref, mask_ref, maskT_ref, wq_ref, wk_ref, wv_ref,
                      wo_ref, wc_ref, bc_ref, logits_ref, probs_ref, ne_ref):
    scale = jnp.float32(1.0 / math.sqrt(HD))
    neg_big = jnp.float32(-1e30)

    # per-sample masks, hoisted out of the layer loop
    masks = [mask_ref[b] for b in range(B)]                    # (1, S), 1=valid
    masksT = [maskT_ref[b] for b in range(B)]                  # (S, 1)
    biases = [(1.0 - m) * jnp.float32(-1e9) for m in masks]    # additive key mask
    valid2d = [masksT[b] * masks[b] for b in range(B)]         # (S, S) row&col mask
    inv_nvalid = [1.0 / jnp.sum(m) for m in masks]             # 1 / num valid rows

    # batch-stacked hidden state: (B*S, D) so each projection is ONE matmul
    h_all = jnp.concatenate([x_ref[b] for b in range(B)], axis=0)

    total_ne = jnp.zeros((1, 1), jnp.float32)

    for l in range(L):                                         # static unroll: layers
        wq = wq_ref[l]                                         # (D, D) head-fused
        wk = wk_ref[l]
        wv = wv_ref[l]
        wo = wo_ref[l]

        q = jnp.dot(h_all, wq, preferred_element_type=jnp.float32)   # (B*S, D)
        k = jnp.dot(h_all, wk, preferred_element_type=jnp.float32)
        v = jnp.dot(h_all, wv, preferred_element_type=jnp.float32)

        layer_ps = []                                          # B*H prob tiles (S,S)
        ctx_rows = []
        for b in range(B):                                     # static unroll: batch
            r0 = b * S
            ctxs = []
            pool = None
            for h in range(H):                                 # static unroll: heads
                c0 = h * HD
                qh = q[r0:r0 + S, c0:c0 + HD]                  # (S, HD)
                kh = k[r0:r0 + S, c0:c0 + HD]
                vh = v[r0:r0 + S, c0:c0 + HD]

                scores = (jnp.dot(qh, kh.T,
                                  preferred_element_type=jnp.float32) * scale
                          + biases[b])                         # (S, S)
                m = jnp.max(scores, axis=-1, keepdims=True)
                e = jnp.exp(scores - m)
                # softmax denom reciprocal on the EUP slot (free-ish)
                p = e * pl.reciprocal(
                    jnp.sum(e, axis=-1, keepdims=True), approx=True)

                layer_ps.append(p)
                pool = p if pool is None else pool + p
                ctxs.append(jnp.dot(p, vh,
                                    preferred_element_type=jnp.float32))

            ctx_rows.append(jnp.concatenate(ctxs, axis=-1))    # (S, D)

            # ---- EAR negative entropy for this (layer, sample) -----------
            # masked softmax over valid columns of the head-mean pooled map,
            # mean over valid rows (matches PyTorch boolean selection).
            # Exact division keeps the numpy reference check tight.
            pool = pool * jnp.float32(1.0 / H)                 # (S, S)
            lg = jnp.where(masks[b] > 0, pool, neg_big)
            mrow = jnp.max(lg, axis=-1, keepdims=True)
            e2 = jnp.exp(lg - mrow)
            s2 = jnp.sum(e2, axis=-1, keepdims=True)
            p2 = e2 / s2
            logp2 = (lg - mrow) - jnp.log(s2)
            ent = jnp.where(valid2d[b] > 0, p2 * logp2, 0.0)   # (S, S)
            row_ne = jnp.sum(ent, axis=-1, keepdims=True)      # (S, 1)
            samp_ne = jnp.sum(row_ne, axis=0, keepdims=True)   # (1, 1)
            total_ne = total_ne + samp_ne * inv_nvalid[b]

        # head-fused output projection for the whole batch: one (B*S,D)@(D,D)
        ctx_all = jnp.concatenate(ctx_rows, axis=0)            # (B*S, D)
        h_all = h_all + jnp.dot(ctx_all, wo,
                                preferred_element_type=jnp.float32)

        # lane-dense attention-probs writeback: minor dim = B*H*S = 128
        probs_ref[l] = jnp.concatenate(layer_ps, axis=-1)      # (S, 128)

    ne_ref[...] = total_ne * jnp.float32(1.0 / B)

    # classifier head on the CLS rows of the final hidden states
    cls = jnp.concatenate([h_all[b * S:b * S + 1, :] for b in range(B)],
                          axis=0)                              # (B, D)
    logits_ref[...] = (jnp.dot(cls, wc_ref[...],
                               preferred_element_type=jnp.float32)
                       + bc_ref[...])


def _fused_forward(x, mask3, maskT, wq, wk, wv, wo, wc, bc):
    return pl.pallas_call(
        _fused_ear_kernel,
        out_shape=(
            jax.ShapeDtypeStruct((B, NUM_LABELS), jnp.float32),
            jax.ShapeDtypeStruct((L, S, B * H * S), jnp.float32),
            jax.ShapeDtypeStruct((1, 1), jnp.float32),
        ),
    )(x, mask3, maskT, wq, wk, wv, wo, wc, bc)


# ---------------------------------------------------------------------------
# Parameter init (deterministic) and full EAR forward pass.
# Weights are stored head-fused: wq/wk/wv/wo as (L, D, D).
# ---------------------------------------------------------------------------
def init_params(key):
    kq, kk, kv, ko, kc, kb = jax.random.split(key, 6)
    wq = 0.08 * jax.random.normal(kq, (L, D, D), jnp.float32)
    wk = 0.08 * jax.random.normal(kk, (L, D, D), jnp.float32)
    wv = 0.08 * jax.random.normal(kv, (L, D, D), jnp.float32)
    wo = 0.08 * jax.random.normal(ko, (L, D, D), jnp.float32)
    wc = 0.08 * jax.random.normal(kc, (D, NUM_LABELS), jnp.float32)
    bc = 0.01 * jax.random.normal(kb, (1, NUM_LABELS), jnp.float32)
    return dict(wq=wq, wk=wk, wv=wv, wo=wo, wc=wc, bc=bc)


def ear_forward(params, inputs_embeds, attention_mask):
    maskf = attention_mask.astype(jnp.float32)
    mask3 = maskf.reshape(B, 1, S)    # key / column mask
    maskT = maskf.reshape(B, S, 1)    # query / row mask

    logits, probs_raw, ne = _fused_forward(
        inputs_embeds, mask3, maskT, params["wq"], params["wk"], params["wv"],
        params["wo"], params["wc"], params["bc"])

    # unscramble lane-dense probs (L, S, B*H*S) -> (L, B, H, S, S)
    attn_stack = jnp.transpose(probs_raw.reshape(L, S, B, H, S),
                               (0, 2, 3, 1, 4))
    attentions = tuple(attn_stack[l] for l in range(L))

    negative_entropy = ne[0, 0]
    reg_loss = EAR_REG_STRENGTH * negative_entropy

    model_output = {"logits": logits, "attentions": attentions}
    # Mirrors the PyTorch module: with no labels the HF output has exactly
    # (logits, attentions) -> len == 2 -> loss is just the EAR term.
    if len(model_output) == 2:
        loss = reg_loss
    else:
        # TODO(synk): original adds logits here (no CE loss without labels);
        # kept only for structural parity, this branch is never taken.
        loss = reg_loss + logits

    return EARClassificationOutput(model_output=model_output,
                                   negative_entropy=negative_entropy,
                                   reg_loss=reg_loss,
                                   loss=loss)


# ---------------------------------------------------------------------------
# numpy reference of compute_negative_entropy (PyTorch semantics) for a check
# ---------------------------------------------------------------------------
def compute_negative_entropy_ref(attn_stack, attention_mask):
    a = np.asarray(attn_stack)                              # (L, B, H, S, S)
    mask = np.asarray(attention_mask).astype(bool)          # (B, S)
    pool = a.mean(axis=2)                                   # (L, B, S, S)
    vals = []
    for b in range(a.shape[1]):
        m = mask[b]
        sample = pool[:, b][:, m][:, :, m]                  # (L, n, n)
        x = sample - sample.max(-1, keepdims=True)
        e = np.exp(x)
        p = e / e.sum(-1, keepdims=True)
        logp = x - np.log(e.sum(-1, keepdims=True))
        neg_ent = (p * logp).sum(-1).mean(-1)               # (L,)
        vals.append(neg_ent.sum(0))
    return float(np.stack(vals).mean())


if __name__ == "__main__":
    key = jax.random.PRNGKey(0)
    pkey, xkey = jax.random.split(key)
    params = init_params(pkey)

    inputs_embeds = jax.random.normal(xkey, (B, S, D), jnp.float32)
    # sample 0: no padding; sample 1: last 6 positions padded
    attention_mask = jnp.array(
        [[1] * S, [1] * 10 + [0] * (S - 10)], dtype=jnp.int32)

    out = ear_forward(params, inputs_embeds, attention_mask)
    jax.block_until_ready(out.loss)
    jax.block_until_ready(out.model_output["logits"])

    # sanity check of the EAR regularizer against the PyTorch-style reference
    attn_stack = jnp.stack(out.model_output["attentions"], axis=0)
    ref = compute_negative_entropy_ref(attn_stack, attention_mask)
    got = float(out.negative_entropy)
    assert abs(got - ref) < 1e-4, (got, ref)
    assert out.model_output["logits"].shape == (B, NUM_LABELS)

    print("KERNEL_OK")
</pallas_src>

<mosaic_0001>
module attributes {stable_mosaic.version = 11 : i64} {
  func.func @_fused_ear_kernel(%arg0: memref<2x16x32xf32, #tpu.memory_space<vmem>>, %arg1: memref<2x1x16xf32, #tpu.memory_space<vmem>>, %arg2: memref<2x16x1xf32, #tpu.memory_space<vmem>>, %arg3: memref<2x32x32xf32, #tpu.memory_space<vmem>>, %arg4: memref<2x32x32xf32, #tpu.memory_space<vmem>>, %arg5: memref<2x32x32xf32, #tpu.memory_space<vmem>>, %arg6: memref<2x32x32xf32, #tpu.memory_space<vmem>>, %arg7: memref<32x2xf32, #tpu.memory_space<vmem>>, %arg8: memref<1x2xf32, #tpu.memory_space<vmem>>, %arg9: memref<2x2xf32, #tpu.memory_space<vmem>>, %arg10: memref<2x16x128xf32, #tpu.memory_space<vmem>>, %arg11: memref<1x1xf32, #tpu.memory_space<vmem>>) attributes {dimension_semantics = [], scalar_prefetch = 0 : i64, scratch_operands = 0 : i64, tpu.core_type = #tpu.core_type<tc>} {
    %c0 = arith.constant 0 : index
    %c0_0 = arith.constant 0 : index
    %c0_1 = arith.constant 0 : index
    %0 = vector.load %arg1[%c0, %c0_0, %c0_1] : memref<2x1x16xf32, #tpu.memory_space<vmem>>, vector<1x1x16xf32>
    %1 = vector.shape_cast %0 : vector<1x1x16xf32> to vector<1x16xf32>
    %c1 = arith.constant 1 : index
    %c0_2 = arith.constant 0 : index
    %c0_3 = arith.constant 0 : index
    %2 = vector.load %arg1[%c1, %c0_2, %c0_3] : memref<2x1x16xf32, #tpu.memory_space<vmem>>, vector<1x1x16xf32>
    %3 = vector.shape_cast %2 : vector<1x1x16xf32> to vector<1x16xf32>
    %c0_4 = arith.constant 0 : index
    %c0_5 = arith.constant 0 : index
    %c0_6 = arith.constant 0 : index
    %4 = vector.load %arg2[%c0_4, %c0_5, %c0_6] : memref<2x16x1xf32, #tpu.memory_space<vmem>>, vector<1x16x1xf32>
    %5 = vector.shape_cast %4 : vector<1x16x1xf32> to vector<16x1xf32>
    %c1_7 = arith.constant 1 : index
    %c0_8 = arith.constant 0 : index
    %c0_9 = arith.constant 0 : index
    %6 = vector.load %arg2[%c1_7, %c0_8, %c0_9] : memref<2x16x1xf32, #tpu.memory_space<vmem>>, vector<1x16x1xf32>
    %7 = vector.shape_cast %6 : vector<1x16x1xf32> to vector<16x1xf32>
    %cst = arith.constant 1.000000e+00 : f32
    %8 = vector.broadcast %cst : f32 to vector<1x16xf32>
    %9 = arith.subf %8, %1 : vector<1x16xf32>
    %cst_10 = arith.constant -1.000000e+09 : f32
    %10 = vector.broadcast %cst_10 : f32 to vector<1x16xf32>
    %11 = arith.mulf %9, %10 : vector<1x16xf32>
    %cst_11 = arith.constant 1.000000e+00 : f32
    %12 = vector.broadcast %cst_11 : f32 to vector<1x16xf32>
    %13 = arith.subf %12, %3 : vector<1x16xf32>
    %cst_12 = arith.constant -1.000000e+09 : f32
    %14 = vector.broadcast %cst_12 : f32 to vector<1x16xf32>
    %15 = arith.mulf %13, %14 : vector<1x16xf32>
    %16 = vector.broadcast %5 : vector<16x1xf32> to vector<16x16xf32>
    %17 = vector.broadcast %1 : vector<1x16xf32> to vector<16x16xf32>
    %18 = arith.mulf %16, %17 : vector<16x16xf32>
    %19 = vector.broadcast %7 : vector<16x1xf32> to vector<16x16xf32>
    %20 = vector.broadcast %3 : vector<1x16xf32> to vector<16x16xf32>
    %21 = arith.mulf %19, %20 : vector<16x16xf32>
    %22 = vector.shape_cast %1 : vector<1x16xf32> to vector<1x1x16xf32>
    %cst_13 = arith.constant dense<0.000000e+00> : vector<1xf32>
    %23 = vector.multi_reduction <add>, %22, %cst_13 [1, 2] : vector<1x1x16xf32> to vector<1xf32>
    %24 = vector.shape_cast %23 : vector<1xf32> to vector<1x1x1xf32>
    %25 = vector.extract %24[0, 0, 0] : f32 from vector<1x1x1xf32>
    %cst_14 = arith.constant 1.000000e+00 : f32
    %26 = arith.divf %cst_14, %25 : f32
    %27 = vector.shape_cast %3 : vector<1x16xf32> to vector<1x1x16xf32>
    %cst_15 = arith.constant dense<0.000000e+00> : vector<1xf32>
    %28 = vector.multi_reduction <add>, %27, %cst_15 [1, 2] : vector<1x1x16xf32> to vector<1xf32>
    %29 = vector.shape_cast %28 : vector<1xf32> to vector<1x1x1xf32>
    %30 = vector.extract %29[0, 0, 0] : f32 from vector<1x1x1xf32>
    %cst_16 = arith.constant 1.000000e+00 : f32
    %31 = arith.divf %cst_16, %30 : f32
    %c0_17 = arith.constant 0 : index
    %c0_18 = arith.constant 0 : index
    %c0_19 = arith.constant 0 : index
    %32 = vector.load %arg0[%c0_17, %c0_18, %c0_19] : memref<2x16x32xf32, #tpu.memory_space<vmem>>, vector<1x16x32xf32>
    %33 = vector.shape_cast %32 : vector<1x16x32xf32> to vector<16x32xf32>
    %c1_20 = arith.constant 1 : index
    %c0_21 = arith.constant 0 : index
    %c0_22 = arith.constant 0 : index
    %34 = vector.load %arg0[%c1_20, %c0_21, %c0_22] : memref<2x16x32xf32, #tpu.memory_space<vmem>>, vector<1x16x32xf32>
    %35 = vector.shape_cast %34 : vector<1x16x32xf32> to vector<16x32xf32>
    %36 = tpu.concatenate %33, %35 in 0 : vector<16x32xf32>, vector<16x32xf32> -> vector<32x32xf32>
    %cst_23 = arith.constant 0.000000e+00 : f32
    %37 = vector.broadcast %cst_23 : f32 to vector<1x1xf32>
    %c0_24 = arith.constant 0 : index
    %c0_25 = arith.constant 0 : index
    %c0_26 = arith.constant 0 : index
    %38 = vector.load %arg3[%c0_24, %c0_25, %c0_26] : memref<2x32x32xf32, #tpu.memory_space<vmem>>, vector<1x32x32xf32>
    %39 = vector.shape_cast %38 : vector<1x32x32xf32> to vector<32x32xf32>
    %c0_27 = arith.constant 0 : index
    %c0_28 = arith.constant 0 : index
    %c0_29 = arith.constant 0 : index
    %40 = vector.load %arg4[%c0_27, %c0_28, %c0_29] : memref<2x32x32xf32, #tpu.memory_space<vmem>>, vector<1x32x32xf32>
    %41 = vector.shape_cast %40 : vector<1x32x32xf32> to vector<32x32xf32>
    %c0_30 = arith.constant 0 : index
    %c0_31 = arith.constant 0 : index
    %c0_32 = arith.constant 0 : index
    %42 = vector.load %arg5[%c0_30, %c0_31, %c0_32] : memref<2x32x32xf32, #tpu.memory_space<vmem>>, vector<1x32x32xf32>
    %43 = vector.shape_cast %42 : vector<1x32x32xf32> to vector<32x32xf32>
    %c0_33 = arith.constant 0 : index
    %c0_34 = arith.constant 0 : index
    %c0_35 = arith.constant 0 : index
    %44 = vector.load %arg6[%c0_33, %c0_34, %c0_35] : memref<2x32x32xf32, #tpu.memory_space<vmem>>, vector<1x32x32xf32>
    %45 = vector.shape_cast %44 : vector<1x32x32xf32> to vector<32x32xf32>
    %cst_36 = arith.constant dense<0.000000e+00> : vector<32x32xf32>
    %46 = tpu.matmul %36, %39, %cst_36 {dimension_numbers = #tpu.dot_dimension_numbers<[1], [0], [0], [1], [0, 0, 1, 1], [], []>} : vector<32x32xf32>, vector<32x32xf32>, vector<32x32xf32> -> vector<32x32xf32>
    %cst_37 = arith.constant dense<0.000000e+00> : vector<32x32xf32>
    %47 = tpu.matmul %36, %41, %cst_37 {dimension_numbers = #tpu.dot_dimension_numbers<[1], [0], [0], [1], [0, 0, 1, 1], [], []>} : vector<32x32xf32>, vector<32x32xf32>, vector<32x32xf32> -> vector<32x32xf32>
    %cst_38 = arith.constant dense<0.000000e+00> : vector<32x32xf32>
    %48 = tpu.matmul %36, %43, %cst_38 {dimension_numbers = #tpu.dot_dimension_numbers<[1], [0], [0], [1], [0, 0, 1, 1], [], []>} : vector<32x32xf32>, vector<32x32xf32>, vector<32x32xf32> -> vector<32x32xf32>
    %49 = vector.extract_strided_slice %46 {offsets = [0, 0], sizes = [16, 8], strides = [1, 1]} : vector<32x32xf32> to vector<16x8xf32>
    %50 = vector.extract_strided_slice %47 {offsets = [0, 0], sizes = [16, 8], strides = [1, 1]} : vector<32x32xf32> to vector<16x8xf32>
    %51 = vector.extract_strided_slice %48 {offsets = [0, 0], sizes = [16, 8], strides = [1, 1]} : vector<32x32xf32> to vector<16x8xf32>
    %52 = tpu.transpose %50, [1, 0] : vector<16x8xf32> -> vector<8x16xf32>
    %cst_39 = arith.constant dense<0.000000e+00> : vector<16x16xf32>
    %53 = tpu.matmul %49, %52, %cst_39 {dimension_numbers = #tpu.dot_dimension_numbers<[1], [0], [0], [1], [0, 0, 1, 1], [], []>} : vector<16x8xf32>, vector<8x16xf32>, vector<16x16xf32> -> vector<16x16xf32>
    %cst_40 = arith.constant 0.353553385 : f32
    %54 = vector.broadcast %cst_40 : f32 to vector<16x16xf32>
    %55 = arith.mulf %53, %54 : vector<16x16xf32>
    %56 = vector.broadcast %11 : vector<1x16xf32> to vector<16x16xf32>
    %57 = arith.addf %55, %56 : vector<16x16xf32>
    %cst_41 = arith.constant dense<0xFF800000> : vector<16xf32>
    %58 = vector.multi_reduction <maximumf>, %57, %cst_41 [1] : vector<16x16xf32> to vector<16xf32>
    %59 = vector.shape_cast %58 : vector<16xf32> to vector<16x1xf32>
    %60 = vector.broadcast %59 : vector<16x1xf32> to vector<16x16xf32>
    %61 = arith.subf %57, %60 : vector<16x16xf32>
    %62 = math.exp %61 : vector<16x16xf32>
    %cst_42 = arith.constant dense<0.000000e+00> : vector<16xf32>
    %63 = vector.multi_reduction <add>, %62, %cst_42 [1] : vector<16x16xf32> to vector<16xf32>
    %64 = vector.shape_cast %63 : vector<16xf32> to vector<16x1xf32>
    %65 = tpu.reciprocal %64 {approx = true} : vector<16x1xf32> -> vector<16x1xf32>
    %66 = vector.broadcast %65 : vector<16x1xf32> to vector<16x16xf32>
    %67 = arith.mulf %62, %66 : vector<16x16xf32>
    %cst_43 = arith.constant dense<0.000000e+00> : vector<16x8xf32>
    %68 = tpu.matmul %67, %51, %cst_43 {dimension_numbers = #tpu.dot_dimension_numbers<[1], [0], [0], [1], [0, 0, 1, 1], [], []>} : vector<16x16xf32>, vector<16x8xf32>, vector<16x8xf32> -> vector<16x8xf32>
    %69 = vector.extract_strided_slice %46 {offsets = [0, 8], sizes = [16, 8], strides = [1, 1]} : vector<32x32xf32> to vector<16x8xf32>
    %70 = vector.extract_strided_slice %47 {offsets = [0, 8], sizes = [16, 8], strides = [1, 1]} : vector<32x32xf32> to vector<16x8xf32>
    %71 = vector.extract_strided_slice %48 {offsets = [0, 8], sizes = [16, 8], strides = [1, 1]} : vector<32x32xf32> to vector<16x8xf32>
    %72 = tpu.transpose %70, [1, 0] : vector<16x8xf32> -> vector<8x16xf32>
    %cst_44 = arith.constant dense<0.000000e+00> : vector<16x16xf32>
    %73 = tpu.matmul %69, %72, %cst_44 {dimension_numbers = #tpu.dot_dimension_numbers<[1], [0], [0], [1], [0, 0, 1, 1], [], []>} : vector<16x8xf32>, vector<8x16xf32>, vector<16x16xf32> -> vector<16x16xf32>
    %cst_45 = arith.constant 0.353553385 : f32
    %74 = vector.broadcast %cst_45 : f32 to vector<16x16xf32>
    %75 = arith.mulf %73, %74 : vector<16x16xf32>
    %76 = vector.broadcast %11 : vector<1x16xf32> to vector<16x16xf32>
    %77 = arith.addf %75, %76 : vector<16x16xf32>
    %cst_46 = arith.constant dense<0xFF800000> : vector<16xf32>
    %78 = vector.multi_reduction <maximumf>, %77, %cst_46 [1] : vector<16x16xf32> to vector<16xf32>
    %79 = vector.shape_cast %78 : vector<16xf32> to vector<16x1xf32>
    %80 = vector.broadcast %79 : vector<16x1xf32> to vector<16x16xf32>
    %81 = arith.subf %77, %80 : vector<16x16xf32>
    %82 = math.exp %81 : vector<16x16xf32>
    %cst_47 = arith.constant dense<0.000000e+00> : vector<16xf32>
    %83 = vector.multi_reduction <add>, %82, %cst_47 [1] : vector<16x16xf32> to vector<16xf32>
    %84 = vector.shape_cast %83 : vector<16xf32> to vector<16x1xf32>
    %85 = tpu.reciprocal %84 {approx = true} : vector<16x1xf32> -> vector<16x1xf32>
    %86 = vector.broadcast %85 : vector<16x1xf32> to vector<16x16xf32>
    %87 = arith.mulf %82, %86 : vector<16x16xf32>
    %88 = arith.addf %67, %87 : vector<16x16xf32>
    %cst_48 = arith.constant dense<0.000000e+00> : vector<16x8xf32>
    %89 = tpu.matmul %87, %71, %cst_48 {dimension_numbers = #tpu.dot_dimension_numbers<[1], [0], [0], [1], [0, 0, 1, 1], [], []>} : vector<16x16xf32>, vector<16x8xf32>, vector<16x8xf32> -> vector<16x8xf32>
    %90 = vector.extract_strided_slice %46 {offsets = [0, 16], sizes = [16, 8], strides = [1, 1]} : vector<32x32xf32> to vector<16x8xf32>
    %91 = vector.extract_strided_slice %47 {offsets = [0, 16], sizes = [16, 8], strides = [1, 1]} : vector<32x32xf32> to vector<16x8xf32>
    %92 = vector.extract_strided_slice %48 {offsets = [0, 16], sizes = [16, 8], strides = [1, 1]} : vector<32x32xf32> to vector<16x8xf32>
    %93 = tpu.transpose %91, [1, 0] : vector<16x8xf32> -> vector<8x16xf32>
    %cst_49 = arith.constant dense<0.000000e+00> : vector<16x16xf32>
    %94 = tpu.matmul %90, %93, %cst_49 {dimension_numbers = #tpu.dot_dimension_numbers<[1], [0], [0], [1], [0, 0, 1, 1], [], []>} : vector<16x8xf32>, vector<8x16xf32>, vector<16x16xf32> -> vector<16x16xf32>
    %cst_50 = arith.constant 0.353553385 : f32
    %95 = vector.broadcast %cst_50 : f32 to vector<16x16xf32>
    %96 = arith.mulf %94, %95 : vector<16x16xf32>
    %97 = vector.broadcast %11 : vector<1x16xf32> to vector<16x16xf32>
    %98 = arith.addf %96, %97 : vector<16x16xf32>
    %cst_51 = arith.constant dense<0xFF800000> : vector<16xf32>
    %99 = vector.multi_reduction <maximumf>, %98, %cst_51 [1] : vector<16x16xf32> to vector<16xf32>
    %100 = vector.shape_cast %99 : vector<16xf32> to vector<16x1xf32>
    %101 = vector.broadcast %100 : vector<16x1xf32> to vector<16x16xf32>
    %102 = arith.subf %98, %101 : vector<16x16xf32>
    %103 = math.exp %102 : vector<16x16xf32>
    %cst_52 = arith.constant dense<0.000000e+00> : vector<16xf32>
    %104 = vector.multi_reduction <add>, %103, %cst_52 [1] : vector<16x16xf32> to vector<16xf32>
    %105 = vector.shape_cast %104 : vector<16xf32> to vector<16x1xf32>
    %106 = tpu.reciprocal %105 {approx = true} : vector<16x1xf32> -> vector<16x1xf32>
    %107 = vector.broadcast %106 : vector<16x1xf32> to vector<16x16xf32>
    %108 = arith.mulf %103, %107 : vector<16x16xf32>
    %109 = arith.addf %88, %108 : vector<16x16xf32>
    %cst_53 = arith.constant dense<0.000000e+00> : vector<16x8xf32>
    %110 = tpu.matmul %108, %92, %cst_53 {dimension_numbers = #tpu.dot_dimension_numbers<[1], [0], [0], [1], [0, 0, 1, 1], [], []>} : vector<16x16xf32>, vector<16x8xf32>, vector<16x8xf32> -> vector<16x8xf32>
    %111 = vector.extract_strided_slice %46 {offsets = [0, 24], sizes = [16, 8], strides = [1, 1]} : vector<32x32xf32> to vector<16x8xf32>
    %112 = vector.extract_strided_slice %47 {offsets = [0, 24], sizes = [16, 8], strides = [1, 1]} : vector<32x32xf32> to vector<16x8xf32>
    %113 = vector.extract_strided_slice %48 {offsets = [0, 24], sizes = [16, 8], strides = [1, 1]} : vector<32x32xf32> to vector<16x8xf32>
    %114 = tpu.transpose %112, [1, 0] : vector<16x8xf32> -> vector<8x16xf32>
    %cst_54 = arith.constant dense<0.000000e+00> : vector<16x16xf32>
    %115 = tpu.matmul %111, %114, %cst_54 {dimension_numbers = #tpu.dot_dimension_numbers<[1], [0], [0], [1], [0, 0, 1, 1], [], []>} : vector<16x8xf32>, vector<8x16xf32>, vector<16x16xf32> -> vector<16x16xf32>
    %cst_55 = arith.constant 0.353553385 : f32
    %116 = vector.broadcast %cst_55 : f32 to vector<16x16xf32>
    %117 = arith.mulf %115, %116 : vector<16x16xf32>
    %118 = vector.broadcast %11 : vector<1x16xf32> to vector<16x16xf32>
    %119 = arith.addf %117, %118 : vector<16x16xf32>
    %cst_56 = arith.constant dense<0xFF800000> : vector<16xf32>
    %120 = vector.multi_reduction <maximumf>, %119, %cst_56 [1] : vector<16x16xf32> to vector<16xf32>
    %121 = vector.shape_cast %120 : vector<16xf32> to vector<16x1xf32>
    %122 = vector.broadcast %121 : vector<16x1xf32> to vector<16x16xf32>
    %123 = arith.subf %119, %122 : vector<16x16xf32>
    %124 = math.exp %123 : vector<16x16xf32>
    %cst_57 = arith.constant dense<0.000000e+00> : vector<16xf32>
    %125 = vector.multi_reduction <add>, %124, %cst_57 [1] : vector<16x16xf32> to vector<16xf32>
    %126 = vector.shape_cast %125 : vector<16xf32> to vector<16x1xf32>
    %127 = tpu.reciprocal %126 {approx = true} : vector<16x1xf32> -> vector<16x1xf32>
    %128 = vector.broadcast %127 : vector<16x1xf32> to vector<16x16xf32>
    %129 = arith.mulf %124, %128 : vector<16x16xf32>
    %130 = arith.addf %109, %129 : vector<16x16xf32>
    %cst_58 = arith.constant dense<0.000000e+00> : vector<16x8xf32>
    %131 = tpu.matmul %129, %113, %cst_58 {dimension_numbers = #tpu.dot_dimension_numbers<[1], [0], [0], [1], [0, 0, 1, 1], [], []>} : vector<16x16xf32>, vector<16x8xf32>, vector<16x8xf32> -> vector<16x8xf32>
    %132 = tpu.concatenate %68, %89, %110, %131 in 1 : vector<16x8xf32>, vector<16x8xf32>, vector<16x8xf32>, vector<16x8xf32> -> vector<16x32xf32>
    %cst_59 = arith.constant 2.500000e-01 : f32
    %133 = vector.broadcast %cst_59 : f32 to vector<16x16xf32>
    %134 = arith.mulf %130, %133 : vector<16x16xf32>
    %cst_60 = arith.constant 0.000000e+00 : f32
    %135 = vector.broadcast %cst_60 : f32 to vector<1x16xf32>
    %136 = arith.cmpf ogt, %1, %135 : vector<1x16xf32>
    %cst_61 = arith.constant -1.000000e+30 : f32
    %137 = vector.shape_cast %136 : vector<1x16xi1> to vector<1x16xi1>
    %138 = vector.broadcast %137 : vector<1x16xi1> to vector<16x16xi1>
    %139 = vector.broadcast %cst_61 : f32 to vector<16x16xf32>
    %140 = arith.select %138, %134, %139 : vector<16x16xi1>, vector<16x16xf32>
    %cst_62 = arith.constant dense<0xFF800000> : vector<16xf32>
    %141 = vector.multi_reduction <maximumf>, %140, %cst_62 [1] : vector<16x16xf32> to vector<16xf32>
    %142 = vector.shape_cast %141 : vector<16xf32> to vector<16x1xf32>
    %143 = vector.broadcast %142 : vector<16x1xf32> to vector<16x16xf32>
    %144 = arith.subf %140, %143 : vector<16x16xf32>
    %145 = math.exp %144 : vector<16x16xf32>
    %cst_63 = arith.constant dense<0.000000e+00> : vector<16xf32>
    %146 = vector.multi_reduction <add>, %145, %cst_63 [1] : vector<16x16xf32> to vector<16xf32>
    %147 = vector.shape_cast %146 : vector<16xf32> to vector<16x1xf32>
    %148 = vector.broadcast %147 : vector<16x1xf32> to vector<16x16xf32>
    %149 = arith.divf %145, %148 : vector<16x16xf32>
    %150 = vector.broadcast %142 : vector<16x1xf32> to vector<16x16xf32>
    %151 = arith.subf %140, %150 : vector<16x16xf32>
    %152 = math.log %147 : vector<16x1xf32>
    %153 = vector.broadcast %152 : vector<16x1xf32> to vector<16x16xf32>
    %154 = arith.subf %151, %153 : vector<16x16xf32>
    %cst_64 = arith.constant 0.000000e+00 : f32
    %155 = vector.broadcast %cst_64 : f32 to vector<16x16xf32>
    %156 = arith.cmpf ogt, %18, %155 : vector<16x16xf32>
    %157 = arith.mulf %149, %154 : vector<16x16xf32>
    %cst_65 = arith.constant 0.000000e+00 : f32
    %158 = vector.broadcast %cst_65 : f32 to vector<16x16xf32>
    %159 = arith.select %156, %157, %158 : vector<16x16xi1>, vector<16x16xf32>
    %cst_66 = arith.constant dense<0.000000e+00> : vector<16xf32>
    %160 = vector.multi_reduction <add>, %159, %cst_66 [1] : vector<16x16xf32> to vector<16xf32>
    %161 = vector.shape_cast %160 : vector<16xf32> to vector<16x1xf32>
    %cst_67 = arith.constant dense<0.000000e+00> : vector<1xf32>
    %162 = vector.multi_reduction <add>, %161, %cst_67 [0] : vector<16x1xf32> to vector<1xf32>
    %163 = vector.shape_cast %162 : vector<1xf32> to vector<1x1xf32>
    %164 = vector.broadcast %26 : f32 to vector<1x1xf32>
    %165 = arith.mulf %163, %164 : vector<1x1xf32>
    %166 = arith.addf %37, %165 : vector<1x1xf32>
    %167 = vector.extract_strided_slice %46 {offsets = [16, 0], sizes = [16, 8], strides = [1, 1]} : vector<32x32xf32> to vector<16x8xf32>
    %168 = vector.extract_strided_slice %47 {offsets = [16, 0], sizes = [16, 8], strides = [1, 1]} : vector<32x32xf32> to vector<16x8xf32>
    %169 = vector.extract_strided_slice %48 {offsets = [16, 0], sizes = [16, 8], strides = [1, 1]} : vector<32x32xf32> to vector<16x8xf32>
    %170 = tpu.transpose %168, [1, 0] : vector<16x8xf32> -> vector<8x16xf32>
    %cst_68 = arith.constant dense<0.000000e+00> : vector<16x16xf32>
    %171 = tpu.matmul %167, %170, %cst_68 {dimension_numbers = #tpu.dot_dimension_numbers<[1], [0], [0], [1], [0, 0, 1, 1], [], []>} : vector<16x8xf32>, vector<8x16xf32>, vector<16x16xf32> -> vector<16x16xf32>
    %cst_69 = arith.constant 0.353553385 : f32
    %172 = vector.broadcast %cst_69 : f32 to vector<16x16xf32>
    %173 = arith.mulf %171, %172 : vector<16x16xf32>
    %174 = vector.broadcast %15 : vector<1x16xf32> to vector<16x16xf32>
    %175 = arith.addf %173, %174 : vector<16x16xf32>
    %cst_70 = arith.constant dense<0xFF800000> : vector<16xf32>
    %176 = vector.multi_reduction <maximumf>, %175, %cst_70 [1] : vector<16x16xf32> to vector<16xf32>
    %177 = vector.shape_cast %176 : vector<16xf32> to vector<16x1xf32>
    %178 = vector.broadcast %177 : vector<16x1xf32> to vector<16x16xf32>
    %179 = arith.subf %175, %178 : vector<16x16xf32>
    %180 = math.exp %179 : vector<16x16xf32>
    %cst_71 = arith.constant dense<0.000000e+00> : vector<16xf32>
    %181 = vector.multi_reduction <add>, %180, %cst_71 [1] : vector<16x16xf32> to vector<16xf32>
    %182 = vector.shape_cast %181 : vector<16xf32> to vector<16x1xf32>
    %183 = tpu.reciprocal %182 {approx = true} : vector<16x1xf32> -> vector<16x1xf32>
    %184 = vector.broadcast %183 : vector<16x1xf32> to vector<16x16xf32>
    %185 = arith.mulf %180, %184 : vector<16x16xf32>
    %cst_72 = arith.constant dense<0.000000e+00> : vector<16x8xf32>
    %186 = tpu.matmul %185, %169, %cst_72 {dimension_numbers = #tpu.dot_dimension_numbers<[1], [0], [0], [1], [0, 0, 1, 1], [], []>} : vector<16x16xf32>, vector<16x8xf32>, vector<16x8xf32> -> vector<16x8xf32>
    %187 = vector.extract_strided_slice %46 {offsets = [16, 8], sizes = [16, 8], strides = [1, 1]} : vector<32x32xf32> to vector<16x8xf32>
    %188 = vector.extract_strided_slice %47 {offsets = [16, 8], sizes = [16, 8], strides = [1, 1]} : vector<32x32xf32> to vector<16x8xf32>
    %189 = vector.extract_strided_slice %48 {offsets = [16, 8], sizes = [16, 8], strides = [1, 1]} : vector<32x32xf32> to vector<16x8xf32>
    %190 = tpu.transpose %188, [1, 0] : vector<16x8xf32> -> vector<8x16xf32>
    %cst_73 = arith.constant dense<0.000000e+00> : vector<16x16xf32>
    %191 = tpu.matmul %187, %190, %cst_73 {dimension_numbers = #tpu.dot_dimension_numbers<[1], [0], [0], [1], [0, 0, 1, 1], [], []>} : vector<16x8xf32>, vector<8x16xf32>, vector<16x16xf32> -> vector<16x16xf32>
    %cst_74 = arith.constant 0.353553385 : f32
    %192 = vector.broadcast %cst_74 : f32 to vector<16x16xf32>
    %193 = arith.mulf %191, %192 : vector<16x16xf32>
    %194 = vector.broadcast %15 : vector<1x16xf32> to vector<16x16xf32>
    %195 = arith.addf %193, %194 : vector<16x16xf32>
    %cst_75 = arith.constant dense<0xFF800000> : vector<16xf32>
    %196 = vector.multi_reduction <maximumf>, %195, %cst_75 [1] : vector<16x16xf32> to vector<16xf32>
    %197 = vector.shape_cast %196 : vector<16xf32> to vector<16x1xf32>
    %198 = vector.broadcast %197 : vector<16x1xf32> to vector<16x16xf32>
    %199 = arith.subf %195, %198 : vector<16x16xf32>
    %200 = math.exp %199 : vector<16x16xf32>
    %cst_76 = arith.constant dense<0.000000e+00> : vector<16xf32>
    %201 = vector.multi_reduction <add>, %200, %cst_76 [1] : vector<16x16xf32> to vector<16xf32>
    %202 = vector.shape_cast %201 : vector<16xf32> to vector<16x1xf32>
    %203 = tpu.reciprocal %202 {approx = true} : vector<16x1xf32> -> vector<16x1xf32>
    %204 = vector.broadcast %203 : vector<16x1xf32> to vector<16x16xf32>
    %205 = arith.mulf %200, %204 : vector<16x16xf32>
    %206 = arith.addf %185, %205 : vector<16x16xf32>
    %cst_77 = arith.constant dense<0.000000e+00> : vector<16x8xf32>
    %207 = tpu.matmul %205, %189, %cst_77 {dimension_numbers = #tpu.dot_dimension_numbers<[1], [0], [0], [1], [0, 0, 1, 1], [], []>} : vector<16x16xf32>, vector<16x8xf32>, vector<16x8xf32> -> vector<16x8xf32>
    %208 = vector.extract_strided_slice %46 {offsets = [16, 16], sizes = [16, 8], strides = [1, 1]} : vector<32x32xf32> to vector<16x8xf32>
    %209 = vector.extract_strided_slice %47 {offsets = [16, 16], sizes = [16, 8], strides = [1, 1]} : vector<32x32xf32> to vector<16x8xf32>
    %210 = vector.extract_strided_slice %48 {offsets = [16, 16], sizes = [16, 8], strides = [1, 1]} : vector<32x32xf32> to vector<16x8xf32>
    %211 = tpu.transpose %209, [1, 0] : vector<16x8xf32> -> vector<8x16xf32>
    %cst_78 = arith.constant dense<0.000000e+00> : vector<16x16xf32>
    %212 = tpu.matmul %208, %211, %cst_78 {dimension_numbers = #tpu.dot_dimension_numbers<[1], [0], [0], [1], [0, 0, 1, 1], [], []>} : vector<16x8xf32>, vector<8x16xf32>, vector<16x16xf32> -> vector<16x16xf32>
    %cst_79 = arith.constant 0.353553385 : f32
    %213 = vector.broadcast %cst_79 : f32 to vector<16x16xf32>
    %214 = arith.mulf %212, %213 : vector<16x16xf32>
    %215 = vector.broadcast %15 : vector<1x16xf32> to vector<16x16xf32>
    %216 = arith.addf %214, %215 : vector<16x16xf32>
    %cst_80 = arith.constant dense<0xFF800000> : vector<16xf32>
    %217 = vector.multi_reduction <maximumf>, %216, %cst_80 [1] : vector<16x16xf32> to vector<16xf32>
    %218 = vector.shape_cast %217 : vector<16xf32> to vector<16x1xf32>
    %219 = vector.broadcast %218 : vector<16x1xf32> to vector<16x16xf32>
    %220 = arith.subf %216, %219 : vector<16x16xf32>
    %221 = math.exp %220 : vector<16x16xf32>
    %cst_81 = arith.constant dense<0.000000e+00> : vector<16xf32>
    %222 = vector.multi_reduction <add>, %221, %cst_81 [1] : vector<16x16xf32> to vector<16xf32>
    %223 = vector.shape_cast %222 : vector<16xf32> to vector<16x1xf32>
    %224 = tpu.reciprocal %223 {approx = true} : vector<16x1xf32> -> vector<16x1xf32>
    %225 = vector.broadcast %224 : vector<16x1xf32> to vector<16x16xf32>
    %226 = arith.mulf %221, %225 : vector<16x16xf32>
    %227 = arith.addf %206, %226 : vector<16x16xf32>
    %cst_82 = arith.constant dense<0.000000e+00> : vector<16x8xf32>
    %228 = tpu.matmul %226, %210, %cst_82 {dimension_numbers = #tpu.dot_dimension_numbers<[1], [0], [0], [1], [0, 0, 1, 1], [], []>} : vector<16x16xf32>, vector<16x8xf32>, vector<16x8xf32> -> vector<16x8xf32>
    %229 = vector.extract_strided_slice %46 {offsets = [16, 24], sizes = [16, 8], strides = [1, 1]} : vector<32x32xf32> to vector<16x8xf32>
    %230 = vector.extract_strided_slice %47 {offsets = [16, 24], sizes = [16, 8], strides = [1, 1]} : vector<32x32xf32> to vector<16x8xf32>
    %231 = vector.extract_strided_slice %48 {offsets = [16, 24], sizes = [16, 8], strides = [1, 1]} : vector<32x32xf32> to vector<16x8xf32>
    %232 = tpu.transpose %230, [1, 0] : vector<16x8xf32> -> vector<8x16xf32>
    %cst_83 = arith.constant dense<0.000000e+00> : vector<16x16xf32>
    %233 = tpu.matmul %229, %232, %cst_83 {dimension_numbers = #tpu.dot_dimension_numbers<[1], [0], [0], [1], [0, 0, 1, 1], [], []>} : vector<16x8xf32>, vector<8x16xf32>, vector<16x16xf32> -> vector<16x16xf32>
    %cst_84 = arith.constant 0.353553385 : f32
    %234 = vector.broadcast %cst_84 : f32 to vector<16x16xf32>
    %235 = arith.mulf %233, %234 : vector<16x16xf32>
    %236 = vector.broadcast %15 : vector<1x16xf32> to vector<16x16xf32>
    %237 = arith.addf %235, %236 : vector<16x16xf32>
    %cst_85 = arith.constant dense<0xFF800000> : vector<16xf32>
    %238 = vector.multi_reduction <maximumf>, %237, %cst_85 [1] : vector<16x16xf32> to vector<16xf32>
    %239 = vector.shape_cast %238 : vector<16xf32> to vector<16x1xf32>
    %240 = vector.broadcast %239 : vector<16x1xf32> to vector<16x16xf32>
    %241 = arith.subf %237, %240 : vector<16x16xf32>
    %242 = math.exp %241 : vector<16x16xf32>
    %cst_86 = arith.constant dense<0.000000e+00> : vector<16xf32>
    %243 = vector.multi_reduction <add>, %242, %cst_86 [1] : vector<16x16xf32> to vector<16xf32>
    %244 = vector.shape_cast %243 : vector<16xf32> to vector<16x1xf32>
    %245 = tpu.reciprocal %244 {approx = true} : vector<16x1xf32> -> vector<16x1xf32>
    %246 = vector.broadcast %245 : vector<16x1xf32> to vector<16x16xf32>
    %247 = arith.mulf %242, %246 : vector<16x16xf32>
    %248 = arith.addf %227, %247 : vector<16x16xf32>
    %cst_87 = arith.constant dense<0.000000e+00> : vector<16x8xf32>
    %249 = tpu.matmul %247, %231, %cst_87 {dimension_numbers = #tpu.dot_dimension_numbers<[1], [0], [0], [1], [0, 0, 1, 1], [], []>} : vector<16x16xf32>, vector<16x8xf32>, vector<16x8xf32> -> vector<16x8xf32>
    %250 = tpu.concatenate %186, %207, %228, %249 in 1 : vector<16x8xf32>, vector<16x8xf32>, vector<16x8xf32>, vector<16x8xf32> -> vector<16x32xf32>
    %cst_88 = arith.constant 2.500000e-01 : f32
    %251 = vector.broadcast %cst_88 : f32 to vector<16x16xf32>
    %252 = arith.mulf %248, %251 : vector<16x16xf32>
    %cst_89 = arith.constant 0.000000e+00 : f32
    %253 = vector.broadcast %cst_89 : f32 to vector<1x16xf32>
    %254 = arith.cmpf ogt, %3, %253 : vector<1x16xf32>
    %cst_90 = arith.constant -1.000000e+30 : f32
    %255 = vector.shape_cast %254 : vector<1x16xi1> to vector<1x16xi1>
    %256 = vector.broadcast %255 : vector<1x16xi1> to vector<16x16xi1>
    %257 = vector.broadcast %cst_90 : f32 to vector<16x16xf32>
    %258 = arith.select %256, %252, %257 : vector<16x16xi1>, vector<16x16xf32>
    %cst_91 = arith.constant dense<0xFF800000> : vector<16xf32>
    %259 = vector.multi_reduction <maximumf>, %258, %cst_91 [1] : vector<16x16xf32> to vector<16xf32>
    %260 = vector.shape_cast %259 : vector<16xf32> to vector<16x1xf32>
    %261 = vector.broadcast %260 : vector<16x1xf32> to vector<16x16xf32>
    %262 = arith.subf %258, %261 : vector<16x16xf32>
    %263 = math.exp %262 : vector<16x16xf32>
    %cst_92 = arith.constant dense<0.000000e+00> : vector<16xf32>
    %264 = vector.multi_reduction <add>, %263, %cst_92 [1] : vector<16x16xf32> to vector<16xf32>
    %265 = vector.shape_cast %264 : vector<16xf32> to vector<16x1xf32>
    %266 = vector.broadcast %265 : vector<16x1xf32> to vector<16x16xf32>
    %267 = arith.divf %263, %266 : vector<16x16xf32>
    %268 = vector.broadcast %260 : vector<16x1xf32> to vector<16x16xf32>
    %269 = arith.subf %258, %268 : vector<16x16xf32>
    %270 = math.log %265 : vector<16x1xf32>
    %271 = vector.broadcast %270 : vector<16x1xf32> to vector<16x16xf32>
    %272 = arith.subf %269, %271 : vector<16x16xf32>
    %cst_93 = arith.constant 0.000000e+00 : f32
    %273 = vector.broadcast %cst_93 : f32 to vector<16x16xf32>
    %274 = arith.cmpf ogt, %21, %273 : vector<16x16xf32>
    %275 = arith.mulf %267, %272 : vector<16x16xf32>
    %cst_94 = arith.constant 0.000000e+00 : f32
    %276 = vector.broadcast %cst_94 : f32 to vector<16x16xf32>
    %277 = arith.select %274, %275, %276 : vector<16x16xi1>, vector<16x16xf32>
    %cst_95 = arith.constant dense<0.000000e+00> : vector<16xf32>
    %278 = vector.multi_reduction <add>, %277, %cst_95 [1] : vector<16x16xf32> to vector<16xf32>
    %279 = vector.shape_cast %278 : vector<16xf32> to vector<16x1xf32>
    %cst_96 = arith.constant dense<0.000000e+00> : vector<1xf32>
    %280 = vector.multi_reduction <add>, %279, %cst_96 [0] : vector<16x1xf32> to vector<1xf32>
    %281 = vector.shape_cast %280 : vector<1xf32> to vector<1x1xf32>
    %282 = vector.broadcast %31 : f32 to vector<1x1xf32>
    %283 = arith.mulf %281, %282 : vector<1x1xf32>
    %284 = arith.addf %166, %283 : vector<1x1xf32>
    %285 = tpu.concatenate %132, %250 in 0 : vector<16x32xf32>, vector<16x32xf32> -> vector<32x32xf32>
    %cst_97 = arith.constant dense<0.000000e+00> : vector<32x32xf32>
    %286 = tpu.matmul %285, %45, %cst_97 {dimension_numbers = #tpu.dot_dimension_numbers<[1], [0], [0], [1], [0, 0, 1, 1], [], []>} : vector<32x32xf32>, vector<32x32xf32>, vector<32x32xf32> -> vector<32x32xf32>
    %287 = arith.addf %36, %286 : vector<32x32xf32>
    %288 = tpu.concatenate %67, %87, %108, %129, %185, %205, %226, %247 in 1 : vector<16x16xf32>, vector<16x16xf32>, vector<16x16xf32>, vector<16x16xf32>, vector<16x16xf32>, vector<16x16xf32>, vector<16x16xf32>, vector<16x16xf32> -> vector<16x128xf32>
    %c0_98 = arith.constant 0 : index
    %c0_99 = arith.constant 0 : index
    %c0_100 = arith.constant 0 : index
    %289 = vector.load %arg10[%c0_98, %c0_99, %c0_100] : memref<2x16x128xf32, #tpu.memory_space<vmem>>, vector<1x16x128xf32>
    %290 = vector.shape_cast %289 : vector<1x16x128xf32> to vector<16x128xf32>
    %291 = vector.shape_cast %288 : vector<16x128xf32> to vector<1x16x128xf32>
    tpu.vector_store %arg10[%c0_98, %c0_99, %c0_100], %291 {strides = array<i32>} : memref<2x16x128xf32, #tpu.memory_space<vmem>>, vector<1x16x128xf32>,
    %c1_101 = arith.constant 1 : index
    %c0_102 = arith.constant 0 : index
    %c0_103 = arith.constant 0 : index
    %292 = vector.load %arg3[%c1_101, %c0_102, %c0_103] : memref<2x32x32xf32, #tpu.memory_space<vmem>>, vector<1x32x32xf32>
    %293 = vector.shape_cast %292 : vector<1x32x32xf32> to vector<32x32xf32>
    %c1_104 = arith.constant 1 : index
    %c0_105 = arith.constant 0 : index
    %c0_106 = arith.constant 0 : index
    %294 = vector.load %arg4[%c1_104, %c0_105, %c0_106] : memref<2x32x32xf32, #tpu.memory_space<vmem>>, vector<1x32x32xf32>
    %295 = vector.shape_cast %294 : vector<1x32x32xf32> to vector<32x32xf32>
    %c1_107 = arith.constant 1 : index
    %c0_108 = arith.constant 0 : index
    %c0_109 = arith.constant 0 : index
    %296 = vector.load %arg5[%c1_107, %c0_108, %c0_109] : memref<2x32x32xf32, #tpu.memory_space<vmem>>, vector<1x32x32xf32>
    %297 = vector.shape_cast %296 : vector<1x32x32xf32> to vector<32x32xf32>
    %c1_110 = arith.constant 1 : index
    %c0_111 = arith.constant 0 : index
    %c0_112 = arith.constant 0 : index
    %298 = vector.load %arg6[%c1_110, %c0_111, %c0_112] : memref<2x32x32xf32, #tpu.memory_space<vmem>>, vector<1x32x32xf32>
    %299 = vector.shape_cast %298 : vector<1x32x32xf32> to vector<32x32xf32>
    %cst_113 = arith.constant dense<0.000000e+00> : vector<32x32xf32>
    %300 = tpu.matmul %287, %293, %cst_113 {dimension_numbers = #tpu.dot_dimension_numbers<[1], [0], [0], [1], [0, 0, 1, 1], [], []>} : vector<32x32xf32>, vector<32x32xf32>, vector<32x32xf32> -> vector<32x32xf32>
    %cst_114 = arith.constant dense<0.000000e+00> : vector<32x32xf32>
    %301 = tpu.matmul %287, %295, %cst_114 {dimension_numbers = #tpu.dot_dimension_numbers<[1], [0], [0], [1], [0, 0, 1, 1], [], []>} : vector<32x32xf32>, vector<32x32xf32>, vector<32x32xf32> -> vector<32x32xf32>
    %cst_115 = arith.constant dense<0.000000e+00> : vector<32x32xf32>
    %302 = tpu.matmul %287, %297, %cst_115 {dimension_numbers = #tpu.dot_dimension_numbers<[1], [0], [0], [1], [0, 0, 1, 1], [], []>} : vector<32x32xf32>, vector<32x32xf32>, vector<32x32xf32> -> vector<32x32xf32>
    %303 = vector.extract_strided_slice %300 {offsets = [0, 0], sizes = [16, 8], strides = [1, 1]} : vector<32x32xf32> to vector<16x8xf32>
    %304 = vector.extract_strided_slice %301 {offsets = [0, 0], sizes = [16, 8], strides = [1, 1]} : vector<32x32xf32> to vector<16x8xf32>
    %305 = vector.extract_strided_slice %302 {offsets = [0, 0], sizes = [16, 8], strides = [1, 1]} : vector<32x32xf32> to vector<16x8xf32>
    %306 = tpu.transpose %304, [1, 0] : vector<16x8xf32> -> vector<8x16xf32>
    %cst_116 = arith.constant dense<0.000000e+00> : vector<16x16xf32>
    %307 = tpu.matmul %303, %306, %cst_116 {dimension_numbers = #tpu.dot_dimension_numbers<[1], [0], [0], [1], [0, 0, 1, 1], [], []>} : vector<16x8xf32>, vector<8x16xf32>, vector<16x16xf32> -> vector<16x16xf32>
    %cst_117 = arith.constant 0.353553385 : f32
    %308 = vector.broadcast %cst_117 : f32 to vector<16x16xf32>
    %309 = arith.mulf %307, %308 : vector<16x16xf32>
    %310 = vector.broadcast %11 : vector<1x16xf32> to vector<16x16xf32>
    %311 = arith.addf %309, %310 : vector<16x16xf32>
    %cst_118 = arith.constant dense<0xFF800000> : vector<16xf32>
    %312 = vector.multi_reduction <maximumf>, %311, %cst_118 [1] : vector<16x16xf32> to vector<16xf32>
    %313 = vector.shape_cast %312 : vector<16xf32> to vector<16x1xf32>
    %314 = vector.broadcast %313 : vector<16x1xf32> to vector<16x16xf32>
    %315 = arith.subf %311, %314 : vector<16x16xf32>
    %316 = math.exp %315 : vector<16x16xf32>
    %cst_119 = arith.constant dense<0.000000e+00> : vector<16xf32>
    %317 = vector.multi_reduction <add>, %316, %cst_119 [1] : vector<16x16xf32> to vector<16xf32>
    %318 = vector.shape_cast %317 : vector<16xf32> to vector<16x1xf32>
    %319 = tpu.reciprocal %318 {approx = true} : vector<16x1xf32> -> vector<16x1xf32>
    %320 = vector.broadcast %319 : vector<16x1xf32> to vector<16x16xf32>
    %321 = arith.mulf %316, %320 : vector<16x16xf32>
    %cst_120 = arith.constant dense<0.000000e+00> : vector<16x8xf32>
    %322 = tpu.matmul %321, %305, %cst_120 {dimension_numbers = #tpu.dot_dimension_numbers<[1], [0], [0], [1], [0, 0, 1, 1], [], []>} : vector<16x16xf32>, vector<16x8xf32>, vector<16x8xf32> -> vector<16x8xf32>
    %323 = vector.extract_strided_slice %300 {offsets = [0, 8], sizes = [16, 8], strides = [1, 1]} : vector<32x32xf32> to vector<16x8xf32>
    %324 = vector.extract_strided_slice %301 {offsets = [0, 8], sizes = [16, 8], strides = [1, 1]} : vector<32x32xf32> to vector<16x8xf32>
    %325 = vector.extract_strided_slice %302 {offsets = [0, 8], sizes = [16, 8], strides = [1, 1]} : vector<32x32xf32> to vector<16x8xf32>
    %326 = tpu.transpose %324, [1, 0] : vector<16x8xf32> -> vector<8x16xf32>
    %cst_121 = arith.constant dense<0.000000e+00> : vector<16x16xf32>
    %327 = tpu.matmul %323, %326, %cst_121 {dimension_numbers = #tpu.dot_dimension_numbers<[1], [0], [0], [1], [0, 0, 1, 1], [], []>} : vector<16x8xf32>, vector<8x16xf32>, vector<16x16xf32> -> vector<16x16xf32>
    %cst_122 = arith.constant 0.353553385 : f32
    %328 = vector.broadcast %cst_122 : f32 to vector<16x16xf32>
    %329 = arith.mulf %327, %328 : vector<16x16xf32>
    %330 = vector.broadcast %11 : vector<1x16xf32> to vector<16x16xf32>
    %331 = arith.addf %329, %330 : vector<16x16xf32>
    %cst_123 = arith.constant dense<0xFF800000> : vector<16xf32>
    %332 = vector.multi_reduction <maximumf>, %331, %cst_123 [1] : vector<16x16xf32> to vector<16xf32>
    %333 = vector.shape_cast %332 : vector<16xf32> to vector<16x1xf32>
    %334 = vector.broadcast %333 : vector<16x1xf32> to vector<16x16xf32>
    %335 = arith.subf %331, %334 : vector<16x16xf32>
    %336 = math.exp %335 : vector<16x16xf32>
    %cst_124 = arith.constant dense<0.000000e+00> : vector<16xf32>
    %337 = vector.multi_reduction <add>, %336, %cst_124 [1] : vector<16x16xf32> to vector<16xf32>
    %338 = vector.shape_cast %337 : vector<16xf32> to vector<16x1xf32>
    %339 = tpu.reciprocal %338 {approx = true} : vector<16x1xf32> -> vector<16x1xf32>
    %340 = vector.broadcast %339 : vector<16x1xf32> to vector<16x16xf32>
    %341 = arith.mulf %336, %340 : vector<16x16xf32>
    %342 = arith.addf %321, %341 : vector<16x16xf32>
    %cst_125 = arith.constant dense<0.000000e+00> : vector<16x8xf32>
    %343 = tpu.matmul %341, %325, %cst_125 {dimension_numbers = #tpu.dot_dimension_numbers<[1], [0], [0], [1], [0, 0, 1, 1], [], []>} : vector<16x16xf32>, vector<16x8xf32>, vector<16x8xf32> -> vector<16x8xf32>
    %344 = vector.extract_strided_slice %300 {offsets = [0, 16], sizes = [16, 8], strides = [1, 1]} : vector<32x32xf32> to vector<16x8xf32>
    %345 = vector.extract_strided_slice %301 {offsets = [0, 16], sizes = [16, 8], strides = [1, 1]} : vector<32x32xf32> to vector<16x8xf32>
    %346 = vector.extract_strided_slice %302 {offsets = [0, 16], sizes = [16, 8], strides = [1, 1]} : vector<32x32xf32> to vector<16x8xf32>
    %347 = tpu.transpose %345, [1, 0] : vector<16x8xf32> -> vector<8x16xf32>
    %cst_126 = arith.constant dense<0.000000e+00> : vector<16x16xf32>
    %348 = tpu.matmul %344, %347, %cst_126 {dimension_numbers = #tpu.dot_dimension_numbers<[1], [0], [0], [1], [0, 0, 1, 1], [], []>} : vector<16x8xf32>, vector<8x16xf32>, vector<16x16xf32> -> vector<16x16xf32>
    %cst_127 = arith.constant 0.353553385 : f32
    %349 = vector.broadcast %cst_127 : f32 to vector<16x16xf32>
    %350 = arith.mulf %348, %349 : vector<16x16xf32>
    %351 = vector.broadcast %11 : vector<1x16xf32> to vector<16x16xf32>
    %352 = arith.addf %350, %351 : vector<16x16xf32>
    %cst_128 = arith.constant dense<0xFF800000> : vector<16xf32>
    %353 = vector.multi_reduction <maximumf>, %352, %cst_128 [1] : vector<16x16xf32> to vector<16xf32>
    %354 = vector.shape_cast %353 : vector<16xf32> to vector<16x1xf32>
    %355 = vector.broadcast %354 : vector<16x1xf32> to vector<16x16xf32>
    %356 = arith.subf %352, %355 : vector<16x16xf32>
    %357 = math.exp %356 : vector<16x16xf32>
    %cst_129 = arith.constant dense<0.000000e+00> : vector<16xf32>
    %358 = vector.multi_reduction <add>, %357, %cst_129 [1] : vector<16x16xf32> to vector<16xf32>
    %359 = vector.shape_cast %358 : vector<16xf32> to vector<16x1xf32>
    %360 = tpu.reciprocal %359 {approx = true} : vector<16x1xf32> -> vector<16x1xf32>
    %361 = vector.broadcast %360 : vector<16x1xf32> to vector<16x16xf32>
    %362 = arith.mulf %357, %361 : vector<16x16xf32>
    %363 = arith.addf %342, %362 : vector<16x16xf32>
    %cst_130 = arith.constant dense<0.000000e+00> : vector<16x8xf32>
    %364 = tpu.matmul %362, %346, %cst_130 {dimension_numbers = #tpu.dot_dimension_numbers<[1], [0], [0], [1], [0, 0, 1, 1], [], []>} : vector<16x16xf32>, vector<16x8xf32>, vector<16x8xf32> -> vector<16x8xf32>
    %365 = vector.extract_strided_slice %300 {offsets = [0, 24], sizes = [16, 8], strides = [1, 1]} : vector<32x32xf32> to vector<16x8xf32>
    %366 = vector.extract_strided_slice %301 {offsets = [0, 24], sizes = [16, 8], strides = [1, 1]} : vector<32x32xf32> to vector<16x8xf32>
    %367 = vector.extract_strided_slice %302 {offsets = [0, 24], sizes = [16, 8], strides = [1, 1]} : vector<32x32xf32> to vector<16x8xf32>
    %368 = tpu.transpose %366, [1, 0] : vector<16x8xf32> -> vector<8x16xf32>
    %cst_131 = arith.constant dense<0.000000e+00> : vector<16x16xf32>
    %369 = tpu.matmul %365, %368, %cst_131 {dimension_numbers = #tpu.dot_dimension_numbers<[1], [0], [0], [1], [0, 0, 1, 1], [], []>} : vector<16x8xf32>, vector<8x16xf32>, vector<16x16xf32> -> vector<16x16xf32>
    %cst_132 = arith.constant 0.353553385 : f32
    %370 = vector.broadcast %cst_132 : f32 to vector<16x16xf32>
    %371 = arith.mulf %369, %370 : vector<16x16xf32>
    %372 = vector.broadcast %11 : vector<1x16xf32> to vector<16x16xf32>
    %373 = arith.addf %371, %372 : vector<16x16xf32>
    %cst_133 = arith.constant dense<0xFF800000> : vector<16xf32>
    %374 = vector.multi_reduction <maximumf>, %373, %cst_133 [1] : vector<16x16xf32> to vector<16xf32>
    %375 = vector.shape_cast %374 : vector<16xf32> to vector<16x1xf32>
    %376 = vector.broadcast %375 : vector<16x1xf32> to vector<16x16xf32>
    %377 = arith.subf %373, %376 : vector<16x16xf32>
    %378 = math.exp %377 : vector<16x16xf32>
    %cst_134 = arith.constant dense<0.000000e+00> : vector<16xf32>
    %379 = vector.multi_reduction <add>, %378, %cst_134 [1] : vector<16x16xf32> to vector<16xf32>
    %380 = vector.shape_cast %379 : vector<16xf32> to vector<16x1xf32>
    %381 = tpu.reciprocal %380 {approx = true} : vector<16x1xf32> -> vector<16x1xf32>
    %382 = vector.broadcast %381 : vector<16x1xf32> to vector<16x16xf32>
    %383 = arith.mulf %378, %382 : vector<16x16xf32>
    %384 = arith.addf %363, %383 : vector<16x16xf32>
    %cst_135 = arith.constant dense<0.000000e+00> : vector<16x8xf32>
    %385 = tpu.matmul %383, %367, %cst_135 {dimension_numbers = #tpu.dot_dimension_numbers<[1], [0], [0], [1], [0, 0, 1, 1], [], []>} : vector<16x16xf32>, vector<16x8xf32>, vector<16x8xf32> -> vector<16x8xf32>
    %386 = tpu.concatenate %322, %343, %364, %385 in 1 : vector<16x8xf32>, vector<16x8xf32>, vector<16x8xf32>, vector<16x8xf32> -> vector<16x32xf32>
    %cst_136 = arith.constant 2.500000e-01 : f32
    %387 = vector.broadcast %cst_136 : f32 to vector<16x16xf32>
    %388 = arith.mulf %384, %387 : vector<16x16xf32>
    %cst_137 = arith.constant 0.000000e+00 : f32
    %389 = vector.broadcast %cst_137 : f32 to vector<1x16xf32>
    %390 = arith.cmpf ogt, %1, %389 : vector<1x16xf32>
    %cst_138 = arith.constant -1.000000e+30 : f32
    %391 = vector.shape_cast %390 : vector<1x16xi1> to vector<1x16xi1>
    %392 = vector.broadcast %391 : vector<1x16xi1> to vector<16x16xi1>
    %393 = vector.broadcast %cst_138 : f32 to vector<16x16xf32>
    %394 = arith.select %392, %388, %393 : vector<16x16xi1>, vector<16x16xf32>
    %cst_139 = arith.constant dense<0xFF800000> : vector<16xf32>
    %395 = vector.multi_reduction <maximumf>, %394, %cst_139 [1] : vector<16x16xf32> to vector<16xf32>
    %396 = vector.shape_cast %395 : vector<16xf32> to vector<16x1xf32>
    %397 = vector.broadcast %396 : vector<16x1xf32> to vector<16x16xf32>
    %398 = arith.subf %394, %397 : vector<16x16xf32>
    %399 = math.exp %398 : vector<16x16xf32>
    %cst_140 = arith.constant dense<0.000000e+00> : vector<16xf32>
    %400 = vector.multi_reduction <add>, %399, %cst_140 [1] : vector<16x16xf32> to vector<16xf32>
    %401 = vector.shape_cast %400 : vector<16xf32> to vector<16x1xf32>
    %402 = vector.broadcast %401 : vector<16x1xf32> to vector<16x16xf32>
    %403 = arith.divf %399, %402 : vector<16x16xf32>
    %404 = vector.broadcast %396 : vector<16x1xf32> to vector<16x16xf32>
    %405 = arith.subf %394, %404 : vector<16x16xf32>
    %406 = math.log %401 : vector<16x1xf32>
    %407 = vector.broadcast %406 : vector<16x1xf32> to vector<16x16xf32>
    %408 = arith.subf %405, %407 : vector<16x16xf32>
    %cst_141 = arith.constant 0.000000e+00 : f32
    %409 = vector.broadcast %cst_141 : f32 to vector<16x16xf32>
    %410 = arith.cmpf ogt, %18, %409 : vector<16x16xf32>
    %411 = arith.mulf %403, %408 : vector<16x16xf32>
    %cst_142 = arith.constant 0.000000e+00 : f32
    %412 = vector.broadcast %cst_142 : f32 to vector<16x16xf32>
    %413 = arith.select %410, %411, %412 : vector<16x16xi1>, vector<16x16xf32>
    %cst_143 = arith.constant dense<0.000000e+00> : vector<16xf32>
    %414 = vector.multi_reduction <add>, %413, %cst_143 [1] : vector<16x16xf32> to vector<16xf32>
    %415 = vector.shape_cast %414 : vector<16xf32> to vector<16x1xf32>
    %cst_144 = arith.constant dense<0.000000e+00> : vector<1xf32>
    %416 = vector.multi_reduction <add>, %415, %cst_144 [0] : vector<16x1xf32> to vector<1xf32>
    %417 = vector.shape_cast %416 : vector<1xf32> to vector<1x1xf32>
    %418 = vector.broadcast %26 : f32 to vector<1x1xf32>
    %419 = arith.mulf %417, %418 : vector<1x1xf32>
    %420 = arith.addf %284, %419 : vector<1x1xf32>
    %421 = vector.extract_strided_slice %300 {offsets = [16, 0], sizes = [16, 8], strides = [1, 1]} : vector<32x32xf32> to vector<16x8xf32>
    %422 = vector.extract_strided_slice %301 {offsets = [16, 0], sizes = [16, 8], strides = [1, 1]} : vector<32x32xf32> to vector<16x8xf32>
    %423 = vector.extract_strided_slice %302 {offsets = [16, 0], sizes = [16, 8], strides = [1, 1]} : vector<32x32xf32> to vector<16x8xf32>
    %424 = tpu.transpose %422, [1, 0] : vector<16x8xf32> -> vector<8x16xf32>
    %cst_145 = arith.constant dense<0.000000e+00> : vector<16x16xf32>
    %425 = tpu.matmul %421, %424, %cst_145 {dimension_numbers = #tpu.dot_dimension_numbers<[1], [0], [0], [1], [0, 0, 1, 1], [], []>} : vector<16x8xf32>, vector<8x16xf32>, vector<16x16xf32> -> vector<16x16xf32>
    %cst_146 = arith.constant 0.353553385 : f32
    %426 = vector.broadcast %cst_146 : f32 to vector<16x16xf32>
    %427 = arith.mulf %425, %426 : vector<16x16xf32>
    %428 = vector.broadcast %15 : vector<1x16xf32> to vector<16x16xf32>
    %429 = arith.addf %427, %428 : vector<16x16xf32>
    %cst_147 = arith.constant dense<0xFF800000> : vector<16xf32>
    %430 = vector.multi_reduction <maximumf>, %429, %cst_147 [1] : vector<16x16xf32> to vector<16xf32>
    %431 = vector.shape_cast %430 : vector<16xf32> to vector<16x1xf32>
    %432 = vector.broadcast %431 : vector<16x1xf32> to vector<16x16xf32>
    %433 = arith.subf %429, %432 : vector<16x16xf32>
    %434 = math.exp %433 : vector<16x16xf32>
    %cst_148 = arith.constant dense<0.000000e+00> : vector<16xf32>
    %435 = vector.multi_reduction <add>, %434, %cst_148 [1] : vector<16x16xf32> to vector<16xf32>
    %436 = vector.shape_cast %435 : vector<16xf32> to vector<16x1xf32>
    %437 = tpu.reciprocal %436 {approx = true} : vector<16x1xf32> -> vector<16x1xf32>
    %438 = vector.broadcast %437 : vector<16x1xf32> to vector<16x16xf32>
    %439 = arith.mulf %434, %438 : vector<16x16xf32>
    %cst_149 = arith.constant dense<0.000000e+00> : vector<16x8xf32>
    %440 = tpu.matmul %439, %423, %cst_149 {dimension_numbers = #tpu.dot_dimension_numbers<[1], [0], [0], [1], [0, 0, 1, 1], [], []>} : vector<16x16xf32>, vector<16x8xf32>, vector<16x8xf32> -> vector<16x8xf32>
    %441 = vector.extract_strided_slice %300 {offsets = [16, 8], sizes = [16, 8], strides = [1, 1]} : vector<32x32xf32> to vector<16x8xf32>
    %442 = vector.extract_strided_slice %301 {offsets = [16, 8], sizes = [16, 8], strides = [1, 1]} : vector<32x32xf32> to vector<16x8xf32>
    %443 = vector.extract_strided_slice %302 {offsets = [16, 8], sizes = [16, 8], strides = [1, 1]} : vector<32x32xf32> to vector<16x8xf32>
    %444 = tpu.transpose %442, [1, 0] : vector<16x8xf32> -> vector<8x16xf32>
    %cst_150 = arith.constant dense<0.000000e+00> : vector<16x16xf32>
    %445 = tpu.matmul %441, %444, %cst_150 {dimension_numbers = #tpu.dot_dimension_numbers<[1], [0], [0], [1], [0, 0, 1, 1], [], []>} : vector<16x8xf32>, vector<8x16xf32>, vector<16x16xf32> -> vector<16x16xf32>
    %cst_151 = arith.constant 0.353553385 : f32
    %446 = vector.broadcast %cst_151 : f32 to vector<16x16xf32>
    %447 = arith.mulf %445, %446 : vector<16x16xf32>
    %448 = vector.broadcast %15 : vector<1x16xf32> to vector<16x16xf32>
    %449 = arith.addf %447, %448 : vector<16x16xf32>
    %cst_152 = arith.constant dense<0xFF800000> : vector<16xf32>
    %450 = vector.multi_reduction <maximumf>, %449, %cst_152 [1] : vector<16x16xf32> to vector<16xf32>
    %451 = vector.shape_cast %450 : vector<16xf32> to vector<16x1xf32>
    %452 = vector.broadcast %451 : vector<16x1xf32> to vector<16x16xf32>
    %453 = arith.subf %449, %452 : vector<16x16xf32>
    %454 = math.exp %453 : vector<16x16xf32>
    %cst_153 = arith.constant dense<0.000000e+00> : vector<16xf32>
    %455 = vector.multi_reduction <add>, %454, %cst_153 [1] : vector<16x16xf32> to vector<16xf32>
    %456 = vector.shape_cast %455 : vector<16xf32> to vector<16x1xf32>
    %457 = tpu.reciprocal %456 {approx = true} : vector<16x1xf32> -> vector<16x1xf32>
    %458 = vector.broadcast %457 : vector<16x1xf32> to vector<16x16xf32>
    %459 = arith.mulf %454, %458 : vector<16x16xf32>
    %460 = arith.addf %439, %459 : vector<16x16xf32>
    %cst_154 = arith.constant dense<0.000000e+00> : vector<16x8xf32>
    %461 = tpu.matmul %459, %443, %cst_154 {dimension_numbers = #tpu.dot_dimension_numbers<[1], [0], [0], [1], [0, 0, 1, 1], [], []>} : vector<16x16xf32>, vector<16x8xf32>, vector<16x8xf32> -> vector<16x8xf32>
    %462 = vector.extract_strided_slice %300 {offsets = [16, 16], sizes = [16, 8], strides = [1, 1]} : vector<32x32xf32> to vector<16x8xf32>
    %463 = vector.extract_strided_slice %301 {offsets = [16, 16], sizes = [16, 8], strides = [1, 1]} : vector<32x32xf32> to vector<16x8xf32>
    %464 = vector.extract_strided_slice %302 {offsets = [16, 16], sizes = [16, 8], strides = [1, 1]} : vector<32x32xf32> to vector<16x8xf32>
    %465 = tpu.transpose %463, [1, 0] : vector<16x8xf32> -> vector<8x16xf32>
    %cst_155 = arith.constant dense<0.000000e+00> : vector<16x16xf32>
    %466 = tpu.matmul %462, %465, %cst_155 {dimension_numbers = #tpu.dot_dimension_numbers<[1], [0], [0], [1], [0, 0, 1, 1], [], []>} : vector<16x8xf32>, vector<8x16xf32>, vector<16x16xf32> -> vector<16x16xf32>
    %cst_156 = arith.constant 0.353553385 : f32
    %467 = vector.broadcast %cst_156 : f32 to vector<16x16xf32>
    %468 = arith.mulf %466, %467 : vector<16x16xf32>
    %469 = vector.broadcast %15 : vector<1x16xf32> to vector<16x16xf32>
    %470 = arith.addf %468, %469 : vector<16x16xf32>
    %cst_157 = arith.constant dense<0xFF800000> : vector<16xf32>
    %471 = vector.multi_reduction <maximumf>, %470, %cst_157 [1] : vector<16x16xf32> to vector<16xf32>
    %472 = vector.shape_cast %471 : vector<16xf32> to vector<16x1xf32>
    %473 = vector.broadcast %472 : vector<16x1xf32> to vector<16x16xf32>
    %474 = arith.subf %470, %473 : vector<16x16xf32>
    %475 = math.exp %474 : vector<16x16xf32>
    %cst_158 = arith.constant dense<0.000000e+00> : vector<16xf32>
    %476 = vector.multi_reduction <add>, %475, %cst_158 [1] : vector<16x16xf32> to vector<16xf32>
    %477 = vector.shape_cast %476 : vector<16xf32> to vector<16x1xf32>
    %478 = tpu.reciprocal %477 {approx = true} : vector<16x1xf32> -> vector<16x1xf32>
    %479 = vector.broadcast %478 : vector<16x1xf32> to vector<16x16xf32>
    %480 = arith.mulf %475, %479 : vector<16x16xf32>
    %481 = arith.addf %460, %480 : vector<16x16xf32>
    %cst_159 = arith.constant dense<0.000000e+00> : vector<16x8xf32>
    %482 = tpu.matmul %480, %464, %cst_159 {dimension_numbers = #tpu.dot_dimension_numbers<[1], [0], [0], [1], [0, 0, 1, 1], [], []>} : vector<16x16xf32>, vector<16x8xf32>, vector<16x8xf32> -> vector<16x8xf32>
    %483 = vector.extract_strided_slice %300 {offsets = [16, 24], sizes = [16, 8], strides = [1, 1]} : vector<32x32xf32> to vector<16x8xf32>
    %484 = vector.extract_strided_slice %301 {offsets = [16, 24], sizes = [16, 8], strides = [1, 1]} : vector<32x32xf32> to vector<16x8xf32>
    %485 = vector.extract_strided_slice %302 {offsets = [16, 24], sizes = [16, 8], strides = [1, 1]} : vector<32x32xf32> to vector<16x8xf32>
    %486 = tpu.transpose %484, [1, 0] : vector<16x8xf32> -> vector<8x16xf32>
    %cst_160 = arith.constant dense<0.000000e+00> : vector<16x16xf32>
    %487 = tpu.matmul %483, %486, %cst_160 {dimension_numbers = #tpu.dot_dimension_numbers<[1], [0], [0], [1], [0, 0, 1, 1], [], []>} : vector<16x8xf32>, vector<8x16xf32>, vector<16x16xf32> -> vector<16x16xf32>
    %cst_161 = arith.constant 0.353553385 : f32
    %488 = vector.broadcast %cst_161 : f32 to vector<16x16xf32>
    %489 = arith.mulf %487, %488 : vector<16x16xf32>
    %490 = vector.broadcast %15 : vector<1x16xf32> to vector<16x16xf32>
    %491 = arith.addf %489, %490 : vector<16x16xf32>
    %cst_162 = arith.constant dense<0xFF800000> : vector<16xf32>
    %492 = vector.multi_reduction <maximumf>, %491, %cst_162 [1] : vector<16x16xf32> to vector<16xf32>
    %493 = vector.shape_cast %492 : vector<16xf32> to vector<16x1xf32>
    %494 = vector.broadcast %493 : vector<16x1xf32> to vector<16x16xf32>
    %495 = arith.subf %491, %494 : vector<16x16xf32>
    %496 = math.exp %495 : vector<16x16xf32>
    %cst_163 = arith.constant dense<0.000000e+00> : vector<16xf32>
    %497 = vector.multi_reduction <add>, %496, %cst_163 [1] : vector<16x16xf32> to vector<16xf32>
    %498 = vector.shape_cast %497 : vector<16xf32> to vector<16x1xf32>
    %499 = tpu.reciprocal %498 {approx = true} : vector<16x1xf32> -> vector<16x1xf32>
    %500 = vector.broadcast %499 : vector<16x1xf32> to vector<16x16xf32>
    %501 = arith.mulf %496, %500 : vector<16x16xf32>
    %502 = arith.addf %481, %501 : vector<16x16xf32>
    %cst_164 = arith.constant dense<0.000000e+00> : vector<16x8xf32>
    %503 = tpu.matmul %501, %485, %cst_164 {dimension_numbers = #tpu.dot_dimension_numbers<[1], [0], [0], [1], [0, 0, 1, 1], [], []>} : vector<16x16xf32>, vector<16x8xf32>, vector<16x8xf32> -> vector<16x8xf32>
    %504 = tpu.concatenate %440, %461, %482, %503 in 1 : vector<16x8xf32>, vector<16x8xf32>, vector<16x8xf32>, vector<16x8xf32> -> vector<16x32xf32>
    %cst_165 = arith.constant 2.500000e-01 : f32
    %505 = vector.broadcast %cst_165 : f32 to vector<16x16xf32>
    %506 = arith.mulf %502, %505 : vector<16x16xf32>
    %cst_166 = arith.constant 0.000000e+00 : f32
    %507 = vector.broadcast %cst_166 : f32 to vector<1x16xf32>
    %508 = arith.cmpf ogt, %3, %507 : vector<1x16xf32>
    %cst_167 = arith.constant -1.000000e+30 : f32
    %509 = vector.shape_cast %508 : vector<1x16xi1> to vector<1x16xi1>
    %510 = vector.broadcast %509 : vector<1x16xi1> to vector<16x16xi1>
    %511 = vector.broadcast %cst_167 : f32 to vector<16x16xf32>
    %512 = arith.select %510, %506, %511 : vector<16x16xi1>, vector<16x16xf32>
    %cst_168 = arith.constant dense<0xFF800000> : vector<16xf32>
    %513 = vector.multi_reduction <maximumf>, %512, %cst_168 [1] : vector<16x16xf32> to vector<16xf32>
    %514 = vector.shape_cast %513 : vector<16xf32> to vector<16x1xf32>
    %515 = vector.broadcast %514 : vector<16x1xf32> to vector<16x16xf32>
    %516 = arith.subf %512, %515 : vector<16x16xf32>
    %517 = math.exp %516 : vector<16x16xf32>
    %cst_169 = arith.constant dense<0.000000e+00> : vector<16xf32>
    %518 = vector.multi_reduction <add>, %517, %cst_169 [1] : vector<16x16xf32> to vector<16xf32>
    %519 = vector.shape_cast %518 : vector<16xf32> to vector<16x1xf32>
    %520 = vector.broadcast %519 : vector<16x1xf32> to vector<16x16xf32>
    %521 = arith.divf %517, %520 : vector<16x16xf32>
    %522 = vector.broadcast %514 : vector<16x1xf32> to vector<16x16xf32>
    %523 = arith.subf %512, %522 : vector<16x16xf32>
    %524 = math.log %519 : vector<16x1xf32>
    %525 = vector.broadcast %524 : vector<16x1xf32> to vector<16x16xf32>
    %526 = arith.subf %523, %525 : vector<16x16xf32>
    %cst_170 = arith.constant 0.000000e+00 : f32
    %527 = vector.broadcast %cst_170 : f32 to vector<16x16xf32>
    %528 = arith.cmpf ogt, %21, %527 : vector<16x16xf32>
    %529 = arith.mulf %521, %526 : vector<16x16xf32>
    %cst_171 = arith.constant 0.000000e+00 : f32
    %530 = vector.broadcast %cst_171 : f32 to vector<16x16xf32>
    %531 = arith.select %528, %529, %530 : vector<16x16xi1>, vector<16x16xf32>
    %cst_172 = arith.constant dense<0.000000e+00> : vector<16xf32>
    %532 = vector.multi_reduction <add>, %531, %cst_172 [1] : vector<16x16xf32> to vector<16xf32>
    %533 = vector.shape_cast %532 : vector<16xf32> to vector<16x1xf32>
    %cst_173 = arith.constant dense<0.000000e+00> : vector<1xf32>
    %534 = vector.multi_reduction <add>, %533, %cst_173 [0] : vector<16x1xf32> to vector<1xf32>
    %535 = vector.shape_cast %534 : vector<1xf32> to vector<1x1xf32>
    %536 = vector.broadcast %31 : f32 to vector<1x1xf32>
    %537 = arith.mulf %535, %536 : vector<1x1xf32>
    %538 = arith.addf %420, %537 : vector<1x1xf32>
    %539 = tpu.concatenate %386, %504 in 0 : vector<16x32xf32>, vector<16x32xf32> -> vector<32x32xf32>
    %cst_174 = arith.constant dense<0.000000e+00> : vector<32x32xf32>
    %540 = tpu.matmul %539, %299, %cst_174 {dimension_numbers = #tpu.dot_dimension_numbers<[1], [0], [0], [1], [0, 0, 1, 1], [], []>} : vector<32x32xf32>, vector<32x32xf32>, vector<32x32xf32> -> vector<32x32xf32>
    %541 = arith.addf %287, %540 : vector<32x32xf32>
    %542 = tpu.concatenate %321, %341, %362, %383, %439, %459, %480, %501 in 1 : vector<16x16xf32>, vector<16x16xf32>, vector<16x16xf32>, vector<16x16xf32>, vector<16x16xf32>, vector<16x16xf32>, vector<16x16xf32>, vector<16x16xf32> -> vector<16x128xf32>
    %c1_175 = arith.constant 1 : index
    %c0_176 = arith.constant 0 : index
    %c0_177 = arith.constant 0 : index
    %543 = vector.load %arg10[%c1_175, %c0_176, %c0_177] : memref<2x16x128xf32, #tpu.memory_space<vmem>>, vector<1x16x128xf32>
    %544 = vector.shape_cast %543 : vector<1x16x128xf32> to vector<16x128xf32>
    %545 = vector.shape_cast %542 : vector<16x128xf32> to vector<1x16x128xf32>
    tpu.vector_store %arg10[%c1_175, %c0_176, %c0_177], %545 {strides = array<i32>} : memref<2x16x128xf32, #tpu.memory_space<vmem>>, vector<1x16x128xf32>,
    %cst_178 = arith.constant 5.000000e-01 : f32
    %546 = vector.broadcast %cst_178 : f32 to vector<1x1xf32>
    %547 = arith.mulf %538, %546 : vector<1x1xf32>
    %c0_179 = arith.constant 0 : index
    %c0_180 = arith.constant 0 : index
    %548 = vector.load %arg11[%c0_179, %c0_180] : memref<1x1xf32, #tpu.memory_space<vmem>>, vector<1x1xf32>
    tpu.vector_store %arg11[%c0_179, %c0_180], %547 {strides = array<i32>} : memref<1x1xf32, #tpu.memory_space<vmem>>, vector<1x1xf32>,
    %549 = vector.extract_strided_slice %541 {offsets = [0, 0], sizes = [1, 32], strides = [1, 1]} : vector<32x32xf32> to vector<1x32xf32>
    %550 = vector.extract_strided_slice %541 {offsets = [16, 0], sizes = [1, 32], strides = [1, 1]} : vector<32x32xf32> to vector<1x32xf32>
    %551 = tpu.concatenate %549, %550 in 0 : vector<1x32xf32>, vector<1x32xf32> -> vector<2x32xf32>
    %c0_181 = arith.constant 0 : index
    %c0_182 = arith.constant 0 : index
    %552 = vector.load %arg7[%c0_181, %c0_182] : memref<32x2xf32, #tpu.memory_space<vmem>>, vector<32x2xf32>
    %cst_183 = arith.constant dense<0.000000e+00> : vector<2x2xf32>
    %553 = tpu.matmul %551, %552, %cst_183 {dimension_numbers = #tpu.dot_dimension_numbers<[1], [0], [0], [1], [0, 0, 1, 1], [], []>} : vector<2x32xf32>, vector<32x2xf32>, vector<2x2xf32> -> vector<2x2xf32>
    %c0_184 = arith.constant 0 : index
    %c0_185 = arith.constant 0 : index
    %554 = vector.load %arg8[%c0_184, %c0_185] : memref<1x2xf32, #tpu.memory_space<vmem>>, vector<1x2xf32>
    %555 = vector.broadcast %554 : vector<1x2xf32> to vector<2x2xf32>
    %556 = arith.addf %553, %555 : vector<2x2xf32>
    %c0_186 = arith.constant 0 : index
    %c0_187 = arith.constant 0 : index
    %557 = vector.load %arg9[%c0_186, %c0_187] : memref<2x2xf32, #tpu.memory_space<vmem>>, vector<2x2xf32>
    tpu.vector_store %arg9[%c0_186, %c0_187], %556 {strides = array<i32>} : memref<2x2xf32, #tpu.memory_space<vmem>>, vector<2x2xf32>,
    return
  }
}

</mosaic_0001>

<llo_original>
// kernel: tpu_custom_call.1
$region0: #{tpu_custom_call.1}
  #allocation0 [shape = 'u32[]', space=smem, size = 0x4, offset = 0x4, fixed_abs, tag = 'smem constant byte address 0x4 - core index']
  #allocation1 [shape = 'u32[72,128]{1,0:T(1,128)}', space=vmem, size = 0x9000, scoped, tag = 'internal scratch']
  %s0 = inlined_call_operand.hbm [shape: f32[2,16,32], index: 0, kind: input, shape index: {}]
  %s1 = inlined_call_operand.vmem [shape: f32[2,1,16], index: 1, kind: input, shape index: {}]
  %s2 = inlined_call_operand.vmem [shape: f32[2,16,1], index: 2, kind: input, shape index: {}]
  %s3 = inlined_call_operand.vmem [shape: f32[2,32,32], index: 3, kind: input, shape index: {}]
  %s4 = inlined_call_operand.hbm [shape: f32[2,32,32], index: 4, kind: input, shape index: {}]
  %s5 = inlined_call_operand.hbm [shape: f32[2,32,32], index: 5, kind: input, shape index: {}]
  %s6 = inlined_call_operand.hbm [shape: f32[2,32,32], index: 6, kind: input, shape index: {}]
  %s7 = inlined_call_operand.vmem [shape: f32[32,2], index: 7, kind: input, shape index: {}]
  %s8 = inlined_call_operand.vmem [shape: f32[1,2], index: 8, kind: input, shape index: {}]
  %s9 = inlined_call_operand.hbm [shape: f32[2,2], index: 9, kind: output, shape index: {0}]
  %s10 = inlined_call_operand.hbm [shape: f32[2,16,128], index: 10, kind: output, shape index: {1}]
  %s11 = inlined_call_operand.hbm [shape: f32[1,1], index: 11, kind: output, shape index: {2}]
  %12 = xla_tuple %s9, %s10, %s11
  %s13 = sld [smem:[#allocation0]]
  $region78: #{tpu_custom_call.1} parent=0
    _
  %s15 = ssub.s32 1, %s13
  %s16 = scalar_select 0, %s15, %s13
  $region1: #{tpu_custom_call.1} parent=0
    #allocation2 [shape = 'u8[16384]{0}', space=vmem, size = 0x4000, scoped, tag = 'input window, operand 0, single buffered']
    #allocation3 [shape = 's32[1]{0}', space=sflag, size = 0x4, scoped, tag = 'scoped memory for tpu_custom_call.1']
    #allocation4 [shape = 's32[1]{0}', space=sflag, size = 0x4, scoped, tag = 'scoped memory for tpu_custom_call.1']
    #allocation5 [shape = 'u8[32768]{0}', space=vmem, size = 0x8000, scoped, tag = 'input window, operand 4, single buffered']
    #allocation6 [shape = 's32[1]{0}', space=sflag, size = 0x4, scoped, tag = 'scoped memory for tpu_custom_call.1']
    #allocation7 [shape = 'u8[32768]{0}', space=vmem, size = 0x8000, scoped, tag = 'input window, operand 5, single buffered']
    #allocation8 [shape = 'u8[32768]{0}', space=vmem, size = 0x8000, scoped, tag = 'input window, operand 6, single buffered']
    #allocation9 [shape = 's32[1]{0}', space=sflag, size = 0x4, scoped, tag = 'scoped memory for tpu_custom_call.1']
    #allocation10 [shape = 'u8[1024]{0}', space=vmem, size = 0x400, scoped, tag = 'output window, operand 0, single buffered']
    #allocation11 [shape = 'u8[16384]{0}', space=vmem, size = 0x4000, scoped, tag = 'output window, operand 1, single buffered']
    #allocation12 [shape = 's32[1]{0}', space=sflag, size = 0x4, scoped, tag = 'scoped memory for tpu_custom_call.1']
    #allocation13 [shape = 'u8[512]{0}', space=vmem, size = 0x400, scoped, tag = 'output window, operand 2, single buffered']
    %17 = vsyncpa [#allocation3], 0
    %18 = vsyncpa [#allocation6], 0
    %19 = vsyncpa [#allocation9], 0
    %20 = vsyncpa [#allocation4], 0
    %21 = vsyncpa [#allocation12], 0
    // Predicated region
    $region2: #{tpu_custom_call.1} parent=1 // pred_check
      _
    $region3: #{tpu_custom_call.1} parent=1 // pred_check_branch
      %23 = sbr.rel (0) target = $region5
    $region4: #{tpu_custom_call.1} parent=1 // pred_region
      %25 = vsyncadd [#allocation3], 0
      %s26 = sshll.u32 %s0, 4
      %s27 = int_to_ptr.hbm [resolvable:$true] %s26
      %s28 = sshll.u32 [#allocation2], 4
      %s29 = int_to_ptr.vmem [resolvable:$true] %s28
      %34 = dma.hbm_to_vmem [thread:$0]  %s27, 512, %s29, [#allocation3], 128, 128, 8
    $region5: #{tpu_custom_call.1} parent=1 // pred_fallthru
      _
    // Predicated region
    $region6: #{tpu_custom_call.1} parent=1 // pred_check
      _
    $region7: #{tpu_custom_call.1} parent=1 // pred_check_branch
      %36 = sbr.rel (0) target = $region9
    $region8: #{tpu_custom_call.1} parent=1 // pred_region
      _
    $region9: #{tpu_custom_call.1} parent=1 // pred_fallthru
      _
    // Predicated region
    $region10: #{tpu_custom_call.1} parent=1 // pred_check
      _
    $region11: #{tpu_custom_call.1} parent=1 // pred_check_branch
      %38 = sbr.rel (0) target = $region13
    $region12: #{tpu_custom_call.1} parent=1 // pred_region
      _
    $region13: #{tpu_custom_call.1} parent=1 // pred_fallthru
      _
    // Predicated region
    $region14: #{tpu_custom_call.1} parent=1 // pred_check
      _
    $region15: #{tpu_custom_call.1} parent=1 // pred_check_branch
      %40 = sbr.rel (0) target = $region17
    $region16: #{tpu_custom_call.1} parent=1 // pred_region
      _
    $region17: #{tpu_custom_call.1} parent=1 // pred_fallthru
      _
    // Predicated region
    $region18: #{tpu_custom_call.1} parent=1 // pred_check
      _
    $region19: #{tpu_custom_call.1} parent=1 // pred_check_branch
      %42 = sbr.rel (0) target = $region21
    $region20: #{tpu_custom_call.1} parent=1 // pred_region
      %44 = vsyncadd [#allocation6], 0
      %s45 = sshll.u32 %s4, 4
      %s46 = int_to_ptr.hbm [resolvable:$true] %s45
      %s47 = sshll.u32 [#allocation5], 4
      %s48 = int_to_ptr.vmem [resolvable:$true] %s47
      %53 = dma.hbm_to_vmem [thread:$0]  %s46, 1024, %s48, [#allocation6], 128, 128, 8
    $region21: #{tpu_custom_call.1} parent=1 // pred_fallthru
      _
    // Predicated region
    $region22: #{tpu_custom_call.1} parent=1 // pred_check
      _
    $region23: #{tpu_custom_call.1} parent=1 // pred_check_branch
      %55 = sbr.rel (0) target = $region25
    $region24: #{tpu_custom_call.1} parent=1 // pred_region
      %57 = vsyncadd [#allocation6], 0
      %s58 = sshll.u32 %s5, 4
      %s59 = int_to_ptr.hbm [resolvable:$true] %s58
      %s60 = sshll.u32 [#allocation7], 4
      %s61 = int_to_ptr.vmem [resolvable:$true] %s60
      %66 = dma.hbm_to_vmem [thread:$0]  %s59, 1024, %s61, [#allocation6], 128, 128, 8
    $region25: #{tpu_custom_call.1} parent=1 // pred_fallthru
      _
    // Predicated region
    $region26: #{tpu_custom_call.1} parent=1 // pred_check
      _
    $region27: #{tpu_custom_call.1} parent=1 // pred_check_branch
      %68 = sbr.rel (0) target = $region29
    $region28: #{tpu_custom_call.1} parent=1 // pred_region
      %70 = vsyncadd [#allocation9], 0
      %s71 = sshll.u32 %s6, 4
      %s72 = int_to_ptr.hbm [resolvable:$true] %s71
      %s73 = sshll.u32 [#allocation8], 4
      %s74 = int_to_ptr.vmem [resolvable:$true] %s73
      %79 = dma.hbm_to_vmem [thread:$0]  %s72, 1024, %s74, [#allocation9], 128, 128, 8
    $region29: #{tpu_custom_call.1} parent=1 // pred_fallthru
      _
    // Predicated region
    $region30: #{tpu_custom_call.1} parent=1 // pred_check
      _
    $region31: #{tpu_custom_call.1} parent=1 // pred_check_branch
      %81 = sbr.rel (0) target = $region33
    $region32: #{tpu_custom_call.1} parent=1 // pred_region
      _
    $region33: #{tpu_custom_call.1} parent=1 // pred_fallthru
      _
    // Predicated region
    $region34: #{tpu_custom_call.1} parent=1 // pred_check
      _
    $region35: #{tpu_custom_call.1} parent=1 // pred_check_branch
      %83 = sbr.rel (0) target = $region37
    $region36: #{tpu_custom_call.1} parent=1 // pred_region
      _
    $region37: #{tpu_custom_call.1} parent=1 // pred_fallthru
      _
    // Predicated region
    $region38: #{tpu_custom_call.1} parent=1 // pred_check
      _
    $region39: #{tpu_custom_call.1} parent=1 // pred_check_branch
      %85 = sbr.rel (0) target = $region41
    $region40: #{tpu_custom_call.1} parent=1 // pred_region
      %87 = dma.done [#allocation3], 512
    $region41: #{tpu_custom_call.1} parent=1 // pred_fallthru
      _
    // Predicated region
    $region42: #{tpu_custom_call.1} parent=1 // pred_check
      _
    $region43: #{tpu_custom_call.1} parent=1 // pred_check_branch
      %89 = sbr.rel (0) target = $region45
    $region44: #{tpu_custom_call.1} parent=1 // pred_region
      %91 = dma.done [#allocation6], 1024
    $region45: #{tpu_custom_call.1} parent=1 // pred_fallthru
      _
    // Predicated region
    $region46: #{tpu_custom_call.1} parent=1 // pred_check
      _
    $region47: #{tpu_custom_call.1} parent=1 // pred_check_branch
      %93 = sbr.rel (0) target = $region49
    $region48: #{tpu_custom_call.1} parent=1 // pred_region
      %95 = dma.done [#allocation6], 1024
    $region49: #{tpu_custom_call.1} parent=1 // pred_fallthru
      _
    // Predicated region
    $region50: #{tpu_custom_call.1} parent=1 // pred_check
      _
    $region51: #{tpu_custom_call.1} parent=1 // pred_check_branch
      %97 = sbr.rel (0) target = $region53
    $region52: #{tpu_custom_call.1} parent=1 // pred_region
      %99 = dma.done [#allocation9], 1024
    $region53: #{tpu_custom_call.1} parent=1 // pred_fallthru
      _
    %v100 = vld [vmem:[%s1] sm:$0x1]
    %s101 = scalar_lea.vmem %s1, 1
    %v102 = vld [vmem:[%s101] sm:$0x1]
    %v103 = vld [vmem:[%s2] sm:$0xff]
    %v104 = vld [vmem:[%s2 + $0x8] sm:$0xff]
    %s105 = scalar_lea.vmem %s2, 16
    %v106 = vld [vmem:[%s105] sm:$0xff]
    %v107 = vld [vmem:[%s105 + $0x8] sm:$0xff]
    %v108 = vsub.f32 1.0, %v100
    %v109 = vmul.f32 %v108, -1e+09
    %v110 = vsub.f32 1.0, %v102
    %v111 = vmul.f32 %v110, -1e+09
    %113 = vset.pattern.permute.xlu0 0
    %114 = vperm.xlu0 %113, %v103
    %v115 = vpop.permute.xlu0 %114
    %118 = vset.pattern.permute.xlu0 0
    %119 = vperm.xlu0 %118, %v104
    %v120 = vpop.permute.xlu0 %119
    %v123 = vperm.slane %v100, 0
    %v125 = vmul.f32 %v115, %v123
    %v126 = vmul.f32 %v120, %v123
    %128 = vset.pattern.permute.xlu0 0
    %129 = vperm.xlu0 %128, %v106
    %v130 = vpop.permute.xlu0 %129
    %133 = vset.pattern.permute.xlu0 0
    %134 = vperm.xlu0 %133, %v107
    %v135 = vpop.permute.xlu0 %134
    %v138 = vperm.slane %v102, 0
    %v140 = vmul.f32 %v130, %v138
    %v141 = vmul.f32 %v135, %v138
    %vm142 = vcmask 122880
    %v143 = vsel %vm142, %v100, 0.0
    %144 = vadd.xlane.f32.xlu0 %v143
    %v145 = vpop.xlane.xlu0 %144
    %v146 = vrot.slane %v145, 4
    %v147 = vadd.f32 %v145, %v146
    %v148 = vrot.slane %v147, 2
    %v149 = vadd.f32 %v147, %v148
    %v150 = vrot.slane %v149, 1
    %v151 = vadd.f32 %v149, %v150
    %s152 = vtos %v151
    %v153 = vstv %s152
    %v154 = vrcp.pop %v153
    %v155 = vmul.f32 %v153, %v154
    %v156 = vsub.f32 1.0, %v155
    %v157 = vmul.f32 %v154, %v156
    %v158 = vadd.f32 %v154, %v157
    %vm159 = vweird.f32 %v153
    %vm160 = vweird.f32 %v154
    %vm161 = vmor %vm159, %vm160
    %v162 = vsel %vm161, %v154, %v158
    %v163 = vand.u32 2147483647, %v153
    %vm164 = vcmp.eq.f32.partialorder %v163, 8.507059e+37
    %v165 = vand.u32 %v153, 2147483648
    %v166 = vor.u32 1.1754944e-38, %v165
    %v167 = vsel %vm164, %v166, %v162
    %s168 = vtos %v167
    %v169 = vsel %vm142, %v102, 0.0
    %170 = vadd.xlane.f32.xlu0 %v169
    %v171 = vpop.xlane.xlu0 %170
    %v172 = vrot.slane %v171, 4
    %v173 = vadd.f32 %v171, %v172
    %v174 = vrot.slane %v173, 2
    %v175 = vadd.f32 %v173, %v174
    %v176 = vrot.slane %v175, 1
    %v177 = vadd.f32 %v175, %v176
    %s178 = vtos %v177
    %v179 = vstv %s178
    %v180 = vrcp.pop %v179
    %v181 = vmul.f32 %v179, %v180
    %v182 = vsub.f32 1.0, %v181
    %v183 = vmul.f32 %v180, %v182
    %v184 = vadd.f32 %v180, %v183
    %vm185 = vweird.f32 %v179
    %vm186 = vweird.f32 %v180
    %vm187 = vmor %vm185, %vm186
    %v188 = vsel %vm187, %v180, %v184
    %v189 = vand.u32 2147483647, %v179
    %vm190 = vcmp.eq.f32.partialorder %v189, 8.507059e+37
    %v191 = vand.u32 %v179, 2147483648
    %v192 = vor.u32 1.1754944e-38, %v191
    %v193 = vsel %vm190, %v192, %v188
    %s194 = vtos %v193
    %v195 = vld [vmem:[#allocation2] sm:$0xff]
    %v196 = vld [vmem:[#allocation2 + $0x8] sm:$0xff]
    %s197 = scalar_lea.vmem [#allocation2], 16
    %v198 = vld [vmem:[%s197] sm:$0xff]
    %v199 = vld [vmem:[%s197 + $0x8] sm:$0xff]
    %v200 = vld [vmem:[%s3] sm:$0xff]
    %v201 = vld [vmem:[%s3 + $0x8] sm:$0xff]
    %v202 = vld [vmem:[%s3 + $0x10] sm:$0xff]
    %v203 = vld [vmem:[%s3 + $0x18] sm:$0xff]
    %v204 = vld [vmem:[#allocation5] sm:$0xff]
    %v205 = vld [vmem:[#allocation5 + $0x8] sm:$0xff]
    %v206 = vld [vmem:[#allocation5 + $0x10] sm:$0xff]
    %v207 = vld [vmem:[#allocation5 + $0x18] sm:$0xff]
    %v208 = vld [vmem:[#allocation7] sm:$0xff]
    %v209 = vld [vmem:[#allocation7 + $0x8] sm:$0xff]
    %v210 = vld [vmem:[#allocation7 + $0x10] sm:$0xff]
    %v211 = vld [vmem:[#allocation7 + $0x18] sm:$0xff]
    %v212 = vld [vmem:[#allocation8] sm:$0xff]
    %v213 = vld [vmem:[#allocation8 + $0x8] sm:$0xff]
    %v214 = vld [vmem:[#allocation8 + $0x10] sm:$0xff]
    %v215 = vld [vmem:[#allocation8 + $0x18] sm:$0xff]
    %vm216 = vcmask 261120
    %v218 = vsel %vm216, %v195, 0
    %v221 = vsel %vm216, %v196, 0
    %v224 = vsel %vm216, %v198, 0
    %v227 = vsel %vm216, %v199, 0
    %229 = vmatpush.msra.mxu0 0.0
    %230 = vmatpush.msra.mxu0 0.0
    %231 = vmatpush.msra.mxu0 0.0
    %232 = vmatpush.msra.mxu0 0.0
    %233 = vmatpush.msra.mxu0 0.0
    %234 = vmatpush.msra.mxu0 0.0
    %235 = vmatpush.msra.mxu0 0.0
    %236 = vmatpush.msra.mxu0 0.0
    %237 = vmatpush.msra.mxu0 0.0
    %238 = vmatpush.msra.mxu0 0.0
    %239 = vmatpush.msra.mxu0 0.0
    %240 = vmatpush.msra.mxu0 0.0
    %241 = vmatpush.msra.mxu0 %v203
    %242 = vmatpush.msra.mxu0 %v202
    %243 = vmatpush.msra.mxu0 %v201
    %244 = vmatpush.msra.mxu0 %v200
    %245 = vmatmul.f32.gmra.mxu0 %v218
    %v246 = vpop.f32.mrf.mxu0
    %v247 = vadd.f32 0.0, %v246
    %248 = vmatmul.f32.gmra.mxu0 %v221
    %v249 = vpop.f32.mrf.mxu0
    %v250 = vadd.f32 0.0, %v249
    %251 = vmatmul.f32.gmra.mxu0 %v224
    %v252 = vpop.f32.mrf.mxu0
    %v253 = vadd.f32 0.0, %v252
    %254 = vmatmul.f32.gmra.mxu0 %v227
    %v255 = vpop.f32.mrf.mxu0
    %v256 = vadd.f32 0.0, %v255
    %257 = vdwg.mxu0
    %258 = vmatpush.msra.mxu0 0.0
    %259 = vmatpush.msra.mxu0 0.0
    %260 = vmatpush.msra.mxu0 0.0
    %261 = vmatpush.msra.mxu0 0.0
    %262 = vmatpush.msra.mxu0 0.0
    %263 = vmatpush.msra.mxu0 0.0
    %264 = vmatpush.msra.mxu0 0.0
    %265 = vmatpush.msra.mxu0 0.0
    %266 = vmatpush.msra.mxu0 0.0
    %267 = vmatpush.msra.mxu0 0.0
    %268 = vmatpush.msra.mxu0 0.0
    %269 = vmatpush.msra.mxu0 0.0
    %270 = vmatpush.msra.mxu0 %v207
    %271 = vmatpush.msra.mxu0 %v206
    %272 = vmatpush.msra.mxu0 %v205
    %273 = vmatpush.msra.mxu0 %v204
    %274 = vmatmul.f32.gmra.mxu0 %v218
    %v275 = vpop.f32.mrf.mxu0
    %v276 = vadd.f32 0.0, %v275
    %277 = vmatmul.f32.gmra.mxu0 %v221
    %v278 = vpop.f32.mrf.mxu0
    %v279 = vadd.f32 0.0, %v278
    %280 = vmatmul.f32.gmra.mxu0 %v224
    %v281 = vpop.f32.mrf.mxu0
    %v282 = vadd.f32 0.0, %v281
    %283 = vmatmul.f32.gmra.mxu0 %v227
    %v284 = vpop.f32.mrf.mxu0
    %v285 = vadd.f32 0.0, %v284
    %286 = vdwg.mxu0
    %287 = vmatpush.msra.mxu0 0.0
    %288 = vmatpush.msra.mxu0 0.0
    %289 = vmatpush.msra.mxu0 0.0
    %290 = vmatpush.msra.mxu0 0.0
    %291 = vmatpush.msra.mxu0 0.0
    %292 = vmatpush.msra.mxu0 0.0
    %293 = vmatpush.msra.mxu0 0.0
    %294 = vmatpush.msra.mxu0 0.0
    %295 = vmatpush.msra.mxu0 0.0
    %296 = vmatpush.msra.mxu0 0.0
    %297 = vmatpush.msra.mxu0 0.0
    %298 = vmatpush.msra.mxu0 0.0
    %299 = vmatpush.msra.mxu0 %v211
    %300 = vmatpush.msra.mxu0 %v210
    %301 = vmatpush.msra.mxu0 %v209
    %302 = vmatpush.msra.mxu0 %v208
    %303 = vmatmul.f32.gmra.mxu0 %v218
    %v304 = vpop.f32.mrf.mxu0
    %v305 = vadd.f32 0.0, %v304
    %306 = vmatmul.f32.gmra.mxu0 %v221
    %v307 = vpop.f32.mrf.mxu0
    %v308 = vadd.f32 0.0, %v307
    %309 = vmatmul.f32.gmra.mxu0 %v224
    %v310 = vpop.f32.mrf.mxu0
    %v311 = vadd.f32 0.0, %v310
    %312 = vmatmul.f32.gmra.mxu0 %v227
    %v313 = vpop.f32.mrf.mxu0
    %v314 = vadd.f32 0.0, %v313
    %315 = vdwg.mxu0
    %vm316 = vcmask 64512
    %v318 = vsel %vm316, %v247, 0
    %v321 = vsel %vm316, %v250, 0
    %v324 = vsel %vm316, %v276, 0
    %v327 = vsel %vm316, %v279, 0
    %329 = vmatpush.xpose.msra.mxu0 0.0
    %330 = vmatpush.xpose.msra.mxu0 0.0
    %331 = vmatpush.xpose.msra.mxu0 0.0
    %332 = vmatpush.xpose.msra.mxu0 0.0
    %333 = vmatpush.xpose.msra.mxu0 0.0
    %334 = vmatpush.xpose.msra.mxu0 0.0
    %335 = vmatpush.xpose.msra.mxu0 0.0
    %336 = vmatpush.xpose.msra.mxu0 0.0
    %337 = vmatpush.xpose.msra.mxu0 0.0
    %338 = vmatpush.xpose.msra.mxu0 0.0
    %339 = vmatpush.xpose.msra.mxu0 0.0
    %340 = vmatpush.xpose.msra.mxu0 0.0
    %341 = vmatpush.xpose.msra.mxu0 0.0
    %342 = vmatpush.xpose.msra.mxu0 0.0
    %343 = vmatpush.xpose.msra.mxu0 %v327
    %344 = vmatpush.xpose.msra.mxu0 %v324
    %345 = vmatmul.f32.gmra.mxu0 %v318
    %v346 = vpop.f32.mrf.mxu0
    %v347 = vadd.f32 0.0, %v346
    %348 = vmatmul.f32.gmra.mxu0 %v321
    %v349 = vpop.f32.mrf.mxu0
    %v350 = vadd.f32 0.0, %v349
    %351 = vdwg.mxu0
    %v352 = vmul.f32 %v347, 0.35355338
    %v353 = vmul.f32 %v350, 0.35355338
    %v355 = vperm.slane %v109, 0
    %v357 = vadd.f32 %v352, %v355
    %v358 = vadd.f32 %v353, %v355
    %vm359 = vcmask 130048
    %v360 = vsel %vm359, %v357, -inf
    %361 = vmax.xlane.f32.xlu0 %v360
    %v362 = vpop.xlane.xlu0 %361
    %v363 = vsel %vm359, %v358, -inf
    %364 = vmax.xlane.f32.xlu0 %v363
    %v365 = vpop.xlane.xlu0 %364
    %v366 = vsub.f32 %v357, %v362
    %v367 = vsub.f32 %v358, %v365
    %v368 = vmul.f32 %v366, 1.442695
    %v369 = vpow.pop %v368
    %v370 = vmul.f32 %v367, 1.442695
    %v371 = vpow.pop %v370
    %v372 = vsel %vm359, %v369, 0.0
    %373 = vadd.xlane.f32.xlu0 %v372
    %v374 = vpop.xlane.xlu0 %373
    %v375 = vsel %vm359, %v371, 0.0
    %376 = vadd.xlane.f32.xlu0 %v375
    %v377 = vpop.xlane.xlu0 %376
    %v378 = vrcp.pop %v374
    %v379 = vrcp.pop %v377
    %v380 = vmul.f32 %v369, %v378
    %v381 = vmul.f32 %v371, %v379
    %v383 = vsel %vm359, %v380, 0
    %v386 = vsel %vm359, %v381, 0
    %388 = vmatpush.msra.mxu0 0.0
    %389 = vmatpush.msra.mxu0 0.0
    %390 = vmatpush.msra.mxu0 0.0
    %391 = vmatpush.msra.mxu0 0.0
    %392 = vmatpush.msra.mxu0 0.0
    %393 = vmatpush.msra.mxu0 0.0
    %394 = vmatpush.msra.mxu0 0.0
    %395 = vmatpush.msra.mxu0 0.0
    %396 = vmatpush.msra.mxu0 0.0
    %397 = vmatpush.msra.mxu0 0.0
    %398 = vmatpush.msra.mxu0 0.0
    %399 = vmatpush.msra.mxu0 0.0
    %400 = vmatpush.msra.mxu0 0.0
    %401 = vmatpush.msra.mxu0 0.0
    %402 = vmatpush.msra.mxu0 %v308
    %403 = vmatpush.msra.mxu0 %v305
    %404 = vmatmul.f32.gmra.mxu0 %v383
    %v405 = vpop.f32.mrf.mxu0
    %v406 = vadd.f32 0.0, %v405
    %407 = vmatmul.f32.gmra.mxu0 %v386
    %v408 = vpop.f32.mrf.mxu0
    %v409 = vadd.f32 0.0, %v408
    %410 = vdwg.mxu0
    %411 = vrot.lane.b32.xlu0 %v247, 120
    %v412 = vpop.permute.xlu0 %411
    %413 = vrot.lane.b32.xlu0 %v250, 120
    %v414 = vpop.permute.xlu0 %413
    %415 = vrot.lane.b32.xlu0 %v276, 120
    %v416 = vpop.permute.xlu0 %415
    %417 = vrot.lane.b32.xlu0 %v279, 120
    %v418 = vpop.permute.xlu0 %417
    %v419 = vsel %vm316, %v412, 0
    %v421 = vsel %vm316, %v414, 0
    %v423 = vsel %vm316, %v416, 0
    %v425 = vsel %vm316, %v418, 0
    %427 = vmatpush.xpose.msra.mxu0 0.0
    %428 = vmatpush.xpose.msra.mxu0 0.0
    %429 = vmatpush.xpose.msra.mxu0 0.0
    %430 = vmatpush.xpose.msra.mxu0 0.0
    %431 = vmatpush.xpose.msra.mxu0 0.0
    %432 = vmatpush.xpose.msra.mxu0 0.0
    %433 = vmatpush.xpose.msra.mxu0 0.0
    %434 = vmatpush.xpose.msra.mxu0 0.0
    %435 = vmatpush.xpose.msra.mxu0 0.0
    %436 = vmatpush.xpose.msra.mxu0 0.0
    %437 = vmatpush.xpose.msra.mxu0 0.0
    %438 = vmatpush.xpose.msra.mxu0 0.0
    %439 = vmatpush.xpose.msra.mxu0 0.0
    %440 = vmatpush.xpose.msra.mxu0 0.0
    %441 = vmatpush.xpose.msra.mxu0 %v425
    %442 = vmatpush.xpose.msra.mxu0 %v423
    %443 = vmatmul.f32.gmra.mxu0 %v419
    %v444 = vpop.f32.mrf.mxu0
    %v445 = vadd.f32 0.0, %v444
    %446 = vmatmul.f32.gmra.mxu0 %v421
    %v447 = vpop.f32.mrf.mxu0
    %v448 = vadd.f32 0.0, %v447
    %449 = vdwg.mxu0
    %v450 = vmul.f32 %v445, 0.35355338
    %v451 = vmul.f32 %v448, 0.35355338
    %v452 = vadd.f32 %v450, %v355
    %v453 = vadd.f32 %v451, %v355
    %v454 = vsel %vm359, %v452, -inf
    %455 = vmax.xlane.f32.xlu0 %v454
    %v456 = vpop.xlane.xlu0 %455
    %v457 = vsel %vm359, %v453, -inf
    %458 = vmax.xlane.f32.xlu0 %v457
    %v459 = vpop.xlane.xlu0 %458
    %v460 = vsub.f32 %v452, %v456
    %v461 = vsub.f32 %v453, %v459
    %v462 = vmul.f32 %v460, 1.442695
    %v463 = vpow.pop %v462
    %v464 = vmul.f32 %v461, 1.442695
    %v465 = vpow.pop %v464
    %v466 = vsel %vm359, %v463, 0.0
    %467 = vadd.xlane.f32.xlu0 %v466
    %v468 = vpop.xlane.xlu0 %467
    %v469 = vsel %vm359, %v465, 0.0
    %470 = vadd.xlane.f32.xlu0 %v469
    %v471 = vpop.xlane.xlu0 %470
    %v472 = vrcp.pop %v468
    %v473 = vrcp.pop %v471
    %v474 = vmul.f32 %v463, %v472
    %v475 = vmul.f32 %v465, %v473
    %v476 = vadd.f32 %v380, %v474
    %v477 = vadd.f32 %v381, %v475
    %480 = vrot.lane.b32.xlu0 %v305, 120
    %v481 = vpop.permute.xlu0 %480
    %482 = vrot.lane.b32.xlu0 %v308, 120
    %v483 = vpop.permute.xlu0 %482
    %v487 = vsel %vm359, %v474, 0
    %v490 = vsel %vm359, %v475, 0
    %492 = vmatpush.msra.mxu0 0.0
    %493 = vmatpush.msra.mxu0 0.0
    %494 = vmatpush.msra.mxu0 0.0
    %495 = vmatpush.msra.mxu0 0.0
    %496 = vmatpush.msra.mxu0 0.0
    %497 = vmatpush.msra.mxu0 0.0
    %498 = vmatpush.msra.mxu0 0.0
    %499 = vmatpush.msra.mxu0 0.0
    %500 = vmatpush.msra.mxu0 0.0
    %501 = vmatpush.msra.mxu0 0.0
    %502 = vmatpush.msra.mxu0 0.0
    %503 = vmatpush.msra.mxu0 0.0
    %504 = vmatpush.msra.mxu0 0.0
    %505 = vmatpush.msra.mxu0 0.0
    %506 = vmatpush.msra.mxu0 %v483
    %507 = vmatpush.msra.mxu0 %v481
    %508 = vmatmul.f32.gmra.mxu0 %v487
    %v509 = vpop.f32.mrf.mxu0
    %v510 = vadd.f32 0.0, %v509
    %511 = vmatmul.f32.gmra.mxu0 %v490
    %v512 = vpop.f32.mrf.mxu0
    %v513 = vadd.f32 0.0, %v512
    %514 = vdwg.mxu0
    %515 = vrot.lane.b32.xlu0 %v247, 112
    %v516 = vpop.permute.xlu0 %515
    %517 = vrot.lane.b32.xlu0 %v250, 112
    %v518 = vpop.permute.xlu0 %517
    %519 = vrot.lane.b32.xlu0 %v276, 112
    %v520 = vpop.permute.xlu0 %519
    %521 = vrot.lane.b32.xlu0 %v279, 112
    %v522 = vpop.permute.xlu0 %521
    %v523 = vsel %vm316, %v516, 0
    %v525 = vsel %vm316, %v518, 0
    %v527 = vsel %vm316, %v520, 0
    %v529 = vsel %vm316, %v522, 0
    %531 = vmatpush.xpose.msra.mxu0 0.0
    %532 = vmatpush.xpose.msra.mxu0 0.0
    %533 = vmatpush.xpose.msra.mxu0 0.0
    %534 = vmatpush.xpose.msra.mxu0 0.0
    %535 = vmatpush.xpose.msra.mxu0 0.0
    %536 = vmatpush.xpose.msra.mxu0 0.0
    %537 = vmatpush.xpose.msra.mxu0 0.0
    %538 = vmatpush.xpose.msra.mxu0 0.0
    %539 = vmatpush.xpose.msra.mxu0 0.0
    %540 = vmatpush.xpose.msra.mxu0 0.0
    %541 = vmatpush.xpose.msra.mxu0 0.0
    %542 = vmatpush.xpose.msra.mxu0 0.0
    %543 = vmatpush.xpose.msra.mxu0 0.0
    %544 = vmatpush.xpose.msra.mxu0 0.0
    %545 = vmatpush.xpose.msra.mxu0 %v529
    %546 = vmatpush.xpose.msra.mxu0 %v527
    %547 = vmatmul.f32.gmra.mxu0 %v523
    %v548 = vpop.f32.mrf.mxu0
    %v549 = vadd.f32 0.0, %v548
    %550 = vmatmul.f32.gmra.mxu0 %v525
    %v551 = vpop.f32.mrf.mxu0
    %v552 = vadd.f32 0.0, %v551
    %553 = vdwg.mxu0
    %v554 = vmul.f32 %v549, 0.35355338
    %v555 = vmul.f32 %v552, 0.35355338
    %v556 = vadd.f32 %v554, %v355
    %v557 = vadd.f32 %v555, %v355
    %v558 = vsel %vm359, %v556, -inf
    %559 = vmax.xlane.f32.xlu0 %v558
    %v560 = vpop.xlane.xlu0 %559
    %v561 = vsel %vm359, %v557, -inf
    %562 = vmax.xlane.f32.xlu0 %v561
    %v563 = vpop.xlane.xlu0 %562
    %v564 = vsub.f32 %v556, %v560
    %v565 = vsub.f32 %v557, %v563
    %v566 = vmul.f32 %v564, 1.442695
    %v567 = vpow.pop %v566
    %v568 = vmul.f32 %v565, 1.442695
    %v569 = vpow.pop %v568
    %v570 = vsel %vm359, %v567, 0.0
    %571 = vadd.xlane.f32.xlu0 %v570
    %v572 = vpop.xlane.xlu0 %571
    %v573 = vsel %vm359, %v569, 0.0
    %574 = vadd.xlane.f32.xlu0 %v573
    %v575 = vpop.xlane.xlu0 %574
    %v576 = vrcp.pop %v572
    %v577 = vrcp.pop %v575
    %v578 = vmul.f32 %v567, %v576
    %v579 = vmul.f32 %v569, %v577
    %v580 = vadd.f32 %v476, %v578
    %v581 = vadd.f32 %v477, %v579
    %582 = vrot.lane.b32.xlu0 %v305, 112
    %v583 = vpop.permute.xlu0 %582
    %584 = vrot.lane.b32.xlu0 %v308, 112
    %v585 = vpop.permute.xlu0 %584
    %v589 = vsel %vm359, %v578, 0
    %v592 = vsel %vm359, %v579, 0
    %594 = vmatpush.msra.mxu0 0.0
    %595 = vmatpush.msra.mxu0 0.0
    %596 = vmatpush.msra.mxu0 0.0
    %597 = vmatpush.msra.mxu0 0.0
    %598 = vmatpush.msra.mxu0 0.0
    %599 = vmatpush.msra.mxu0 0.0
    %600 = vmatpush.msra.mxu0 0.0
    %601 = vmatpush.msra.mxu0 0.0
    %602 = vmatpush.msra.mxu0 0.0
    %603 = vmatpush.msra.mxu0 0.0
    %604 = vmatpush.msra.mxu0 0.0
    %605 = vmatpush.msra.mxu0 0.0
    %606 = vmatpush.msra.mxu0 0.0
    %607 = vmatpush.msra.mxu0 0.0
    %608 = vmatpush.msra.mxu0 %v585
    %609 = vmatpush.msra.mxu0 %v583
    %610 = vmatmul.f32.gmra.mxu0 %v589
    %v611 = vpop.f32.mrf.mxu0
    %v612 = vadd.f32 0.0, %v611
    %613 = vmatmul.f32.gmra.mxu0 %v592
    %v614 = vpop.f32.mrf.mxu0
    %v615 = vadd.f32 0.0, %v614
    %616 = vdwg.mxu0
    %617 = vrot.lane.b32.xlu0 %v247, 104
    %v618 = vpop.permute.xlu0 %617
    %619 = vrot.lane.b32.xlu0 %v250, 104
    %v620 = vpop.permute.xlu0 %619
    %621 = vrot.lane.b32.xlu0 %v276, 104
    %v622 = vpop.permute.xlu0 %621
    %623 = vrot.lane.b32.xlu0 %v279, 104
    %v624 = vpop.permute.xlu0 %623
    %v625 = vsel %vm316, %v618, 0
    %v627 = vsel %vm316, %v620, 0
    %v629 = vsel %vm316, %v622, 0
    %v631 = vsel %vm316, %v624, 0
    %633 = vmatpush.xpose.msra.mxu0 0.0
    %634 = vmatpush.xpose.msra.mxu0 0.0
    %635 = vmatpush.xpose.msra.mxu0 0.0
    %636 = vmatpush.xpose.msra.mxu0 0.0
    %637 = vmatpush.xpose.msra.mxu0 0.0
    %638 = vmatpush.xpose.msra.mxu0 0.0
    %639 = vmatpush.xpose.msra.mxu0 0.0
    %640 = vmatpush.xpose.msra.mxu0 0.0
    %641 = vmatpush.xpose.msra.mxu0 0.0
    %642 = vmatpush.xpose.msra.mxu0 0.0
    %643 = vmatpush.xpose.msra.mxu0 0.0
    %644 = vmatpush.xpose.msra.mxu0 0.0
    %645 = vmatpush.xpose.msra.mxu0 0.0
    %646 = vmatpush.xpose.msra.mxu0 0.0
    %647 = vmatpush.xpose.msra.mxu0 %v631
    %648 = vmatpush.xpose.msra.mxu0 %v629
    %649 = vmatmul.f32.gmra.mxu0 %v625
    %v650 = vpop.f32.mrf.mxu0
    %v651 = vadd.f32 0.0, %v650
    %652 = vmatmul.f32.gmra.mxu0 %v627
    %v653 = vpop.f32.mrf.mxu0
    %v654 = vadd.f32 0.0, %v653
    %655 = vdwg.mxu0
    %v656 = vmul.f32 %v651, 0.35355338
    %v657 = vmul.f32 %v654, 0.35355338
    %v658 = vadd.f32 %v656, %v355
    %v659 = vadd.f32 %v657, %v355
    %v660 = vsel %vm359, %v658, -inf
    %661 = vmax.xlane.f32.xlu0 %v660
    %v662 = vpop.xlane.xlu0 %661
    %v663 = vsel %vm359, %v659, -inf
    %664 = vmax.xlane.f32.xlu0 %v663
    %v665 = vpop.xlane.xlu0 %664
    %v666 = vsub.f32 %v658, %v662
    %v667 = vsub.f32 %v659, %v665
    %v668 = vmul.f32 %v666, 1.442695
    %v669 = vpow.pop %v668
    %v670 = vmul.f32 %v667, 1.442695
    %v671 = vpow.pop %v670
    %v672 = vsel %vm359, %v669, 0.0
    %673 = vadd.xlane.f32.xlu0 %v672
    %v674 = vpop.xlane.xlu0 %673
    %v675 = vsel %vm359, %v671, 0.0
    %676 = vadd.xlane.f32.xlu0 %v675
    %v677 = vpop.xlane.xlu0 %676
    %v678 = vrcp.pop %v674
    %v679 = vrcp.pop %v677
    %v680 = vmul.f32 %v669, %v678
    %v681 = vmul.f32 %v671, %v679
    %v682 = vadd.f32 %v580, %v680
    %v683 = vadd.f32 %v581, %v681
    %684 = vrot.lane.b32.xlu0 %v305, 104
    %v685 = vpop.permute.xlu0 %684
    %686 = vrot.lane.b32.xlu0 %v308, 104
    %v687 = vpop.permute.xlu0 %686
    %v691 = vsel %vm359, %v680, 0
    %v694 = vsel %vm359, %v681, 0
    %696 = vmatpush.msra.mxu0 0.0
    %697 = vmatpush.msra.mxu0 0.0
    %698 = vmatpush.msra.mxu0 0.0
    %699 = vmatpush.msra.mxu0 0.0
    %700 = vmatpush.msra.mxu0 0.0
    %701 = vmatpush.msra.mxu0 0.0
    %702 = vmatpush.msra.mxu0 0.0
    %703 = vmatpush.msra.mxu0 0.0
    %704 = vmatpush.msra.mxu0 0.0
    %705 = vmatpush.msra.mxu0 0.0
    %706 = vmatpush.msra.mxu0 0.0
    %707 = vmatpush.msra.mxu0 0.0
    %708 = vmatpush.msra.mxu0 0.0
    %709 = vmatpush.msra.mxu0 0.0
    %710 = vmatpush.msra.mxu0 %v687
    %711 = vmatpush.msra.mxu0 %v685
    %712 = vmatmul.f32.gmra.mxu0 %v691
    %v713 = vpop.f32.mrf.mxu0
    %v714 = vadd.f32 0.0, %v713
    %715 = vmatmul.f32.gmra.mxu0 %v694
    %v716 = vpop.f32.mrf.mxu0
    %v717 = vadd.f32 0.0, %v716
    %718 = vdwg.mxu0
    %721 = vrot.lane.b32.xlu0 %v510, 8
    %v722 = vpop.permute.xlu0 %721
    %723 = vrot.lane.b32.xlu0 %v513, 8
    %v724 = vpop.permute.xlu0 %723
    %729 = vrot.lane.b32.xlu0 %v612, 16
    %v730 = vpop.permute.xlu0 %729
    %731 = vrot.lane.b32.xlu0 %v615, 16
    %v732 = vpop.permute.xlu0 %731
    %737 = vrot.lane.b32.xlu0 %v714, 24
    %v738 = vpop.permute.xlu0 %737
    %739 = vrot.lane.b32.xlu0 %v717, 24
    %v740 = vpop.permute.xlu0 %739
    %v743 = vsel %vm316, %v406, %v722
    %v744 = vsel %vm316, %v409, %v724
    %v745 = vsel %vm359, %v743, %v730
    %v746 = vsel %vm359, %v744, %v732
    %vm747 = vcmask 195584
    %v748 = vsel %vm747, %v745, %v738
    %v749 = vsel %vm747, %v746, %v740
    %v750 = vmul.f32 %v682, 0.25
    %v751 = vmul.f32 %v683, 0.25
    %vm752 = vcmp.gt.f32.partialorder %v100, 0.0
    %v753 = vsel %vm752, 1, 0
    %v754 = vperm.slane %v753, 0
    %vm755 = vcmp.eq.s32.totalorder %v754, 1
    %v756 = vsel %vm755, %v750, -1e+30
    %v757 = vsel %vm755, %v751, -1e+30
    %v758 = vsel %vm359, %v756, -inf
    %759 = vmax.xlane.f32.xlu0 %v758
    %v760 = vpop.xlane.xlu0 %759
    %v761 = vsel %vm359, %v757, -inf
    %762 = vmax.xlane.f32.xlu0 %v761
    %v763 = vpop.xlane.xlu0 %762
    %v764 = vsub.f32 %v756, %v760
    %v765 = vsub.f32 %v757, %v763
    %v766 = vmul.f32 %v764, 1.442695
    %v767 = vpow.pop %v766
    %v768 = vmul.f32 %v765, 1.442695
    %v769 = vpow.pop %v768
    %v770 = vsel %vm359, %v767, 0.0
    %771 = vadd.xlane.f32.xlu0 %v770
    %v772 = vpop.xlane.xlu0 %771
    %v773 = vsel %vm359, %v769, 0.0
    %774 = vadd.xlane.f32.xlu0 %v773
    %v775 = vpop.xlane.xlu0 %774
    %v776 = vrcp.pop %v772
    %v777 = vmul.f32 %v772, %v776
    %v778 = vsub.f32 1.0, %v777
    %v779 = vmul.f32 %v776, %v778
    %v780 = vadd.f32 %v776, %v779
    %vm781 = vweird.f32 %v772
    %vm782 = vweird.f32 %v776
    %vm783 = vmor %vm781, %vm782
    %v784 = vsel %vm783, %v776, %v780
    %v785 = vand.u32 2147483647, %v772
    %vm786 = vcmp.eq.f32.partialorder %v785, 8.507059e+37
    %v787 = vand.u32 %v772, 2147483648
    %v788 = vor.u32 1.1754944e-38, %v787
    %v789 = vsel %vm786, %v788, %v784
    %v790 = vmul.f32 %v767, %v789
    %v791 = vrcp.pop %v775
    %v792 = vmul.f32 %v775, %v791
    %v793 = vsub.f32 1.0, %v792
    %v794 = vmul.f32 %v791, %v793
    %v795 = vadd.f32 %v791, %v794
    %vm796 = vweird.f32 %v775
    %vm797 = vweird.f32 %v791
    %vm798 = vmor %vm796, %vm797
    %v799 = vsel %vm798, %v791, %v795
    %v800 = vand.u32 2147483647, %v775
    %vm801 = vcmp.eq.f32.partialorder %v800, 8.507059e+37
    %v802 = vand.u32 %v775, 2147483648
    %v803 = vor.u32 1.1754944e-38, %v802
    %v804 = vsel %vm801, %v803, %v799
    %v805 = vmul.f32 %v769, %v804
    %v806 = vlog2.pop %v772
    %v807 = vmul.f32 %v806, 0.6931472
    %v808 = vlog2.pop %v775
    %v809 = vmul.f32 %v808, 0.6931472
    %v810 = vsub.f32 %v764, %v807
    %v811 = vsub.f32 %v765, %v809
    %vm812 = vcmp.gt.f32.partialorder %v125, 0.0
    %vm813 = vcmp.gt.f32.partialorder %v126, 0.0
    %v814 = vmul.f32 %v790, %v810
    %v815 = vmul.f32 %v805, %v811
    %v816 = vsel %vm812, %v814, 0.0
    %v817 = vsel %vm813, %v815, 0.0
    %v818 = vsel %vm359, %v816, 0.0
    %819 = vadd.xlane.f32.xlu0 %v818
    %v820 = vpop.xlane.xlu0 %819
    %v821 = vsel %vm359, %v817, 0.0
    %822 = vadd.xlane.f32.xlu0 %v821
    %v823 = vpop.xlane.xlu0 %822
    %v824 = vadd.f32 %v820, %v823
    %v825 = vrot.slane %v824, 4
    %v826 = vadd.f32 %v824, %v825
    %v827 = vrot.slane %v826, 2
    %v828 = vadd.f32 %v826, %v827
    %v829 = vrot.slane %v828, 1
    %v830 = vadd.f32 %v828, %v829
    %v831 = vstv %s168
    %v832 = vmul.f32 %v830, %v831
    %v833 = vadd.f32 %v832, 0.0
    %v835 = vsel %vm316, %v253, 0
    %v838 = vsel %vm316, %v256, 0
    %v841 = vsel %vm316, %v282, 0
    %v844 = vsel %vm316, %v285, 0
    %846 = vmatpush.xpose.msra.mxu0 0.0
    %847 = vmatpush.xpose.msra.mxu0 0.0
    %848 = vmatpush.xpose.msra.mxu0 0.0
    %849 = vmatpush.xpose.msra.mxu0 0.0
    %850 = vmatpush.xpose.msra.mxu0 0.0
    %851 = vmatpush.xpose.msra.mxu0 0.0
    %852 = vmatpush.xpose.msra.mxu0 0.0
    %853 = vmatpush.xpose.msra.mxu0 0.0
    %854 = vmatpush.xpose.msra.mxu0 0.0
    %855 = vmatpush.xpose.msra.mxu0 0.0
    %856 = vmatpush.xpose.msra.mxu0 0.0
    %857 = vmatpush.xpose.msra.mxu0 0.0
    %858 = vmatpush.xpose.msra.mxu0 0.0
    %859 = vmatpush.xpose.msra.mxu0 0.0
    %860 = vmatpush.xpose.msra.mxu0 %v844
    %861 = vmatpush.xpose.msra.mxu0 %v841
    %862 = vmatmul.f32.gmra.mxu0 %v835
    %v863 = vpop.f32.mrf.mxu0
    %v864 = vadd.f32 0.0, %v863
    %865 = vmatmul.f32.gmra.mxu0 %v838
    %v866 = vpop.f32.mrf.mxu0
    %v867 = vadd.f32 0.0, %v866
    %868 = vdwg.mxu0
    %v869 = vmul.f32 %v864, 0.35355338
    %v870 = vmul.f32 %v867, 0.35355338
    %v872 = vperm.slane %v111, 0
    %v874 = vadd.f32 %v869, %v872
    %v875 = vadd.f32 %v870, %v872
    %v876 = vsel %vm359, %v874, -inf
    %877 = vmax.xlane.f32.xlu0 %v876
    %v878 = vpop.xlane.xlu0 %877
    %v879 = vsel %vm359, %v875, -inf
    %880 = vmax.xlane.f32.xlu0 %v879
    %v881 = vpop.xlane.xlu0 %880
    %v882 = vsub.f32 %v874, %v878
    %v883 = vsub.f32 %v875, %v881
    %v884 = vmul.f32 %v882, 1.442695
    %v885 = vpow.pop %v884
    %v886 = vmul.f32 %v883, 1.442695
    %v887 = vpow.pop %v886
    %v888 = vsel %vm359, %v885, 0.0
    %889 = vadd.xlane.f32.xlu0 %v888
    %v890 = vpop.xlane.xlu0 %889
    %v891 = vsel %vm359, %v887, 0.0
    %892 = vadd.xlane.f32.xlu0 %v891
    %v893 = vpop.xlane.xlu0 %892
    %v894 = vrcp.pop %v890
    %v895 = vrcp.pop %v893
    %v896 = vmul.f32 %v885, %v894
    %v897 = vmul.f32 %v887, %v895
    %v899 = vsel %vm359, %v896, 0
    %v902 = vsel %vm359, %v897, 0
    %904 = vmatpush.msra.mxu0 0.0
    %905 = vmatpush.msra.mxu0 0.0
    %906 = vmatpush.msra.mxu0 0.0
    %907 = vmatpush.msra.mxu0 0.0
    %908 = vmatpush.msra.mxu0 0.0
    %909 = vmatpush.msra.mxu0 0.0
    %910 = vmatpush.msra.mxu0 0.0
    %911 = vmatpush.msra.mxu0 0.0
    %912 = vmatpush.msra.mxu0 0.0
    %913 = vmatpush.msra.mxu0 0.0
    %914 = vmatpush.msra.mxu0 0.0
    %915 = vmatpush.msra.mxu0 0.0
    %916 = vmatpush.msra.mxu0 0.0
    %917 = vmatpush.msra.mxu0 0.0
    %918 = vmatpush.msra.mxu0 %v314
    %919 = vmatpush.msra.mxu0 %v311
    %920 = vmatmul.f32.gmra.mxu0 %v899
    %v921 = vpop.f32.mrf.mxu0
    %v922 = vadd.f32 0.0, %v921
    %923 = vmatmul.f32.gmra.mxu0 %v902
    %v924 = vpop.f32.mrf.mxu0
    %v925 = vadd.f32 0.0, %v924
    %926 = vdwg.mxu0
    %927 = vrot.lane.b32.xlu0 %v253, 120
    %v928 = vpop.permute.xlu0 %927
    %929 = vrot.lane.b32.xlu0 %v256, 120
    %v930 = vpop.permute.xlu0 %929
    %931 = vrot.lane.b32.xlu0 %v282, 120
    %v932 = vpop.permute.xlu0 %931
    %933 = vrot.lane.b32.xlu0 %v285, 120
    %v934 = vpop.permute.xlu0 %933
    %v935 = vsel %vm316, %v928, 0
    %v937 = vsel %vm316, %v930, 0
    %v939 = vsel %vm316, %v932, 0
    %v941 = vsel %vm316, %v934, 0
    %943 = vmatpush.xpose.msra.mxu0 0.0
    %944 = vmatpush.xpose.msra.mxu0 0.0
    %945 = vmatpush.xpose.msra.mxu0 0.0
    %946 = vmatpush.xpose.msra.mxu0 0.0
    %947 = vmatpush.xpose.msra.mxu0 0.0
    %948 = vmatpush.xpose.msra.mxu0 0.0
    %949 = vmatpush.xpose.msra.mxu0 0.0
    %950 = vmatpush.xpose.msra.mxu0 0.0
    %951 = vmatpush.xpose.msra.mxu0 0.0
    %952 = vmatpush.xpose.msra.mxu0 0.0
    %953 = vmatpush.xpose.msra.mxu0 0.0
    %954 = vmatpush.xpose.msra.mxu0 0.0
    %955 = vmatpush.xpose.msra.mxu0 0.0
    %956 = vmatpush.xpose.msra.mxu0 0.0
    %957 = vmatpush.xpose.msra.mxu0 %v941
    %958 = vmatpush.xpose.msra.mxu0 %v939
    %959 = vmatmul.f32.gmra.mxu0 %v935
    %v960 = vpop.f32.mrf.mxu0
    %v961 = vadd.f32 0.0, %v960
    %962 = vmatmul.f32.gmra.mxu0 %v937
    %v963 = vpop.f32.mrf.mxu0
    %v964 = vadd.f32 0.0, %v963
    %965 = vdwg.mxu0
    %v966 = vmul.f32 %v961, 0.35355338
    %v967 = vmul.f32 %v964, 0.35355338
    %v968 = vadd.f32 %v966, %v872
    %v969 = vadd.f32 %v967, %v872
    %v970 = vsel %vm359, %v968, -inf
    %971 = vmax.xlane.f32.xlu0 %v970
    %v972 = vpop.xlane.xlu0 %971
    %v973 = vsel %vm359, %v969, -inf
    %974 = vmax.xlane.f32.xlu0 %v973
    %v975 = vpop.xlane.xlu0 %974
    %v976 = vsub.f32 %v968, %v972
    %v977 = vsub.f32 %v969, %v975
    %v978 = vmul.f32 %v976, 1.442695
    %v979 = vpow.pop %v978
    %v980 = vmul.f32 %v977, 1.442695
    %v981 = vpow.pop %v980
    %v982 = vsel %vm359, %v979, 0.0
    %983 = vadd.xlane.f32.xlu0 %v982
    %v984 = vpop.xlane.xlu0 %983
    %v985 = vsel %vm359, %v981, 0.0
    %986 = vadd.xlane.f32.xlu0 %v985
    %v987 = vpop.xlane.xlu0 %986
    %v988 = vrcp.pop %v984
    %v989 = vrcp.pop %v987
    %v990 = vmul.f32 %v979, %v988
    %v991 = vmul.f32 %v981, %v989
    %v992 = vadd.f32 %v896, %v990
    %v993 = vadd.f32 %v897, %v991
    %996 = vrot.lane.b32.xlu0 %v311, 120
    %v997 = vpop.permute.xlu0 %996
    %998 = vrot.lane.b32.xlu0 %v314, 120
    %v999 = vpop.permute.xlu0 %998
    %v1003 = vsel %vm359, %v990, 0
    %v1006 = vsel %vm359, %v991, 0
    %1008 = vmatpush.msra.mxu0 0.0
    %1009 = vmatpush.msra.mxu0 0.0
    %1010 = vmatpush.msra.mxu0 0.0
    %1011 = vmatpush.msra.mxu0 0.0
    %1012 = vmatpush.msra.mxu0 0.0
    %1013 = vmatpush.msra.mxu0 0.0
    %1014 = vmatpush.msra.mxu0 0.0
    %1015 = vmatpush.msra.mxu0 0.0
    %1016 = vmatpush.msra.mxu0 0.0
    %1017 = vmatpush.msra.mxu0 0.0
    %1018 = vmatpush.msra.mxu0 0.0
    %1019 = vmatpush.msra.mxu0 0.0
    %1020 = vmatpush.msra.mxu0 0.0
    %1021 = vmatpush.msra.mxu0 0.0
    %1022 = vmatpush.msra.mxu0 %v999
    %1023 = vmatpush.msra.mxu0 %v997
    %1024 = vmatmul.f32.gmra.mxu0 %v1003
    %v1025 = vpop.f32.mrf.mxu0
    %v1026 = vadd.f32 0.0, %v1025
    %1027 = vmatmul.f32.gmra.mxu0 %v1006
    %v1028 = vpop.f32.mrf.mxu0
    %v1029 = vadd.f32 0.0, %v1028
    %1030 = vdwg.mxu0
    %1031 = vrot.lane.b32.xlu0 %v253, 112
    %v1032 = vpop.permute.xlu0 %1031
    %1033 = vrot.lane.b32.xlu0 %v256, 112
    %v1034 = vpop.permute.xlu0 %1033
    %1035 = vrot.lane.b32.xlu0 %v282, 112
    %v1036 = vpop.permute.xlu0 %1035
    %1037 = vrot.lane.b32.xlu0 %v285, 112
    %v1038 = vpop.permute.xlu0 %1037
    %v1039 = vsel %vm316, %v1032, 0
    %v1041 = vsel %vm316, %v1034, 0
    %v1043 = vsel %vm316, %v1036, 0
    %v1045 = vsel %vm316, %v1038, 0
    %1047 = vmatpush.xpose.msra.mxu0 0.0
    %1048 = vmatpush.xpose.msra.mxu0 0.0
    %1049 = vmatpush.xpose.msra.mxu0 0.0
    %1050 = vmatpush.xpose.msra.mxu0 0.0
    %1051 = vmatpush.xpose.msra.mxu0 0.0
    %1052 = vmatpush.xpose.msra.mxu0 0.0
    %1053 = vmatpush.xpose.msra.mxu0 0.0
    %1054 = vmatpush.xpose.msra.mxu0 0.0
    %1055 = vmatpush.xpose.msra.mxu0 0.0
    %1056 = vmatpush.xpose.msra.mxu0 0.0
    %1057 = vmatpush.xpose.msra.mxu0 0.0
    %1058 = vmatpush.xpose.msra.mxu0 0.0
    %1059 = vmatpush.xpose.msra.mxu0 0.0
    %1060 = vmatpush.xpose.msra.mxu0 0.0
    %1061 = vmatpush.xpose.msra.mxu0 %v1045
    %1062 = vmatpush.xpose.msra.mxu0 %v1043
    %1063 = vmatmul.f32.gmra.mxu0 %v1039
    %v1064 = vpop.f32.mrf.mxu0
    %v1065 = vadd.f32 0.0, %v1064
    %1066 = vmatmul.f32.gmra.mxu0 %v1041
    %v1067 = vpop.f32.mrf.mxu0
    %v1068 = vadd.f32 0.0, %v1067
    %1069 = vdwg.mxu0
    %v1070 = vmul.f32 %v1065, 0.35355338
    %v1071 = vmul.f32 %v1068, 0.35355338
    %v1072 = vadd.f32 %v1070, %v872
    %v1073 = vadd.f32 %v1071, %v872
    %v1074 = vsel %vm359, %v1072, -inf
    %1075 = vmax.xlane.f32.xlu0 %v1074
    %v1076 = vpop.xlane.xlu0 %1075
    %v1077 = vsel %vm359, %v1073, -inf
    %1078 = vmax.xlane.f32.xlu0 %v1077
    %v1079 = vpop.xlane.xlu0 %1078
    %v1080 = vsub.f32 %v1072, %v1076
    %v1081 = vsub.f32 %v1073, %v1079
    %v1082 = vmul.f32 %v1080, 1.442695
    %v1083 = vpow.pop %v1082
    %v1084 = vmul.f32 %v1081, 1.442695
    %v1085 = vpow.pop %v1084
    %v1086 = vsel %vm359, %v1083, 0.0
    %1087 = vadd.xlane.f32.xlu0 %v1086
    %v1088 = vpop.xlane.xlu0 %1087
    %v1089 = vsel %vm359, %v1085, 0.0
    %1090 = vadd.xlane.f32.xlu0 %v1089
    %v1091 = vpop.xlane.xlu0 %1090
    %v1092 = vrcp.pop %v1088
    %v1093 = vrcp.pop %v1091
    %v1094 = vmul.f32 %v1083, %v1092
    %v1095 = vmul.f32 %v1085, %v1093
    %v1096 = vadd.f32 %v992, %v1094
    %v1097 = vadd.f32 %v993, %v1095
    %1098 = vrot.lane.b32.xlu0 %v311, 112
    %v1099 = vpop.permute.xlu0 %1098
    %1100 = vrot.lane.b32.xlu0 %v314, 112
    %v1101 = vpop.permute.xlu0 %1100
    %v1105 = vsel %vm359, %v1094, 0
    %v1108 = vsel %vm359, %v1095, 0
    %1110 = vmatpush.msra.mxu0 0.0
    %1111 = vmatpush.msra.mxu0 0.0
    %1112 = vmatpush.msra.mxu0 0.0
    %1113 = vmatpush.msra.mxu0 0.0
    %1114 = vmatpush.msra.mxu0 0.0
    %1115 = vmatpush.msra.mxu0 0.0
    %1116 = vmatpush.msra.mxu0 0.0
    %1117 = vmatpush.msra.mxu0 0.0
    %1118 = vmatpush.msra.mxu0 0.0
    %1119 = vmatpush.msra.mxu0 0.0
    %1120 = vmatpush.msra.mxu0 0.0
    %1121 = vmatpush.msra.mxu0 0.0
    %1122 = vmatpush.msra.mxu0 0.0
    %1123 = vmatpush.msra.mxu0 0.0
    %1124 = vmatpush.msra.mxu0 %v1101
    %1125 = vmatpush.msra.mxu0 %v1099
    %1126 = vmatmul.f32.gmra.mxu0 %v1105
    %v1127 = vpop.f32.mrf.mxu0
    %v1128 = vadd.f32 0.0, %v1127
    %1129 = vmatmul.f32.gmra.mxu0 %v1108
    %v1130 = vpop.f32.mrf.mxu0
    %v1131 = vadd.f32 0.0, %v1130
    %1132 = vdwg.mxu0
    %1133 = vrot.lane.b32.xlu0 %v253, 104
    %v1134 = vpop.permute.xlu0 %1133
    %1135 = vrot.lane.b32.xlu0 %v256, 104
    %v1136 = vpop.permute.xlu0 %1135
    %1137 = vrot.lane.b32.xlu0 %v282, 104
    %v1138 = vpop.permute.xlu0 %1137
    %1139 = vrot.lane.b32.xlu0 %v285, 104
    %v1140 = vpop.permute.xlu0 %1139
    %v1141 = vsel %vm316, %v1134, 0
    %v1143 = vsel %vm316, %v1136, 0
    %v1145 = vsel %vm316, %v1138, 0
    %v1147 = vsel %vm316, %v1140, 0
    %1149 = vmatpush.xpose.msra.mxu0 0.0
    %1150 = vmatpush.xpose.msra.mxu0 0.0
    %1151 = vmatpush.xpose.msra.mxu0 0.0
    %1152 = vmatpush.xpose.msra.mxu0 0.0
    %1153 = vmatpush.xpose.msra.mxu0 0.0
    %1154 = vmatpush.xpose.msra.mxu0 0.0
    %1155 = vmatpush.xpose.msra.mxu0 0.0
    %1156 = vmatpush.xpose.msra.mxu0 0.0
    %1157 = vmatpush.xpose.msra.mxu0 0.0
    %1158 = vmatpush.xpose.msra.mxu0 0.0
    %1159 = vmatpush.xpose.msra.mxu0 0.0
    %1160 = vmatpush.xpose.msra.mxu0 0.0
    %1161 = vmatpush.xpose.msra.mxu0 0.0
    %1162 = vmatpush.xpose.msra.mxu0 0.0
    %1163 = vmatpush.xpose.msra.mxu0 %v1147
    %1164 = vmatpush.xpose.msra.mxu0 %v1145
    %1165 = vmatmul.f32.gmra.mxu0 %v1141
    %v1166 = vpop.f32.mrf.mxu0
    %v1167 = vadd.f32 0.0, %v1166
    %1168 = vmatmul.f32.gmra.mxu0 %v1143
    %v1169 = vpop.f32.mrf.mxu0
    %v1170 = vadd.f32 0.0, %v1169
    %1171 = vdwg.mxu0
    %v1172 = vmul.f32 %v1167, 0.35355338
    %v1173 = vmul.f32 %v1170, 0.35355338
    %v1174 = vadd.f32 %v1172, %v872
    %v1175 = vadd.f32 %v1173, %v872
    %v1176 = vsel %vm359, %v1174, -inf
    %1177 = vmax.xlane.f32.xlu0 %v1176
    %v1178 = vpop.xlane.xlu0 %1177
    %v1179 = vsel %vm359, %v1175, -inf
    %1180 = vmax.xlane.f32.xlu0 %v1179
    %v1181 = vpop.xlane.xlu0 %1180
    %v1182 = vsub.f32 %v1174, %v1178
    %v1183 = vsub.f32 %v1175, %v1181
    %v1184 = vmul.f32 %v1182, 1.442695
    %v1185 = vpow.pop %v1184
    %v1186 = vmul.f32 %v1183, 1.442695
    %v1187 = vpow.pop %v1186
    %v1188 = vsel %vm359, %v1185, 0.0
    %1189 = vadd.xlane.f32.xlu0 %v1188
    %v1190 = vpop.xlane.xlu0 %1189
    %v1191 = vsel %vm359, %v1187, 0.0
    %1192 = vadd.xlane.f32.xlu0 %v1191
    %v1193 = vpop.xlane.xlu0 %1192
    %v1194 = vrcp.pop %v1190
    %v1195 = vrcp.pop %v1193
    %v1196 = vmul.f32 %v1185, %v1194
    %v1197 = vmul.f32 %v1187, %v1195
    %v1198 = vadd.f32 %v1096, %v1196
    %v1199 = vadd.f32 %v1097, %v1197
    %1200 = vrot.lane.b32.xlu0 %v311, 104
    %v1201 = vpop.permute.xlu0 %1200
    %1202 = vrot.lane.b32.xlu0 %v314, 104
    %v1203 = vpop.permute.xlu0 %1202
    %v1207 = vsel %vm359, %v1196, 0
    %v1210 = vsel %vm359, %v1197, 0
    %1212 = vmatpush.msra.mxu0 0.0
    %1213 = vmatpush.msra.mxu0 0.0
    %1214 = vmatpush.msra.mxu0 0.0
    %1215 = vmatpush.msra.mxu0 0.0
    %1216 = vmatpush.msra.mxu0 0.0
    %1217 = vmatpush.msra.mxu0 0.0
    %1218 = vmatpush.msra.mxu0 0.0
    %1219 = vmatpush.msra.mxu0 0.0
    %1220 = vmatpush.msra.mxu0 0.0
    %1221 = vmatpush.msra.mxu0 0.0
    %1222 = vmatpush.msra.mxu0 0.0
    %1223 = vmatpush.msra.mxu0 0.0
    %1224 = vmatpush.msra.mxu0 0.0
    %1225 = vmatpush.msra.mxu0 0.0
    %1226 = vmatpush.msra.mxu0 %v1203
    %1227 = vmatpush.msra.mxu0 %v1201
    %1228 = vmatmul.f32.gmra.mxu0 %v1207
    %v1229 = vpop.f32.mrf.mxu0
    %v1230 = vadd.f32 0.0, %v1229
    %1231 = vmatmul.f32.gmra.mxu0 %v1210
    %v1232 = vpop.f32.mrf.mxu0
    %v1233 = vadd.f32 0.0, %v1232
    %1234 = vdwg.mxu0
    %1237 = vrot.lane.b32.xlu0 %v1026, 8
    %v1238 = vpop.permute.xlu0 %1237
    %1239 = vrot.lane.b32.xlu0 %v1029, 8
    %v1240 = vpop.permute.xlu0 %1239
    %1245 = vrot.lane.b32.xlu0 %v1128, 16
    %v1246 = vpop.permute.xlu0 %1245
    %1247 = vrot.lane.b32.xlu0 %v1131, 16
    %v1248 = vpop.permute.xlu0 %1247
    %1253 = vrot.lane.b32.xlu0 %v1230, 24
    %v1254 = vpop.permute.xlu0 %1253
    %1255 = vrot.lane.b32.xlu0 %v1233, 24
    %v1256 = vpop.permute.xlu0 %1255
    %v1259 = vsel %vm316, %v922, %v1238
    %v1260 = vsel %vm316, %v925, %v1240
    %v1261 = vsel %vm359, %v1259, %v1246
    %v1262 = vsel %vm359, %v1260, %v1248
    %v1263 = vsel %vm747, %v1261, %v1254
    %v1264 = vsel %vm747, %v1262, %v1256
    %v1265 = vmul.f32 %v1198, 0.25
    %v1266 = vmul.f32 %v1199, 0.25
    %vm1267 = vcmp.gt.f32.partialorder %v102, 0.0
    %v1268 = vsel %vm1267, 1, 0
    %v1269 = vperm.slane %v1268, 0
    %vm1270 = vcmp.eq.s32.totalorder %v1269, 1
    %v1271 = vsel %vm1270, %v1265, -1e+30
    %v1272 = vsel %vm1270, %v1266, -1e+30
    %v1273 = vsel %vm359, %v1271, -inf
    %1274 = vmax.xlane.f32.xlu0 %v1273
    %v1275 = vpop.xlane.xlu0 %1274
    %v1276 = vsel %vm359, %v1272, -inf
    %1277 = vmax.xlane.f32.xlu0 %v1276
    %v1278 = vpop.xlane.xlu0 %1277
    %v1279 = vsub.f32 %v1271, %v1275
    %v1280 = vsub.f32 %v1272, %v1278
    %v1281 = vmul.f32 %v1279, 1.442695
    %v1282 = vpow.pop %v1281
    %v1283 = vmul.f32 %v1280, 1.442695
    %v1284 = vpow.pop %v1283
    %v1285 = vsel %vm359, %v1282, 0.0
    %1286 = vadd.xlane.f32.xlu0 %v1285
    %v1287 = vpop.xlane.xlu0 %1286
    %v1288 = vsel %vm359, %v1284, 0.0
    %1289 = vadd.xlane.f32.xlu0 %v1288
    %v1290 = vpop.xlane.xlu0 %1289
    %v1291 = vrcp.pop %v1287
    %v1292 = vmul.f32 %v1287, %v1291
    %v1293 = vsub.f32 1.0, %v1292
    %v1294 = vmul.f32 %v1291, %v1293
    %v1295 = vadd.f32 %v1291, %v1294
    %vm1296 = vweird.f32 %v1287
    %vm1297 = vweird.f32 %v1291
    %vm1298 = vmor %vm1296, %vm1297
    %v1299 = vsel %vm1298, %v1291, %v1295
    %v1300 = vand.u32 2147483647, %v1287
    %vm1301 = vcmp.eq.f32.partialorder %v1300, 8.507059e+37
    %v1302 = vand.u32 %v1287, 2147483648
    %v1303 = vor.u32 1.1754944e-38, %v1302
    %v1304 = vsel %vm1301, %v1303, %v1299
    %v1305 = vmul.f32 %v1282, %v1304
    %v1306 = vrcp.pop %v1290
    %v1307 = vmul.f32 %v1290, %v1306
    %v1308 = vsub.f32 1.0, %v1307
    %v1309 = vmul.f32 %v1306, %v1308
    %v1310 = vadd.f32 %v1306, %v1309
    %vm1311 = vweird.f32 %v1290
    %vm1312 = vweird.f32 %v1306
    %vm1313 = vmor %vm1311, %vm1312
    %v1314 = vsel %vm1313, %v1306, %v1310
    %v1315 = vand.u32 2147483647, %v1290
    %vm1316 = vcmp.eq.f32.partialorder %v1315, 8.507059e+37
    %v1317 = vand.u32 %v1290, 2147483648
    %v1318 = vor.u32 1.1754944e-38, %v1317
    %v1319 = vsel %vm1316, %v1318, %v1314
    %v1320 = vmul.f32 %v1284, %v1319
    %v1321 = vlog2.pop %v1287
    %v1322 = vmul.f32 %v1321, 0.6931472
    %v1323 = vlog2.pop %v1290
    %v1324 = vmul.f32 %v1323, 0.6931472
    %v1325 = vsub.f32 %v1279, %v1322
    %v1326 = vsub.f32 %v1280, %v1324
    %vm1327 = vcmp.gt.f32.partialorder %v140, 0.0
    %vm1328 = vcmp.gt.f32.partialorder %v141, 0.0
    %v1329 = vmul.f32 %v1305, %v1325
    %v1330 = vmul.f32 %v1320, %v1326
    %v1331 = vsel %vm1327, %v1329, 0.0
    %v1332 = vsel %vm1328, %v1330, 0.0
    %v1333 = vsel %vm359, %v1331, 0.0
    %1334 = vadd.xlane.f32.xlu0 %v1333
    %v1335 = vpop.xlane.xlu0 %1334
    %v1336 = vsel %vm359, %v1332, 0.0
    %1337 = vadd.xlane.f32.xlu0 %v1336
    %v1338 = vpop.xlane.xlu0 %1337
    %v1339 = vadd.f32 %v1335, %v1338
    %v1340 = vrot.slane %v1339, 4
    %v1341 = vadd.f32 %v1339, %v1340
    %v1342 = vrot.slane %v1341, 2
    %v1343 = vadd.f32 %v1341, %v1342
    %v1344 = vrot.slane %v1343, 1
    %v1345 = vadd.f32 %v1343, %v1344
    %v1346 = vstv %s194
    %v1347 = vmul.f32 %v1345, %v1346
    %v1348 = vadd.f32 %v833, %v1347
    %v1350 = vsel %vm216, %v748, 0
    %v1353 = vsel %vm216, %v749, 0
    %v1356 = vsel %vm216, %v1263, 0
    %v1359 = vsel %vm216, %v1264, 0
    %1361 = vmatpush.msra.mxu0 0.0
    %1362 = vmatpush.msra.mxu0 0.0
    %1363 = vmatpush.msra.mxu0 0.0
    %1364 = vmatpush.msra.mxu0 0.0
    %1365 = vmatpush.msra.mxu0 0.0
    %1366 = vmatpush.msra.mxu0 0.0
    %1367 = vmatpush.msra.mxu0 0.0
    %1368 = vmatpush.msra.mxu0 0.0
    %1369 = vmatpush.msra.mxu0 0.0
    %1370 = vmatpush.msra.mxu0 0.0
    %1371 = vmatpush.msra.mxu0 0.0
    %1372 = vmatpush.msra.mxu0 0.0
    %1373 = vmatpush.msra.mxu0 %v215
    %1374 = vmatpush.msra.mxu0 %v214
    %1375 = vmatpush.msra.mxu0 %v213
    %1376 = vmatpush.msra.mxu0 %v212
    %1377 = vmatmul.f32.gmra.mxu0 %v1350
    %v1378 = vpop.f32.mrf.mxu0
    %v1379 = vadd.f32 0.0, %v1378
    %1380 = vmatmul.f32.gmra.mxu0 %v1353
    %v1381 = vpop.f32.mrf.mxu0
    %v1382 = vadd.f32 0.0, %v1381
    %1383 = vmatmul.f32.gmra.mxu0 %v1356
    %v1384 = vpop.f32.mrf.mxu0
    %v1385 = vadd.f32 0.0, %v1384
    %1386 = vmatmul.f32.gmra.mxu0 %v1359
    %v1387 = vpop.f32.mrf.mxu0
    %v1388 = vadd.f32 0.0, %v1387
    %1389 = vdwg.mxu0
    %v1390 = vadd.f32 %v195, %v1379
    %v1391 = vadd.f32 %v196, %v1382
    %v1392 = vadd.f32 %v198, %v1385
    %v1393 = vadd.f32 %v199, %v1388
    %1394 = vrot.lane.b32.xlu0 %v474, 16
    %v1395 = vpop.permute.xlu0 %1394
    %1396 = vrot.lane.b32.xlu0 %v475, 16
    %v1397 = vpop.permute.xlu0 %1396
    %1400 = vrot.lane.b32.xlu0 %v578, 32
    %v1401 = vpop.permute.xlu0 %1400
    %1402 = vrot.lane.b32.xlu0 %v579, 32
    %v1403 = vpop.permute.xlu0 %1402
    %1406 = vrot.lane.b32.xlu0 %v680, 48
    %v1407 = vpop.permute.xlu0 %1406
    %1408 = vrot.lane.b32.xlu0 %v681, 48
    %v1409 = vpop.permute.xlu0 %1408
    %1412 = vrot.lane.b32.xlu0 %v896, 64
    %v1413 = vpop.permute.xlu0 %1412
    %1414 = vrot.lane.b32.xlu0 %v897, 64
    %v1415 = vpop.permute.xlu0 %1414
    %1418 = vrot.lane.b32.xlu0 %v990, 80
    %v1419 = vpop.permute.xlu0 %1418
    %1420 = vrot.lane.b32.xlu0 %v991, 80
    %v1421 = vpop.permute.xlu0 %1420
    %1424 = vrot.lane.b32.xlu0 %v1094, 96
    %v1425 = vpop.permute.xlu0 %1424
    %1426 = vrot.lane.b32.xlu0 %v1095, 96
    %v1427 = vpop.permute.xlu0 %1426
    %1430 = vrot.lane.b32.xlu0 %v1196, 112
    %v1431 = vpop.permute.xlu0 %1430
    %1432 = vrot.lane.b32.xlu0 %v1197, 112
    %v1433 = vpop.permute.xlu0 %1432
    %v1436 = vsel %vm359, %v380, %v1395
    %v1437 = vsel %vm359, %v381, %v1397
    %v1438 = vsel %vm216, %v1436, %v1401
    %v1439 = vsel %vm216, %v1437, %v1403
    %vm1440 = vcmask 392192
    %v1441 = vsel %vm1440, %v1438, %v1407
    %v1442 = vsel %vm1440, %v1439, %v1409
    %vm1443 = vcmask 523264
    %v1444 = vsel %vm1443, %v1441, %v1413
    %v1445 = vsel %vm1443, %v1442, %v1415
    %vm1446 = vcmask 654336
    %v1447 = vsel %vm1446, %v1444, %v1419
    %v1448 = vsel %vm1446, %v1445, %v1421
    %vm1449 = vcmask 785408
    %v1450 = vsel %vm1449, %v1447, %v1425
    %v1451 = vsel %vm1449, %v1448, %v1427
    %vm1452 = vcmask 916480
    %v1453 = vsel %vm1452, %v1450, %v1431
    %v1454 = vsel %vm1452, %v1451, %v1433
    %1455 = vst [vmem:[#allocation11] sm:$0xff] %v1453
    %1456 = vst [vmem:[#allocation11 + $0x8] sm:$0xff] %v1454
    %s1457 = scalar_lea.vmem %s3, 32
    %v1458 = vld [vmem:[%s1457] sm:$0xff]
    %v1459 = vld [vmem:[%s1457 + $0x8] sm:$0xff]
    %v1460 = vld [vmem:[%s1457 + $0x10] sm:$0xff]
    %v1461 = vld [vmem:[%s1457 + $0x18] sm:$0xff]
    %s1462 = scalar_lea.vmem [#allocation5], 32
    %v1463 = vld [vmem:[%s1462] sm:$0xff]
    %v1464 = vld [vmem:[%s1462 + $0x8] sm:$0xff]
    %v1465 = vld [vmem:[%s1462 + $0x10] sm:$0xff]
    %v1466 = vld [vmem:[%s1462 + $0x18] sm:$0xff]
    %s1467 = scalar_lea.vmem [#allocation7], 32
    %v1468 = vld [vmem:[%s1467] sm:$0xff]
    %v1469 = vld [vmem:[%s1467 + $0x8] sm:$0xff]
    %v1470 = vld [vmem:[%s1467 + $0x10] sm:$0xff]
    %v1471 = vld [vmem:[%s1467 + $0x18] sm:$0xff]
    %s1472 = scalar_lea.vmem [#allocation8], 32
    %v1473 = vld [vmem:[%s1472] sm:$0xff]
    %v1474 = vld [vmem:[%s1472 + $0x8] sm:$0xff]
    %v1475 = vld [vmem:[%s1472 + $0x10] sm:$0xff]
    %v1476 = vld [vmem:[%s1472 + $0x18] sm:$0xff]
    %v1478 = vsel %vm216, %v1390, 0
    %v1481 = vsel %vm216, %v1391, 0
    %v1484 = vsel %vm216, %v1392, 0
    %v1487 = vsel %vm216, %v1393, 0
    %1489 = vmatpush.msra.mxu0 0.0
    %1490 = vmatpush.msra.mxu0 0.0
    %1491 = vmatpush.msra.mxu0 0.0
    %1492 = vmatpush.msra.mxu0 0.0
    %1493 = vmatpush.msra.mxu0 0.0
    %1494 = vmatpush.msra.mxu0 0.0
    %1495 = vmatpush.msra.mxu0 0.0
    %1496 = vmatpush.msra.mxu0 0.0
    %1497 = vmatpush.msra.mxu0 0.0
    %1498 = vmatpush.msra.mxu0 0.0
    %1499 = vmatpush.msra.mxu0 0.0
    %1500 = vmatpush.msra.mxu0 0.0
    %1501 = vmatpush.msra.mxu0 %v1461
    %1502 = vmatpush.msra.mxu0 %v1460
    %1503 = vmatpush.msra.mxu0 %v1459
    %1504 = vmatpush.msra.mxu0 %v1458
    %1505 = vmatmul.f32.gmra.mxu0 %v1478
    %v1506 = vpop.f32.mrf.mxu0
    %v1507 = vadd.f32 0.0, %v1506
    %1508 = vmatmul.f32.gmra.mxu0 %v1481
    %v1509 = vpop.f32.mrf.mxu0
    %v1510 = vadd.f32 0.0, %v1509
    %1511 = vmatmul.f32.gmra.mxu0 %v1484
    %v1512 = vpop.f32.mrf.mxu0
    %v1513 = vadd.f32 0.0, %v1512
    %1514 = vmatmul.f32.gmra.mxu0 %v1487
    %v1515 = vpop.f32.mrf.mxu0
    %v1516 = vadd.f32 0.0, %v1515
    %1517 = vdwg.mxu0
    %1518 = vmatpush.msra.mxu0 0.0
    %1519 = vmatpush.msra.mxu0 0.0
    %1520 = vmatpush.msra.mxu0 0.0
    %1521 = vmatpush.msra.mxu0 0.0
    %1522 = vmatpush.msra.mxu0 0.0
    %1523 = vmatpush.msra.mxu0 0.0
    %1524 = vmatpush.msra.mxu0 0.0
    %1525 = vmatpush.msra.mxu0 0.0
    %1526 = vmatpush.msra.mxu0 0.0
    %1527 = vmatpush.msra.mxu0 0.0
    %1528 = vmatpush.msra.mxu0 0.0
    %1529 = vmatpush.msra.mxu0 0.0
    %1530 = vmatpush.msra.mxu0 %v1466
    %1531 = vmatpush.msra.mxu0 %v1465
    %1532 = vmatpush.msra.mxu0 %v1464
    %1533 = vmatpush.msra.mxu0 %v1463
    %1534 = vmatmul.f32.gmra.mxu0 %v1478
    %v1535 = vpop.f32.mrf.mxu0
    %v1536 = vadd.f32 0.0, %v1535
    %1537 = vmatmul.f32.gmra.mxu0 %v1481
    %v1538 = vpop.f32.mrf.mxu0
    %v1539 = vadd.f32 0.0, %v1538
    %1540 = vmatmul.f32.gmra.mxu0 %v1484
    %v1541 = vpop.f32.mrf.mxu0
    %v1542 = vadd.f32 0.0, %v1541
    %1543 = vmatmul.f32.gmra.mxu0 %v1487
    %v1544 = vpop.f32.mrf.mxu0
    %v1545 = vadd.f32 0.0, %v1544
    %1546 = vdwg.mxu0
    %1547 = vmatpush.msra.mxu0 0.0
    %1548 = vmatpush.msra.mxu0 0.0
    %1549 = vmatpush.msra.mxu0 0.0
    %1550 = vmatpush.msra.mxu0 0.0
    %1551 = vmatpush.msra.mxu0 0.0
    %1552 = vmatpush.msra.mxu0 0.0
    %1553 = vmatpush.msra.mxu0 0.0
    %1554 = vmatpush.msra.mxu0 0.0
    %1555 = vmatpush.msra.mxu0 0.0
    %1556 = vmatpush.msra.mxu0 0.0
    %1557 = vmatpush.msra.mxu0 0.0
    %1558 = vmatpush.msra.mxu0 0.0
    %1559 = vmatpush.msra.mxu0 %v1471
    %1560 = vmatpush.msra.mxu0 %v1470
    %1561 = vmatpush.msra.mxu0 %v1469
    %1562 = vmatpush.msra.mxu0 %v1468
    %1563 = vmatmul.f32.gmra.mxu0 %v1478
    %v1564 = vpop.f32.mrf.mxu0
    %v1565 = vadd.f32 0.0, %v1564
    %1566 = vmatmul.f32.gmra.mxu0 %v1481
    %v1567 = vpop.f32.mrf.mxu0
    %v1568 = vadd.f32 0.0, %v1567
    %1569 = vmatmul.f32.gmra.mxu0 %v1484
    %v1570 = vpop.f32.mrf.mxu0
    %v1571 = vadd.f32 0.0, %v1570
    %1572 = vmatmul.f32.gmra.mxu0 %v1487
    %v1573 = vpop.f32.mrf.mxu0
    %v1574 = vadd.f32 0.0, %v1573
    %1575 = vdwg.mxu0
    %v1577 = vsel %vm316, %v1507, 0
    %v1580 = vsel %vm316, %v1510, 0
    %v1583 = vsel %vm316, %v1536, 0
    %v1586 = vsel %vm316, %v1539, 0
    %1588 = vmatpush.xpose.msra.mxu0 0.0
    %1589 = vmatpush.xpose.msra.mxu0 0.0
    %1590 = vmatpush.xpose.msra.mxu0 0.0
    %1591 = vmatpush.xpose.msra.mxu0 0.0
    %1592 = vmatpush.xpose.msra.mxu0 0.0
    %1593 = vmatpush.xpose.msra.mxu0 0.0
    %1594 = vmatpush.xpose.msra.mxu0 0.0
    %1595 = vmatpush.xpose.msra.mxu0 0.0
    %1596 = vmatpush.xpose.msra.mxu0 0.0
    %1597 = vmatpush.xpose.msra.mxu0 0.0
    %1598 = vmatpush.xpose.msra.mxu0 0.0
    %1599 = vmatpush.xpose.msra.mxu0 0.0
    %1600 = vmatpush.xpose.msra.mxu0 0.0
    %1601 = vmatpush.xpose.msra.mxu0 0.0
    %1602 = vmatpush.xpose.msra.mxu0 %v1586
    %1603 = vmatpush.xpose.msra.mxu0 %v1583
    %1604 = vmatmul.f32.gmra.mxu0 %v1577
    %v1605 = vpop.f32.mrf.mxu0
    %v1606 = vadd.f32 0.0, %v1605
    %1607 = vmatmul.f32.gmra.mxu0 %v1580
    %v1608 = vpop.f32.mrf.mxu0
    %v1609 = vadd.f32 0.0, %v1608
    %1610 = vdwg.mxu0
    %v1611 = vmul.f32 %v1606, 0.35355338
    %v1612 = vmul.f32 %v1609, 0.35355338
    %v1613 = vadd.f32 %v1611, %v355
    %v1614 = vadd.f32 %v1612, %v355
    %v1615 = vsel %vm359, %v1613, -inf
    %1616 = vmax.xlane.f32.xlu0 %v1615
    %v1617 = vpop.xlane.xlu0 %1616
    %v1618 = vsel %vm359, %v1614, -inf
    %1619 = vmax.xlane.f32.xlu0 %v1618
    %v1620 = vpop.xlane.xlu0 %1619
    %v1621 = vsub.f32 %v1613, %v1617
    %v1622 = vsub.f32 %v1614, %v1620
    %v1623 = vmul.f32 %v1621, 1.442695
    %v1624 = vpow.pop %v1623
    %v1625 = vmul.f32 %v1622, 1.442695
    %v1626 = vpow.pop %v1625
    %v1627 = vsel %vm359, %v1624, 0.0
    %1628 = vadd.xlane.f32.xlu0 %v1627
    %v1629 = vpop.xlane.xlu0 %1628
    %v1630 = vsel %vm359, %v1626, 0.0
    %1631 = vadd.xlane.f32.xlu0 %v1630
    %v1632 = vpop.xlane.xlu0 %1631
    %v1633 = vrcp.pop %v1629
    %v1634 = vrcp.pop %v1632
    %v1635 = vmul.f32 %v1624, %v1633
    %v1636 = vmul.f32 %v1626, %v1634
    %v1638 = vsel %vm359, %v1635, 0
    %v1641 = vsel %vm359, %v1636, 0
    %1643 = vmatpush.msra.mxu0 0.0
    %1644 = vmatpush.msra.mxu0 0.0
    %1645 = vmatpush.msra.mxu0 0.0
    %1646 = vmatpush.msra.mxu0 0.0
    %1647 = vmatpush.msra.mxu0 0.0
    %1648 = vmatpush.msra.mxu0 0.0
    %1649 = vmatpush.msra.mxu0 0.0
    %1650 = vmatpush.msra.mxu0 0.0
    %1651 = vmatpush.msra.mxu0 0.0
    %1652 = vmatpush.msra.mxu0 0.0
    %1653 = vmatpush.msra.mxu0 0.0
    %1654 = vmatpush.msra.mxu0 0.0
    %1655 = vmatpush.msra.mxu0 0.0
    %1656 = vmatpush.msra.mxu0 0.0
    %1657 = vmatpush.msra.mxu0 %v1568
    %1658 = vmatpush.msra.mxu0 %v1565
    %1659 = vmatmul.f32.gmra.mxu0 %v1638
    %v1660 = vpop.f32.mrf.mxu0
    %v1661 = vadd.f32 0.0, %v1660
    %1662 = vmatmul.f32.gmra.mxu0 %v1641
    %v1663 = vpop.f32.mrf.mxu0
    %v1664 = vadd.f32 0.0, %v1663
    %1665 = vdwg.mxu0
    %1666 = vrot.lane.b32.xlu0 %v1507, 120
    %v1667 = vpop.permute.xlu0 %1666
    %1668 = vrot.lane.b32.xlu0 %v1510, 120
    %v1669 = vpop.permute.xlu0 %1668
    %1670 = vrot.lane.b32.xlu0 %v1536, 120
    %v1671 = vpop.permute.xlu0 %1670
    %1672 = vrot.lane.b32.xlu0 %v1539, 120
    %v1673 = vpop.permute.xlu0 %1672
    %v1674 = vsel %vm316, %v1667, 0
    %v1676 = vsel %vm316, %v1669, 0
    %v1678 = vsel %vm316, %v1671, 0
    %v1680 = vsel %vm316, %v1673, 0
    %1682 = vmatpush.xpose.msra.mxu0 0.0
    %1683 = vmatpush.xpose.msra.mxu0 0.0
    %1684 = vmatpush.xpose.msra.mxu0 0.0
    %1685 = vmatpush.xpose.msra.mxu0 0.0
    %1686 = vmatpush.xpose.msra.mxu0 0.0
    %1687 = vmatpush.xpose.msra.mxu0 0.0
    %1688 = vmatpush.xpose.msra.mxu0 0.0
    %1689 = vmatpush.xpose.msra.mxu0 0.0
    %1690 = vmatpush.xpose.msra.mxu0 0.0
    %1691 = vmatpush.xpose.msra.mxu0 0.0
    %1692 = vmatpush.xpose.msra.mxu0 0.0
    %1693 = vmatpush.xpose.msra.mxu0 0.0
    %1694 = vmatpush.xpose.msra.mxu0 0.0
    %1695 = vmatpush.xpose.msra.mxu0 0.0
    %1696 = vmatpush.xpose.msra.mxu0 %v1680
    %1697 = vmatpush.xpose.msra.mxu0 %v1678
    %1698 = vmatmul.f32.gmra.mxu0 %v1674
    %v1699 = vpop.f32.mrf.mxu0
    %v1700 = vadd.f32 0.0, %v1699
    %1701 = vmatmul.f32.gmra.mxu0 %v1676
    %v1702 = vpop.f32.mrf.mxu0
    %v1703 = vadd.f32 0.0, %v1702
    %1704 = vdwg.mxu0
    %v1705 = vmul.f32 %v1700, 0.35355338
    %v1706 = vmul.f32 %v1703, 0.35355338
    %v1707 = vadd.f32 %v1705, %v355
    %v1708 = vadd.f32 %v1706, %v355
    %v1709 = vsel %vm359, %v1707, -inf
    %1710 = vmax.xlane.f32.xlu0 %v1709
    %v1711 = vpop.xlane.xlu0 %1710
    %v1712 = vsel %vm359, %v1708, -inf
    %1713 = vmax.xlane.f32.xlu0 %v1712
    %v1714 = vpop.xlane.xlu0 %1713
    %v1715 = vsub.f32 %v1707, %v1711
    %v1716 = vsub.f32 %v1708, %v1714
    %v1717 = vmul.f32 %v1715, 1.442695
    %v1718 = vpow.pop %v1717
    %v1719 = vmul.f32 %v1716, 1.442695
    %v1720 = vpow.pop %v1719
    %v1721 = vsel %vm359, %v1718, 0.0
    %1722 = vadd.xlane.f32.xlu0 %v1721
    %v1723 = vpop.xlane.xlu0 %1722
    %v1724 = vsel %vm359, %v1720, 0.0
    %1725 = vadd.xlane.f32.xlu0 %v1724
    %v1726 = vpop.xlane.xlu0 %1725
    %v1727 = vrcp.pop %v1723
    %v1728 = vrcp.pop %v1726
    %v1729 = vmul.f32 %v1718, %v1727
    %v1730 = vmul.f32 %v1720, %v1728
    %v1731 = vadd.f32 %v1635, %v1729
    %v1732 = vadd.f32 %v1636, %v1730
    %1735 = vrot.lane.b32.xlu0 %v1565, 120
    %v1736 = vpop.permute.xlu0 %1735
    %1737 = vrot.lane.b32.xlu0 %v1568, 120
    %v1738 = vpop.permute.xlu0 %1737
    %v1742 = vsel %vm359, %v1729, 0
    %v1745 = vsel %vm359, %v1730, 0
    %1747 = vmatpush.msra.mxu0 0.0
    %1748 = vmatpush.msra.mxu0 0.0
    %1749 = vmatpush.msra.mxu0 0.0
    %1750 = vmatpush.msra.mxu0 0.0
    %1751 = vmatpush.msra.mxu0 0.0
    %1752 = vmatpush.msra.mxu0 0.0
    %1753 = vmatpush.msra.mxu0 0.0
    %1754 = vmatpush.msra.mxu0 0.0
    %1755 = vmatpush.msra.mxu0 0.0
    %1756 = vmatpush.msra.mxu0 0.0
    %1757 = vmatpush.msra.mxu0 0.0
    %1758 = vmatpush.msra.mxu0 0.0
    %1759 = vmatpush.msra.mxu0 0.0
    %1760 = vmatpush.msra.mxu0 0.0
    %1761 = vmatpush.msra.mxu0 %v1738
    %1762 = vmatpush.msra.mxu0 %v1736
    %1763 = vmatmul.f32.gmra.mxu0 %v1742
    %v1764 = vpop.f32.mrf.mxu0
    %v1765 = vadd.f32 0.0, %v1764
    %1766 = vmatmul.f32.gmra.mxu0 %v1745
    %v1767 = vpop.f32.mrf.mxu0
    %v1768 = vadd.f32 0.0, %v1767
    %1769 = vdwg.mxu0
    %1770 = vrot.lane.b32.xlu0 %v1507, 112
    %v1771 = vpop.permute.xlu0 %1770
    %1772 = vrot.lane.b32.xlu0 %v1510, 112
    %v1773 = vpop.permute.xlu0 %1772
    %1774 = vrot.lane.b32.xlu0 %v1536, 112
    %v1775 = vpop.permute.xlu0 %1774
    %1776 = vrot.lane.b32.xlu0 %v1539, 112
    %v1777 = vpop.permute.xlu0 %1776
    %v1778 = vsel %vm316, %v1771, 0
    %v1780 = vsel %vm316, %v1773, 0
    %v1782 = vsel %vm316, %v1775, 0
    %v1784 = vsel %vm316, %v1777, 0
    %1786 = vmatpush.xpose.msra.mxu0 0.0
    %1787 = vmatpush.xpose.msra.mxu0 0.0
    %1788 = vmatpush.xpose.msra.mxu0 0.0
    %1789 = vmatpush.xpose.msra.mxu0 0.0
    %1790 = vmatpush.xpose.msra.mxu0 0.0
    %1791 = vmatpush.xpose.msra.mxu0 0.0
    %1792 = vmatpush.xpose.msra.mxu0 0.0
    %1793 = vmatpush.xpose.msra.mxu0 0.0
    %1794 = vmatpush.xpose.msra.mxu0 0.0
    %1795 = vmatpush.xpose.msra.mxu0 0.0
    %1796 = vmatpush.xpose.msra.mxu0 0.0
    %1797 = vmatpush.xpose.msra.mxu0 0.0
    %1798 = vmatpush.xpose.msra.mxu0 0.0
    %1799 = vmatpush.xpose.msra.mxu0 0.0
    %1800 = vmatpush.xpose.msra.mxu0 %v1784
    %1801 = vmatpush.xpose.msra.mxu0 %v1782
    %1802 = vmatmul.f32.gmra.mxu0 %v1778
    %v1803 = vpop.f32.mrf.mxu0
    %v1804 = vadd.f32 0.0, %v1803
    %1805 = vmatmul.f32.gmra.mxu0 %v1780
    %v1806 = vpop.f32.mrf.mxu0
    %v1807 = vadd.f32 0.0, %v1806
    %1808 = vdwg.mxu0
    %v1809 = vmul.f32 %v1804, 0.35355338
    %v1810 = vmul.f32 %v1807, 0.35355338
    %v1811 = vadd.f32 %v1809, %v355
    %v1812 = vadd.f32 %v1810, %v355
    %v1813 = vsel %vm359, %v1811, -inf
    %1814 = vmax.xlane.f32.xlu0 %v1813
    %v1815 = vpop.xlane.xlu0 %1814
    %v1816 = vsel %vm359, %v1812, -inf
    %1817 = vmax.xlane.f32.xlu0 %v1816
    %v1818 = vpop.xlane.xlu0 %1817
    %v1819 = vsub.f32 %v1811, %v1815
    %v1820 = vsub.f32 %v1812, %v1818
    %v1821 = vmul.f32 %v1819, 1.442695
    %v1822 = vpow.pop %v1821
    %v1823 = vmul.f32 %v1820, 1.442695
    %v1824 = vpow.pop %v1823
    %v1825 = vsel %vm359, %v1822, 0.0
    %1826 = vadd.xlane.f32.xlu0 %v1825
    %v1827 = vpop.xlane.xlu0 %1826
    %v1828 = vsel %vm359, %v1824, 0.0
    %1829 = vadd.xlane.f32.xlu0 %v1828
    %v1830 = vpop.xlane.xlu0 %1829
    %v1831 = vrcp.pop %v1827
    %v1832 = vrcp.pop %v1830
    %v1833 = vmul.f32 %v1822, %v1831
    %v1834 = vmul.f32 %v1824, %v1832
    %v1835 = vadd.f32 %v1731, %v1833
    %v1836 = vadd.f32 %v1732, %v1834
    %1837 = vrot.lane.b32.xlu0 %v1565, 112
    %v1838 = vpop.permute.xlu0 %1837
    %1839 = vrot.lane.b32.xlu0 %v1568, 112
    %v1840 = vpop.permute.xlu0 %1839
    %v1844 = vsel %vm359, %v1833, 0
    %v1847 = vsel %vm359, %v1834, 0
    %1849 = vmatpush.msra.mxu0 0.0
    %1850 = vmatpush.msra.mxu0 0.0
    %1851 = vmatpush.msra.mxu0 0.0
    %1852 = vmatpush.msra.mxu0 0.0
    %1853 = vmatpush.msra.mxu0 0.0
    %1854 = vmatpush.msra.mxu0 0.0
    %1855 = vmatpush.msra.mxu0 0.0
    %1856 = vmatpush.msra.mxu0 0.0
    %1857 = vmatpush.msra.mxu0 0.0
    %1858 = vmatpush.msra.mxu0 0.0
    %1859 = vmatpush.msra.mxu0 0.0
    %1860 = vmatpush.msra.mxu0 0.0
    %1861 = vmatpush.msra.mxu0 0.0
    %1862 = vmatpush.msra.mxu0 0.0
    %1863 = vmatpush.msra.mxu0 %v1840
    %1864 = vmatpush.msra.mxu0 %v1838
    %1865 = vmatmul.f32.gmra.mxu0 %v1844
    %v1866 = vpop.f32.mrf.mxu0
    %v1867 = vadd.f32 0.0, %v1866
    %1868 = vmatmul.f32.gmra.mxu0 %v1847
    %v1869 = vpop.f32.mrf.mxu0
    %v1870 = vadd.f32 0.0, %v1869
    %1871 = vdwg.mxu0
    %1872 = vrot.lane.b32.xlu0 %v1507, 104
    %v1873 = vpop.permute.xlu0 %1872
    %1874 = vrot.lane.b32.xlu0 %v1510, 104
    %v1875 = vpop.permute.xlu0 %1874
    %1876 = vrot.lane.b32.xlu0 %v1536, 104
    %v1877 = vpop.permute.xlu0 %1876
    %1878 = vrot.lane.b32.xlu0 %v1539, 104
    %v1879 = vpop.permute.xlu0 %1878
    %v1880 = vsel %vm316, %v1873, 0
    %v1882 = vsel %vm316, %v1875, 0
    %v1884 = vsel %vm316, %v1877, 0
    %v1886 = vsel %vm316, %v1879, 0
    %1888 = vmatpush.xpose.msra.mxu0 0.0
    %1889 = vmatpush.xpose.msra.mxu0 0.0
    %1890 = vmatpush.xpose.msra.mxu0 0.0
    %1891 = vmatpush.xpose.msra.mxu0 0.0
    %1892 = vmatpush.xpose.msra.mxu0 0.0
    %1893 = vmatpush.xpose.msra.mxu0 0.0
    %1894 = vmatpush.xpose.msra.mxu0 0.0
    %1895 = vmatpush.xpose.msra.mxu0 0.0
    %1896 = vmatpush.xpose.msra.mxu0 0.0
    %1897 = vmatpush.xpose.msra.mxu0 0.0
    %1898 = vmatpush.xpose.msra.mxu0 0.0
    %1899 = vmatpush.xpose.msra.mxu0 0.0
    %1900 = vmatpush.xpose.msra.mxu0 0.0
    %1901 = vmatpush.xpose.msra.mxu0 0.0
    %1902 = vmatpush.xpose.msra.mxu0 %v1886
    %1903 = vmatpush.xpose.msra.mxu0 %v1884
    %1904 = vmatmul.f32.gmra.mxu0 %v1880
    %v1905 = vpop.f32.mrf.mxu0
    %v1906 = vadd.f32 0.0, %v1905
    %1907 = vmatmul.f32.gmra.mxu0 %v1882
    %v1908 = vpop.f32.mrf.mxu0
    %v1909 = vadd.f32 0.0, %v1908
    %1910 = vdwg.mxu0
    %v1911 = vmul.f32 %v1906, 0.35355338
    %v1912 = vmul.f32 %v1909, 0.35355338
    %v1913 = vadd.f32 %v1911, %v355
    %v1914 = vadd.f32 %v1912, %v355
    %v1915 = vsel %vm359, %v1913, -inf
    %1916 = vmax.xlane.f32.xlu0 %v1915
    %v1917 = vpop.xlane.xlu0 %1916
    %v1918 = vsel %vm359, %v1914, -inf
    %1919 = vmax.xlane.f32.xlu0 %v1918
    %v1920 = vpop.xlane.xlu0 %1919
    %v1921 = vsub.f32 %v1913, %v1917
    %v1922 = vsub.f32 %v1914, %v1920
    %v1923 = vmul.f32 %v1921, 1.442695
    %v1924 = vpow.pop %v1923
    %v1925 = vmul.f32 %v1922, 1.442695
    %v1926 = vpow.pop %v1925
    %v1927 = vsel %vm359, %v1924, 0.0
    %1928 = vadd.xlane.f32.xlu0 %v1927
    %v1929 = vpop.xlane.xlu0 %1928
    %v1930 = vsel %vm359, %v1926, 0.0
    %1931 = vadd.xlane.f32.xlu0 %v1930
    %v1932 = vpop.xlane.xlu0 %1931
    %v1933 = vrcp.pop %v1929
    %v1934 = vrcp.pop %v1932
    %v1935 = vmul.f32 %v1924, %v1933
    %v1936 = vmul.f32 %v1926, %v1934
    %v1937 = vadd.f32 %v1835, %v1935
    %v1938 = vadd.f32 %v1836, %v1936
    %1939 = vrot.lane.b32.xlu0 %v1565, 104
    %v1940 = vpop.permute.xlu0 %1939
    %1941 = vrot.lane.b32.xlu0 %v1568, 104
    %v1942 = vpop.permute.xlu0 %1941
    %v1946 = vsel %vm359, %v1935, 0
    %v1949 = vsel %vm359, %v1936, 0
    %1951 = vmatpush.msra.mxu0 0.0
    %1952 = vmatpush.msra.mxu0 0.0
    %1953 = vmatpush.msra.mxu0 0.0
    %1954 = vmatpush.msra.mxu0 0.0
    %1955 = vmatpush.msra.mxu0 0.0
    %1956 = vmatpush.msra.mxu0 0.0
    %1957 = vmatpush.msra.mxu0 0.0
    %1958 = vmatpush.msra.mxu0 0.0
    %1959 = vmatpush.msra.mxu0 0.0
    %1960 = vmatpush.msra.mxu0 0.0
    %1961 = vmatpush.msra.mxu0 0.0
    %1962 = vmatpush.msra.mxu0 0.0
    %1963 = vmatpush.msra.mxu0 0.0
    %1964 = vmatpush.msra.mxu0 0.0
    %1965 = vmatpush.msra.mxu0 %v1942
    %1966 = vmatpush.msra.mxu0 %v1940
    %1967 = vmatmul.f32.gmra.mxu0 %v1946
    %v1968 = vpop.f32.mrf.mxu0
    %v1969 = vadd.f32 0.0, %v1968
    %1970 = vmatmul.f32.gmra.mxu0 %v1949
    %v1971 = vpop.f32.mrf.mxu0
    %v1972 = vadd.f32 0.0, %v1971
    %1973 = vdwg.mxu0
    %1976 = vrot.lane.b32.xlu0 %v1765, 8
    %v1977 = vpop.permute.xlu0 %1976
    %1978 = vrot.lane.b32.xlu0 %v1768, 8
    %v1979 = vpop.permute.xlu0 %1978
    %1984 = vrot.lane.b32.xlu0 %v1867, 16
    %v1985 = vpop.permute.xlu0 %1984
    %1986 = vrot.lane.b32.xlu0 %v1870, 16
    %v1987 = vpop.permute.xlu0 %1986
    %1992 = vrot.lane.b32.xlu0 %v1969, 24
    %v1993 = vpop.permute.xlu0 %1992
    %1994 = vrot.lane.b32.xlu0 %v1972, 24
    %v1995 = vpop.permute.xlu0 %1994
    %v1998 = vsel %vm316, %v1661, %v1977
    %v1999 = vsel %vm316, %v1664, %v1979
    %v2000 = vsel %vm359, %v1998, %v1985
    %v2001 = vsel %vm359, %v1999, %v1987
    %v2002 = vsel %vm747, %v2000, %v1993
    %v2003 = vsel %vm747, %v2001, %v1995
    %v2004 = vmul.f32 %v1937, 0.25
    %v2005 = vmul.f32 %v1938, 0.25
    %v2006 = vsel %vm755, %v2004, -1e+30
    %v2007 = vsel %vm755, %v2005, -1e+30
    %v2008 = vsel %vm359, %v2006, -inf
    %2009 = vmax.xlane.f32.xlu0 %v2008
    %v2010 = vpop.xlane.xlu0 %2009
    %v2011 = vsel %vm359, %v2007, -inf
    %2012 = vmax.xlane.f32.xlu0 %v2011
    %v2013 = vpop.xlane.xlu0 %2012
    %v2014 = vsub.f32 %v2006, %v2010
    %v2015 = vsub.f32 %v2007, %v2013
    %v2016 = vmul.f32 %v2014, 1.442695
    %v2017 = vpow.pop %v2016
    %v2018 = vmul.f32 %v2015, 1.442695
    %v2019 = vpow.pop %v2018
    %v2020 = vsel %vm359, %v2017, 0.0
    %2021 = vadd.xlane.f32.xlu0 %v2020
    %v2022 = vpop.xlane.xlu0 %2021
    %v2023 = vsel %vm359, %v2019, 0.0
    %2024 = vadd.xlane.f32.xlu0 %v2023
    %v2025 = vpop.xlane.xlu0 %2024
    %v2026 = vrcp.pop %v2022
    %v2027 = vmul.f32 %v2022, %v2026
    %v2028 = vsub.f32 1.0, %v2027
    %v2029 = vmul.f32 %v2026, %v2028
    %v2030 = vadd.f32 %v2026, %v2029
    %vm2031 = vweird.f32 %v2022
    %vm2032 = vweird.f32 %v2026
    %vm2033 = vmor %vm2031, %vm2032
    %v2034 = vsel %vm2033, %v2026, %v2030
    %v2035 = vand.u32 2147483647, %v2022
    %vm2036 = vcmp.eq.f32.partialorder %v2035, 8.507059e+37
    %v2037 = vand.u32 %v2022, 2147483648
    %v2038 = vor.u32 1.1754944e-38, %v2037
    %v2039 = vsel %vm2036, %v2038, %v2034
    %v2040 = vmul.f32 %v2017, %v2039
    %v2041 = vrcp.pop %v2025
    %v2042 = vmul.f32 %v2025, %v2041
    %v2043 = vsub.f32 1.0, %v2042
    %v2044 = vmul.f32 %v2041, %v2043
    %v2045 = vadd.f32 %v2041, %v2044
    %vm2046 = vweird.f32 %v2025
    %vm2047 = vweird.f32 %v2041
    %vm2048 = vmor %vm2046, %vm2047
    %v2049 = vsel %vm2048, %v2041, %v2045
    %v2050 = vand.u32 2147483647, %v2025
    %vm2051 = vcmp.eq.f32.partialorder %v2050, 8.507059e+37
    %v2052 = vand.u32 %v2025, 2147483648
    %v2053 = vor.u32 1.1754944e-38, %v2052
    %v2054 = vsel %vm2051, %v2053, %v2049
    %v2055 = vmul.f32 %v2019, %v2054
    %v2056 = vlog2.pop %v2022
    %v2057 = vmul.f32 %v2056, 0.6931472
    %v2058 = vlog2.pop %v2025
    %v2059 = vmul.f32 %v2058, 0.6931472
    %v2060 = vsub.f32 %v2014, %v2057
    %v2061 = vsub.f32 %v2015, %v2059
    %v2062 = vmul.f32 %v2040, %v2060
    %v2063 = vmul.f32 %v2055, %v2061
    %v2064 = vsel %vm812, %v2062, 0.0
    %v2065 = vsel %vm813, %v2063, 0.0
    %v2066 = vsel %vm359, %v2064, 0.0
    %2067 = vadd.xlane.f32.xlu0 %v2066
    %v2068 = vpop.xlane.xlu0 %2067
    %v2069 = vsel %vm359, %v2065, 0.0
    %2070 = vadd.xlane.f32.xlu0 %v2069
    %v2071 = vpop.xlane.xlu0 %2070
    %v2072 = vadd.f32 %v2068, %v2071
    %v2073 = vrot.slane %v2072, 4
    %v2074 = vadd.f32 %v2072, %v2073
    %v2075 = vrot.slane %v2074, 2
    %v2076 = vadd.f32 %v2074, %v2075
    %v2077 = vrot.slane %v2076, 1
    %v2078 = vadd.f32 %v2076, %v2077
    %v2079 = vmul.f32 %v2078, %v831
    %v2080 = vadd.f32 %v1348, %v2079
    %v2082 = vsel %vm316, %v1513, 0
    %v2085 = vsel %vm316, %v1516, 0
    %v2088 = vsel %vm316, %v1542, 0
    %v2091 = vsel %vm316, %v1545, 0
    %2093 = vmatpush.xpose.msra.mxu0 0.0
    %2094 = vmatpush.xpose.msra.mxu0 0.0
    %2095 = vmatpush.xpose.msra.mxu0 0.0
    %2096 = vmatpush.xpose.msra.mxu0 0.0
    %2097 = vmatpush.xpose.msra.mxu0 0.0
    %2098 = vmatpush.xpose.msra.mxu0 0.0
    %2099 = vmatpush.xpose.msra.mxu0 0.0
    %2100 = vmatpush.xpose.msra.mxu0 0.0
    %2101 = vmatpush.xpose.msra.mxu0 0.0
    %2102 = vmatpush.xpose.msra.mxu0 0.0
    %2103 = vmatpush.xpose.msra.mxu0 0.0
    %2104 = vmatpush.xpose.msra.mxu0 0.0
    %2105 = vmatpush.xpose.msra.mxu0 0.0
    %2106 = vmatpush.xpose.msra.mxu0 0.0
    %2107 = vmatpush.xpose.msra.mxu0 %v2091
    %2108 = vmatpush.xpose.msra.mxu0 %v2088
    %2109 = vmatmul.f32.gmra.mxu0 %v2082
    %v2110 = vpop.f32.mrf.mxu0
    %v2111 = vadd.f32 0.0, %v2110
    %2112 = vmatmul.f32.gmra.mxu0 %v2085
    %v2113 = vpop.f32.mrf.mxu0
    %v2114 = vadd.f32 0.0, %v2113
    %2115 = vdwg.mxu0
    %v2116 = vmul.f32 %v2111, 0.35355338
    %v2117 = vmul.f32 %v2114, 0.35355338
    %v2118 = vadd.f32 %v2116, %v872
    %v2119 = vadd.f32 %v2117, %v872
    %v2120 = vsel %vm359, %v2118, -inf
    %2121 = vmax.xlane.f32.xlu0 %v2120
    %v2122 = vpop.xlane.xlu0 %2121
    %v2123 = vsel %vm359, %v2119, -inf
    %2124 = vmax.xlane.f32.xlu0 %v2123
    %v2125 = vpop.xlane.xlu0 %2124
    %v2126 = vsub.f32 %v2118, %v2122
    %v2127 = vsub.f32 %v2119, %v2125
    %v2128 = vmul.f32 %v2126, 1.442695
    %v2129 = vpow.pop %v2128
    %v2130 = vmul.f32 %v2127, 1.442695
    %v2131 = vpow.pop %v2130
    %v2132 = vsel %vm359, %v2129, 0.0
    %2133 = vadd.xlane.f32.xlu0 %v2132
    %v2134 = vpop.xlane.xlu0 %2133
    %v2135 = vsel %vm359, %v2131, 0.0
    %2136 = vadd.xlane.f32.xlu0 %v2135
    %v2137 = vpop.xlane.xlu0 %2136
    %v2138 = vrcp.pop %v2134
    %v2139 = vrcp.pop %v2137
    %v2140 = vmul.f32 %v2129, %v2138
    %v2141 = vmul.f32 %v2131, %v2139
    %v2143 = vsel %vm359, %v2140, 0
    %v2146 = vsel %vm359, %v2141, 0
    %2148 = vmatpush.msra.mxu0 0.0
    %2149 = vmatpush.msra.mxu0 0.0
    %2150 = vmatpush.msra.mxu0 0.0
    %2151 = vmatpush.msra.mxu0 0.0
    %2152 = vmatpush.msra.mxu0 0.0
    %2153 = vmatpush.msra.mxu0 0.0
    %2154 = vmatpush.msra.mxu0 0.0
    %2155 = vmatpush.msra.mxu0 0.0
    %2156 = vmatpush.msra.mxu0 0.0
    %2157 = vmatpush.msra.mxu0 0.0
    %2158 = vmatpush.msra.mxu0 0.0
    %2159 = vmatpush.msra.mxu0 0.0
    %2160 = vmatpush.msra.mxu0 0.0
    %2161 = vmatpush.msra.mxu0 0.0
    %2162 = vmatpush.msra.mxu0 %v1574
    %2163 = vmatpush.msra.mxu0 %v1571
    %2164 = vmatmul.f32.gmra.mxu0 %v2143
    %v2165 = vpop.f32.mrf.mxu0
    %v2166 = vadd.f32 0.0, %v2165
    %2167 = vmatmul.f32.gmra.mxu0 %v2146
    %v2168 = vpop.f32.mrf.mxu0
    %v2169 = vadd.f32 0.0, %v2168
    %2170 = vdwg.mxu0
    %2171 = vrot.lane.b32.xlu0 %v1513, 120
    %v2172 = vpop.permute.xlu0 %2171
    %2173 = vrot.lane.b32.xlu0 %v1516, 120
    %v2174 = vpop.permute.xlu0 %2173
    %2175 = vrot.lane.b32.xlu0 %v1542, 120
    %v2176 = vpop.permute.xlu0 %2175
    %2177 = vrot.lane.b32.xlu0 %v1545, 120
    %v2178 = vpop.permute.xlu0 %2177
    %v2179 = vsel %vm316, %v2172, 0
    %v2181 = vsel %vm316, %v2174, 0
    %v2183 = vsel %vm316, %v2176, 0
    %v2185 = vsel %vm316, %v2178, 0
    %2187 = vmatpush.xpose.msra.mxu0 0.0
    %2188 = vmatpush.xpose.msra.mxu0 0.0
    %2189 = vmatpush.xpose.msra.mxu0 0.0
    %2190 = vmatpush.xpose.msra.mxu0 0.0
    %2191 = vmatpush.xpose.msra.mxu0 0.0
    %2192 = vmatpush.xpose.msra.mxu0 0.0
    %2193 = vmatpush.xpose.msra.mxu0 0.0
    %2194 = vmatpush.xpose.msra.mxu0 0.0
    %2195 = vmatpush.xpose.msra.mxu0 0.0
    %2196 = vmatpush.xpose.msra.mxu0 0.0
    %2197 = vmatpush.xpose.msra.mxu0 0.0
    %2198 = vmatpush.xpose.msra.mxu0 0.0
    %2199 = vmatpush.xpose.msra.mxu0 0.0
    %2200 = vmatpush.xpose.msra.mxu0 0.0
    %2201 = vmatpush.xpose.msra.mxu0 %v2185
    %2202 = vmatpush.xpose.msra.mxu0 %v2183
    %2203 = vmatmul.f32.gmra.mxu0 %v2179
    %v2204 = vpop.f32.mrf.mxu0
    %v2205 = vadd.f32 0.0, %v2204
    %2206 = vmatmul.f32.gmra.mxu0 %v2181
    %v2207 = vpop.f32.mrf.mxu0
    %v2208 = vadd.f32 0.0, %v2207
    %2209 = vdwg.mxu0
    %v2210 = vmul.f32 %v2205, 0.35355338
    %v2211 = vmul.f32 %v2208, 0.35355338
    %v2212 = vadd.f32 %v2210, %v872
    %v2213 = vadd.f32 %v2211, %v872
    %v2214 = vsel %vm359, %v2212, -inf
    %2215 = vmax.xlane.f32.xlu0 %v2214
    %v2216 = vpop.xlane.xlu0 %2215
    %v2217 = vsel %vm359, %v2213, -inf
    %2218 = vmax.xlane.f32.xlu0 %v2217
    %v2219 = vpop.xlane.xlu0 %2218
    %v2220 = vsub.f32 %v2212, %v2216
    %v2221 = vsub.f32 %v2213, %v2219
    %v2222 = vmul.f32 %v2220, 1.442695
    %v2223 = vpow.pop %v2222
    %v2224 = vmul.f32 %v2221, 1.442695
    %v2225 = vpow.pop %v2224
    %v2226 = vsel %vm359, %v2223, 0.0
    %2227 = vadd.xlane.f32.xlu0 %v2226
    %v2228 = vpop.xlane.xlu0 %2227
    %v2229 = vsel %vm359, %v2225, 0.0
    %2230 = vadd.xlane.f32.xlu0 %v2229
    %v2231 = vpop.xlane.xlu0 %2230
    %v2232 = vrcp.pop %v2228
    %v2233 = vrcp.pop %v2231
    %v2234 = vmul.f32 %v2223, %v2232
    %v2235 = vmul.f32 %v2225, %v2233
    %v2236 = vadd.f32 %v2140, %v2234
    %v2237 = vadd.f32 %v2141, %v2235
    %2240 = vrot.lane.b32.xlu0 %v1571, 120
    %v2241 = vpop.permute.xlu0 %2240
    %2242 = vrot.lane.b32.xlu0 %v1574, 120
    %v2243 = vpop.permute.xlu0 %2242
    %v2247 = vsel %vm359, %v2234, 0
    %v2250 = vsel %vm359, %v2235, 0
    %2252 = vmatpush.msra.mxu0 0.0
    %2253 = vmatpush.msra.mxu0 0.0
    %2254 = vmatpush.msra.mxu0 0.0
    %2255 = vmatpush.msra.mxu0 0.0
    %2256 = vmatpush.msra.mxu0 0.0
    %2257 = vmatpush.msra.mxu0 0.0
    %2258 = vmatpush.msra.mxu0 0.0
    %2259 = vmatpush.msra.mxu0 0.0
    %2260 = vmatpush.msra.mxu0 0.0
    %2261 = vmatpush.msra.mxu0 0.0
    %2262 = vmatpush.msra.mxu0 0.0
    %2263 = vmatpush.msra.mxu0 0.0
    %2264 = vmatpush.msra.mxu0 0.0
    %2265 = vmatpush.msra.mxu0 0.0
    %2266 = vmatpush.msra.mxu0 %v2243
    %2267 = vmatpush.msra.mxu0 %v2241
    %2268 = vmatmul.f32.gmra.mxu0 %v2247
    %v2269 = vpop.f32.mrf.mxu0
    %v2270 = vadd.f32 0.0, %v2269
    %2271 = vmatmul.f32.gmra.mxu0 %v2250
    %v2272 = vpop.f32.mrf.mxu0
    %v2273 = vadd.f32 0.0, %v2272
    %2274 = vdwg.mxu0
    %2275 = vrot.lane.b32.xlu0 %v1513, 112
    %v2276 = vpop.permute.xlu0 %2275
    %2277 = vrot.lane.b32.xlu0 %v1516, 112
    %v2278 = vpop.permute.xlu0 %2277
    %2279 = vrot.lane.b32.xlu0 %v1542, 112
    %v2280 = vpop.permute.xlu0 %2279
    %2281 = vrot.lane.b32.xlu0 %v1545, 112
    %v2282 = vpop.permute.xlu0 %2281
    %v2283 = vsel %vm316, %v2276, 0
    %v2285 = vsel %vm316, %v2278, 0
    %v2287 = vsel %vm316, %v2280, 0
    %v2289 = vsel %vm316, %v2282, 0
    %2291 = vmatpush.xpose.msra.mxu0 0.0
    %2292 = vmatpush.xpose.msra.mxu0 0.0
    %2293 = vmatpush.xpose.msra.mxu0 0.0
    %2294 = vmatpush.xpose.msra.mxu0 0.0
    %2295 = vmatpush.xpose.msra.mxu0 0.0
    %2296 = vmatpush.xpose.msra.mxu0 0.0
    %2297 = vmatpush.xpose.msra.mxu0 0.0
    %2298 = vmatpush.xpose.msra.mxu0 0.0
    %2299 = vmatpush.xpose.msra.mxu0 0.0
    %2300 = vmatpush.xpose.msra.mxu0 0.0
    %2301 = vmatpush.xpose.msra.mxu0 0.0
    %2302 = vmatpush.xpose.msra.mxu0 0.0
    %2303 = vmatpush.xpose.msra.mxu0 0.0
    %2304 = vmatpush.xpose.msra.mxu0 0.0
    %2305 = vmatpush.xpose.msra.mxu0 %v2289
    %2306 = vmatpush.xpose.msra.mxu0 %v2287
    %2307 = vmatmul.f32.gmra.mxu0 %v2283
    %v2308 = vpop.f32.mrf.mxu0
    %v2309 = vadd.f32 0.0, %v2308
    %2310 = vmatmul.f32.gmra.mxu0 %v2285
    %v2311 = vpop.f32.mrf.mxu0
    %v2312 = vadd.f32 0.0, %v2311
    %2313 = vdwg.mxu0
    %v2314 = vmul.f32 %v2309, 0.35355338
    %v2315 = vmul.f32 %v2312, 0.35355338
    %v2316 = vadd.f32 %v2314, %v872
    %v2317 = vadd.f32 %v2315, %v872
    %v2318 = vsel %vm359, %v2316, -inf
    %2319 = vmax.xlane.f32.xlu0 %v2318
    %v2320 = vpop.xlane.xlu0 %2319
    %v2321 = vsel %vm359, %v2317, -inf
    %2322 = vmax.xlane.f32.xlu0 %v2321
    %v2323 = vpop.xlane.xlu0 %2322
    %v2324 = vsub.f32 %v2316, %v2320
    %v2325 = vsub.f32 %v2317, %v2323
    %v2326 = vmul.f32 %v2324, 1.442695
    %v2327 = vpow.pop %v2326
    %v2328 = vmul.f32 %v2325, 1.442695
    %v2329 = vpow.pop %v2328
    %v2330 = vsel %vm359, %v2327, 0.0
    %2331 = vadd.xlane.f32.xlu0 %v2330
    %v2332 = vpop.xlane.xlu0 %2331
    %v2333 = vsel %vm359, %v2329, 0.0
    %2334 = vadd.xlane.f32.xlu0 %v2333
    %v2335 = vpop.xlane.xlu0 %2334
    %v2336 = vrcp.pop %v2332
    %v2337 = vrcp.pop %v2335
    %v2338 = vmul.f32 %v2327, %v2336
    %v2339 = vmul.f32 %v2329, %v2337
    %v2340 = vadd.f32 %v2236, %v2338
    %v2341 = vadd.f32 %v2237, %v2339
    %2342 = vrot.lane.b32.xlu0 %v1571, 112
    %v2343 = vpop.permute.xlu0 %2342
    %2344 = vrot.lane.b32.xlu0 %v1574, 112
    %v2345 = vpop.permute.xlu0 %2344
    %v2349 = vsel %vm359, %v2338, 0
    %v2352 = vsel %vm359, %v2339, 0
    %2354 = vmatpush.msra.mxu0 0.0
    %2355 = vmatpush.msra.mxu0 0.0
    %2356 = vmatpush.msra.mxu0 0.0
    %2357 = vmatpush.msra.mxu0 0.0
    %2358 = vmatpush.msra.mxu0 0.0
    %2359 = vmatpush.msra.mxu0 0.0
    %2360 = vmatpush.msra.mxu0 0.0
    %2361 = vmatpush.msra.mxu0 0.0
    %2362 = vmatpush.msra.mxu0 0.0
    %2363 = vmatpush.msra.mxu0 0.0
    %2364 = vmatpush.msra.mxu0 0.0
    %2365 = vmatpush.msra.mxu0 0.0
    %2366 = vmatpush.msra.mxu0 0.0
    %2367 = vmatpush.msra.mxu0 0.0
    %2368 = vmatpush.msra.mxu0 %v2345
    %2369 = vmatpush.msra.mxu0 %v2343
    %2370 = vmatmul.f32.gmra.mxu0 %v2349
    %v2371 = vpop.f32.mrf.mxu0
    %v2372 = vadd.f32 0.0, %v2371
    %2373 = vmatmul.f32.gmra.mxu0 %v2352
    %v2374 = vpop.f32.mrf.mxu0
    %v2375 = vadd.f32 0.0, %v2374
    %2376 = vdwg.mxu0
    %2377 = vrot.lane.b32.xlu0 %v1513, 104
    %v2378 = vpop.permute.xlu0 %2377
    %2379 = vrot.lane.b32.xlu0 %v1516, 104
    %v2380 = vpop.permute.xlu0 %2379
    %2381 = vrot.lane.b32.xlu0 %v1542, 104
    %v2382 = vpop.permute.xlu0 %2381
    %2383 = vrot.lane.b32.xlu0 %v1545, 104
    %v2384 = vpop.permute.xlu0 %2383
    %v2385 = vsel %vm316, %v2378, 0
    %v2387 = vsel %vm316, %v2380, 0
    %v2389 = vsel %vm316, %v2382, 0
    %v2391 = vsel %vm316, %v2384, 0
    %2393 = vmatpush.xpose.msra.mxu0 0.0
    %2394 = vmatpush.xpose.msra.mxu0 0.0
    %2395 = vmatpush.xpose.msra.mxu0 0.0
    %2396 = vmatpush.xpose.msra.mxu0 0.0
    %2397 = vmatpush.xpose.msra.mxu0 0.0
    %2398 = vmatpush.xpose.msra.mxu0 0.0
    %2399 = vmatpush.xpose.msra.mxu0 0.0
    %2400 = vmatpush.xpose.msra.mxu0 0.0
    %2401 = vmatpush.xpose.msra.mxu0 0.0
    %2402 = vmatpush.xpose.msra.mxu0 0.0
    %2403 = vmatpush.xpose.msra.mxu0 0.0
    %2404 = vmatpush.xpose.msra.mxu0 0.0
    %2405 = vmatpush.xpose.msra.mxu0 0.0
    %2406 = vmatpush.xpose.msra.mxu0 0.0
    %2407 = vmatpush.xpose.msra.mxu0 %v2391
    %2408 = vmatpush.xpose.msra.mxu0 %v2389
    %2409 = vmatmul.f32.gmra.mxu0 %v2385
    %v2410 = vpop.f32.mrf.mxu0
    %v2411 = vadd.f32 0.0, %v2410
    %2412 = vmatmul.f32.gmra.mxu0 %v2387
    %v2413 = vpop.f32.mrf.mxu0
    %v2414 = vadd.f32 0.0, %v2413
    %2415 = vdwg.mxu0
    %v2416 = vmul.f32 %v2411, 0.35355338
    %v2417 = vmul.f32 %v2414, 0.35355338
    %v2418 = vadd.f32 %v2416, %v872
    %v2419 = vadd.f32 %v2417, %v872
    %v2420 = vsel %vm359, %v2418, -inf
    %2421 = vmax.xlane.f32.xlu0 %v2420
    %v2422 = vpop.xlane.xlu0 %2421
    %v2423 = vsel %vm359, %v2419, -inf
    %2424 = vmax.xlane.f32.xlu0 %v2423
    %v2425 = vpop.xlane.xlu0 %2424
    %v2426 = vsub.f32 %v2418, %v2422
    %v2427 = vsub.f32 %v2419, %v2425
    %v2428 = vmul.f32 %v2426, 1.442695
    %v2429 = vpow.pop %v2428
    %v2430 = vmul.f32 %v2427, 1.442695
    %v2431 = vpow.pop %v2430
    %v2432 = vsel %vm359, %v2429, 0.0
    %2433 = vadd.xlane.f32.xlu0 %v2432
    %v2434 = vpop.xlane.xlu0 %2433
    %v2435 = vsel %vm359, %v2431, 0.0
    %2436 = vadd.xlane.f32.xlu0 %v2435
    %v2437 = vpop.xlane.xlu0 %2436
    %v2438 = vrcp.pop %v2434
    %v2439 = vrcp.pop %v2437
    %v2440 = vmul.f32 %v2429, %v2438
    %v2441 = vmul.f32 %v2431, %v2439
    %v2442 = vadd.f32 %v2340, %v2440
    %v2443 = vadd.f32 %v2341, %v2441
    %2444 = vrot.lane.b32.xlu0 %v1571, 104
    %v2445 = vpop.permute.xlu0 %2444
    %2446 = vrot.lane.b32.xlu0 %v1574, 104
    %v2447 = vpop.permute.xlu0 %2446
    %v2451 = vsel %vm359, %v2440, 0
    %v2454 = vsel %vm359, %v2441, 0
    %2456 = vmatpush.msra.mxu0 0.0
    %2457 = vmatpush.msra.mxu0 0.0
    %2458 = vmatpush.msra.mxu0 0.0
    %2459 = vmatpush.msra.mxu0 0.0
    %2460 = vmatpush.msra.mxu0 0.0
    %2461 = vmatpush.msra.mxu0 0.0
    %2462 = vmatpush.msra.mxu0 0.0
    %2463 = vmatpush.msra.mxu0 0.0
    %2464 = vmatpush.msra.mxu0 0.0
    %2465 = vmatpush.msra.mxu0 0.0
    %2466 = vmatpush.msra.mxu0 0.0
    %2467 = vmatpush.msra.mxu0 0.0
    %2468 = vmatpush.msra.mxu0 0.0
    %2469 = vmatpush.msra.mxu0 0.0
    %2470 = vmatpush.msra.mxu0 %v2447
    %2471 = vmatpush.msra.mxu0 %v2445
    %2472 = vmatmul.f32.gmra.mxu0 %v2451
    %v2473 = vpop.f32.mrf.mxu0
    %v2474 = vadd.f32 0.0, %v2473
    %2475 = vmatmul.f32.gmra.mxu0 %v2454
    %v2476 = vpop.f32.mrf.mxu0
    %v2477 = vadd.f32 0.0, %v2476
    %2478 = vdwg.mxu0
    %2481 = vrot.lane.b32.xlu0 %v2270, 8
    %v2482 = vpop.permute.xlu0 %2481
    %2483 = vrot.lane.b32.xlu0 %v2273, 8
    %v2484 = vpop.permute.xlu0 %2483
    %2489 = vrot.lane.b32.xlu0 %v2372, 16
    %v2490 = vpop.permute.xlu0 %2489
    %2491 = vrot.lane.b32.xlu0 %v2375, 16
    %v2492 = vpop.permute.xlu0 %2491
    %2497 = vrot.lane.b32.xlu0 %v2474, 24
    %v2498 = vpop.permute.xlu0 %2497
    %2499 = vrot.lane.b32.xlu0 %v2477, 24
    %v2500 = vpop.permute.xlu0 %2499
    %v2503 = vsel %vm316, %v2166, %v2482
    %v2504 = vsel %vm316, %v2169, %v2484
    %v2505 = vsel %vm359, %v2503, %v2490
    %v2506 = vsel %vm359, %v2504, %v2492
    %v2507 = vsel %vm747, %v2505, %v2498
    %v2508 = vsel %vm747, %v2506, %v2500
    %v2509 = vmul.f32 %v2442, 0.25
    %v2510 = vmul.f32 %v2443, 0.25
    %v2511 = vsel %vm1270, %v2509, -1e+30
    %v2512 = vsel %vm1270, %v2510, -1e+30
    %v2513 = vsel %vm359, %v2511, -inf
    %2514 = vmax.xlane.f32.xlu0 %v2513
    %v2515 = vpop.xlane.xlu0 %2514
    %v2516 = vsel %vm359, %v2512, -inf
    %2517 = vmax.xlane.f32.xlu0 %v2516
    %v2518 = vpop.xlane.xlu0 %2517
    %v2519 = vsub.f32 %v2511, %v2515
    %v2520 = vsub.f32 %v2512, %v2518
    %v2521 = vmul.f32 %v2519, 1.442695
    %v2522 = vpow.pop %v2521
    %v2523 = vmul.f32 %v2520, 1.442695
    %v2524 = vpow.pop %v2523
    %v2525 = vsel %vm359, %v2522, 0.0
    %2526 = vadd.xlane.f32.xlu0 %v2525
    %v2527 = vpop.xlane.xlu0 %2526
    %v2528 = vsel %vm359, %v2524, 0.0
    %2529 = vadd.xlane.f32.xlu0 %v2528
    %v2530 = vpop.xlane.xlu0 %2529
    %v2531 = vrcp.pop %v2527
    %v2532 = vmul.f32 %v2527, %v2531
    %v2533 = vsub.f32 1.0, %v2532
    %v2534 = vmul.f32 %v2531, %v2533
    %v2535 = vadd.f32 %v2531, %v2534
    %vm2536 = vweird.f32 %v2527
    %vm2537 = vweird.f32 %v2531
    %vm2538 = vmor %vm2536, %vm2537
    %v2539 = vsel %vm2538, %v2531, %v2535
    %v2540 = vand.u32 2147483647, %v2527
    %vm2541 = vcmp.eq.f32.partialorder %v2540, 8.507059e+37
    %v2542 = vand.u32 %v2527, 2147483648
    %v2543 = vor.u32 1.1754944e-38, %v2542
    %v2544 = vsel %vm2541, %v2543, %v2539
    %v2545 = vmul.f32 %v2522, %v2544
    %v2546 = vrcp.pop %v2530
    %v2547 = vmul.f32 %v2530, %v2546
    %v2548 = vsub.f32 1.0, %v2547
    %v2549 = vmul.f32 %v2546, %v2548
    %v2550 = vadd.f32 %v2546, %v2549
    %vm2551 = vweird.f32 %v2530
    %vm2552 = vweird.f32 %v2546
    %vm2553 = vmor %vm2551, %vm2552
    %v2554 = vsel %vm2553, %v2546, %v2550
    %v2555 = vand.u32 2147483647, %v2530
    %vm2556 = vcmp.eq.f32.partialorder %v2555, 8.507059e+37
    %v2557 = vand.u32 %v2530, 2147483648
    %v2558 = vor.u32 1.1754944e-38, %v2557
    %v2559 = vsel %vm2556, %v2558, %v2554
    %v2560 = vmul.f32 %v2524, %v2559
    %v2561 = vlog2.pop %v2527
    %v2562 = vmul.f32 %v2561, 0.6931472
    %v2563 = vlog2.pop %v2530
    %v2564 = vmul.f32 %v2563, 0.6931472
    %v2565 = vsub.f32 %v2519, %v2562
    %v2566 = vsub.f32 %v2520, %v2564
    %v2567 = vmul.f32 %v2545, %v2565
    %v2568 = vmul.f32 %v2560, %v2566
    %v2569 = vsel %vm1327, %v2567, 0.0
    %v2570 = vsel %vm1328, %v2568, 0.0
    %v2571 = vsel %vm359, %v2569, 0.0
    %2572 = vadd.xlane.f32.xlu0 %v2571
    %v2573 = vpop.xlane.xlu0 %2572
    %v2574 = vsel %vm359, %v2570, 0.0
    %2575 = vadd.xlane.f32.xlu0 %v2574
    %v2576 = vpop.xlane.xlu0 %2575
    %v2577 = vadd.f32 %v2573, %v2576
    %v2578 = vrot.slane %v2577, 4
    %v2579 = vadd.f32 %v2577, %v2578
    %v2580 = vrot.slane %v2579, 2
    %v2581 = vadd.f32 %v2579, %v2580
    %v2582 = vrot.slane %v2581, 1
    %v2583 = vadd.f32 %v2581, %v2582
    %v2584 = vmul.f32 %v2583, %v1346
    %v2585 = vadd.f32 %v2080, %v2584
    %v2587 = vsel %vm216, %v2002, 0
    %v2590 = vsel %vm216, %v2003, 0
    %v2593 = vsel %vm216, %v2507, 0
    %v2596 = vsel %vm216, %v2508, 0
    %2598 = vmatpush.msra.mxu0 0.0
    %2599 = vmatpush.msra.mxu0 0.0
    %2600 = vmatpush.msra.mxu0 0.0
    %2601 = vmatpush.msra.mxu0 0.0
    %2602 = vmatpush.msra.mxu0 0.0
    %2603 = vmatpush.msra.mxu0 0.0
    %2604 = vmatpush.msra.mxu0 0.0
    %2605 = vmatpush.msra.mxu0 0.0
    %2606 = vmatpush.msra.mxu0 0.0
    %2607 = vmatpush.msra.mxu0 0.0
    %2608 = vmatpush.msra.mxu0 0.0
    %2609 = vmatpush.msra.mxu0 0.0
    %2610 = vmatpush.msra.mxu0 %v1476
    %2611 = vmatpush.msra.mxu0 %v1475
    %2612 = vmatpush.msra.mxu0 %v1474
    %2613 = vmatpush.msra.mxu0 %v1473
    %2614 = vmatmul.f32.gmra.mxu0 %v2587
    %v2615 = vpop.f32.mrf.mxu0
    %v2616 = vadd.f32 0.0, %v2615
    %2617 = vmatmul.f32.gmra.mxu0 %v2590
    %v2618 = vpop.f32.mrf.mxu0
    %2619 = vmatmul.f32.gmra.mxu0 %v2593
    %v2620 = vpop.f32.mrf.mxu0
    %v2621 = vadd.f32 0.0, %v2620
    %2622 = vmatmul.f32.gmra.mxu0 %v2596
    %v2623 = vpop.f32.mrf.mxu0
    %2624 = vdwg.mxu0
    %v2625 = vadd.f32 %v1390, %v2616
    %v2626 = vadd.f32 %v1392, %v2621
    %2627 = vrot.lane.b32.xlu0 %v1729, 16
    %v2628 = vpop.permute.xlu0 %2627
    %2629 = vrot.lane.b32.xlu0 %v1730, 16
    %v2630 = vpop.permute.xlu0 %2629
    %2633 = vrot.lane.b32.xlu0 %v1833, 32
    %v2634 = vpop.permute.xlu0 %2633
    %2635 = vrot.lane.b32.xlu0 %v1834, 32
    %v2636 = vpop.permute.xlu0 %2635
    %2639 = vrot.lane.b32.xlu0 %v1935, 48
    %v2640 = vpop.permute.xlu0 %2639
    %2641 = vrot.lane.b32.xlu0 %v1936, 48
    %v2642 = vpop.permute.xlu0 %2641
    %2645 = vrot.lane.b32.xlu0 %v2140, 64
    %v2646 = vpop.permute.xlu0 %2645
    %2647 = vrot.lane.b32.xlu0 %v2141, 64
    %v2648 = vpop.permute.xlu0 %2647
    %2651 = vrot.lane.b32.xlu0 %v2234, 80
    %v2652 = vpop.permute.xlu0 %2651
    %2653 = vrot.lane.b32.xlu0 %v2235, 80
    %v2654 = vpop.permute.xlu0 %2653
    %2657 = vrot.lane.b32.xlu0 %v2338, 96
    %v2658 = vpop.permute.xlu0 %2657
    %2659 = vrot.lane.b32.xlu0 %v2339, 96
    %v2660 = vpop.permute.xlu0 %2659
    %2663 = vrot.lane.b32.xlu0 %v2440, 112
    %v2664 = vpop.permute.xlu0 %2663
    %2665 = vrot.lane.b32.xlu0 %v2441, 112
    %v2666 = vpop.permute.xlu0 %2665
    %v2669 = vsel %vm359, %v1635, %v2628
    %v2670 = vsel %vm359, %v1636, %v2630
    %v2671 = vsel %vm216, %v2669, %v2634
    %v2672 = vsel %vm216, %v2670, %v2636
    %v2673 = vsel %vm1440, %v2671, %v2640
    %v2674 = vsel %vm1440, %v2672, %v2642
    %v2675 = vsel %vm1443, %v2673, %v2646
    %v2676 = vsel %vm1443, %v2674, %v2648
    %v2677 = vsel %vm1446, %v2675, %v2652
    %v2678 = vsel %vm1446, %v2676, %v2654
    %v2679 = vsel %vm1449, %v2677, %v2658
    %v2680 = vsel %vm1449, %v2678, %v2660
    %v2681 = vsel %vm1452, %v2679, %v2664
    %v2682 = vsel %vm1452, %v2680, %v2666
    %s2683 = scalar_lea.vmem [#allocation11], 16
    %2684 = vst [vmem:[%s2683] sm:$0xff] %v2681
    %2685 = vst [vmem:[%s2683 + $0x8] sm:$0xff] %v2682
    %v2686 = vmul.f32 %v2585, 0.5
    %vm2687 = vcmask 0
    %2688 = vst.msk [vmem:[#allocation13] sm:$0x1] %vm2687, %v2686
    %v2690 = vrot.slane %v2626, 7
    %vm2692 = vcmask 1040384
    %v2693 = vsel %vm2692, %v2625, %v2690
    %v2694 = vld [vmem:[%s7] sm:$0xff]
    %v2695 = vld [vmem:[%s7 + $0x8] sm:$0xff]
    %v2696 = vld [vmem:[%s7 + $0x10] sm:$0xff]
    %v2697 = vld [vmem:[%s7 + $0x18] sm:$0xff]
    %v2698 = vld [vmem:[%s8] sm:$0x1]
    %v2700 = vperm.slane %v2698, 0
    %v2703 = vsel %vm216, %v2693, 0
    %2705 = vmatpush.msra.mxu0 0.0
    %2706 = vmatpush.msra.mxu0 0.0
    %2707 = vmatpush.msra.mxu0 0.0
    %2708 = vmatpush.msra.mxu0 0.0
    %2709 = vmatpush.msra.mxu0 0.0
    %2710 = vmatpush.msra.mxu0 0.0
    %2711 = vmatpush.msra.mxu0 0.0
    %2712 = vmatpush.msra.mxu0 0.0
    %2713 = vmatpush.msra.mxu0 0.0
    %2714 = vmatpush.msra.mxu0 0.0
    %2715 = vmatpush.msra.mxu0 0.0
    %2716 = vmatpush.msra.mxu0 0.0
    %2717 = vmatpush.msra.mxu0 %v2697
    %2718 = vmatpush.msra.mxu0 %v2696
    %2719 = vmatpush.msra.mxu0 %v2695
    %2720 = vmatpush.msra.mxu0 %v2694
    %2721 = vmatmul.f32.gmra.mxu0 %v2703
    %v2722 = vpop.f32.mrf.mxu0
    %v2723 = vadd.f32 %v2700, %v2722
    %2724 = vdwg.mxu0
    %vm2725 = vcmask 9216
    %2726 = vst.msk [vmem:[#allocation10] sm:$0x3] %vm2725, %v2723
    // Predicated region
    $region54: #{tpu_custom_call.1} parent=1 // pred_check
      _
    $region55: #{tpu_custom_call.1} parent=1 // pred_check_branch
      %2728 = sbr.rel (0) target = $region57
    $region56: #{tpu_custom_call.1} parent=1 // pred_region
      %2730 = vsyncadd [#allocation4], 0
      %s2732 = sshll.u32 [#allocation10], 4
      %s2733 = int_to_ptr.vmem [resolvable:$true] %s2732
      %s2734 = sshll.u32 %s9, 4
      %s2735 = int_to_ptr.hbm [resolvable:$true] %s2734
      %2737 = dma.vmem_to_hbm [thread:$0]  %s2733, 32, %s2735, [#allocation4]
    $region57: #{tpu_custom_call.1} parent=1 // pred_fallthru
      _
    // Predicated region
    $region58: #{tpu_custom_call.1} parent=1 // pred_check
      _
    $region59: #{tpu_custom_call.1} parent=1 // pred_check_branch
      %2739 = sbr.rel (0) target = $region61
    $region60: #{tpu_custom_call.1} parent=1 // pred_region
      %2741 = vsyncadd [#allocation12], 0
      %s2742 = sshll.u32 [#allocation11], 4
      %s2743 = int_to_ptr.vmem [resolvable:$true] %s2742
      %s2744 = sshll.u32 %s10, 4
      %s2745 = int_to_ptr.hbm [resolvable:$true] %s2744
      %2750 = dma.vmem_to_hbm [thread:$0]  %s2743, 512, %s2745, [#allocation12], 128, 128, 8
    $region61: #{tpu_custom_call.1} parent=1 // pred_fallthru
      _
    // Predicated region
    $region62: #{tpu_custom_call.1} parent=1 // pred_check
      _
    $region63: #{tpu_custom_call.1} parent=1 // pred_check_branch
      %2752 = sbr.rel (0) target = $region65
    $region64: #{tpu_custom_call.1} parent=1 // pred_region
      %2754 = vsyncadd [#allocation12], 0
      %s2756 = sshll.u32 [#allocation13], 4
      %s2757 = int_to_ptr.vmem [resolvable:$true] %s2756
      %s2758 = sshll.u32 %s11, 4
      %s2759 = int_to_ptr.hbm [resolvable:$true] %s2758
      %2761 = dma.vmem_to_hbm [thread:$0]  %s2757, 16, %s2759, [#allocation12]
    $region65: #{tpu_custom_call.1} parent=1 // pred_fallthru
      _
    // Predicated region
    $region66: #{tpu_custom_call.1} parent=1 // pred_check
      _
    $region67: #{tpu_custom_call.1} parent=1 // pred_check_branch
      %2763 = sbr.rel (0) target = $region69
    $region68: #{tpu_custom_call.1} parent=1 // pred_region
      %2765 = dma.done [#allocation4], 32
    $region69: #{tpu_custom_call.1} parent=1 // pred_fallthru
      _
    // Predicated region
    $region70: #{tpu_custom_call.1} parent=1 // pred_check
      _
    $region71: #{tpu_custom_call.1} parent=1 // pred_check_branch
      %2767 = sbr.rel (0) target = $region73
    $region72: #{tpu_custom_call.1} parent=1 // pred_region
      %2769 = dma.done [#allocation12], 512
    $region73: #{tpu_custom_call.1} parent=1 // pred_fallthru
      _
    // Predicated region
    $region74: #{tpu_custom_call.1} parent=1 // pred_check
      _
    $region75: #{tpu_custom_call.1} parent=1 // pred_check_branch
      %2771 = sbr.rel (0) target = $region77
    $region76: #{tpu_custom_call.1} parent=1 // pred_region
      %2773 = dma.done [#allocation12], 16
    $region77: #{tpu_custom_call.1} parent=1 // pred_fallthru
      _
    %2774 = vsyncpa [#allocation3], 1
    %2775 = vsyncpa [#allocation6], 1
    %2776 = vsyncpa [#allocation9], 1
    %2777 = vsyncpa [#allocation4], 1
    %2778 = vsyncpa [#allocation12], 1

</llo_original>
